<compile_context>
chip_gen: v7x
topology: tpu7x:2x2x1
jax: 0.10.0
libtpu: 0.0.40
codegen_flags: <defaults>
</compile_context>

<pallas_src>
import jax
import jax.numpy as jnp
from jax import lax
from jax.experimental import pallas as pl
from jax.experimental.pallas import tpu as pltpu


def _round_up(x, m):
    return (x + m - 1) // m * m


def _pad_last(w, new_width):
    pad = new_width - w.shape[-1]
    if pad == 0:
        return w
    return jnp.pad(w, [(0, 0)] * (w.ndim - 1) + [(0, pad)])


def _pad_gates(w, H, Hp):
    """(..., 3H) -> (..., 3Hp): zero-pad each GRU gate block independently."""
    lead = w.shape[:-1]
    w3 = w.reshape(lead + (3, H))
    w3 = _pad_last(w3, Hp)
    return w3.reshape(lead + (3 * Hp,))


def encoder_kernel(xs_ref, At_ref, w_stat_ref, w_xn_ref, b_comb_ref,
                   w_ihg_ref, w_hh_ref, b_hh_ref, w_out_ref, b_out_ref,
                   hn_ref, xn_ref):
    f32 = jnp.float32
    bf16 = jnp.bfloat16
    T = xs_ref.shape[0]
    N = xs_ref.shape[1]
    Hp = w_hh_ref.shape[0]

    # Invariant operands: read once, hoisted above the recurrence.
    At = At_ref[...]              # (N, N)      bf16  A^T for this graph
    w_stat = w_stat_ref[...]      # (Dp, 5Hp)   bf16  [W_root_s | W_rel_s | W_ih_s]
    w_xn = w_xn_ref[...]          # (1, 5Hp)    f32   xn-column weights
    b_comb = b_comb_ref[...]      # (1, 5Hp)    f32   [b_g | 0 | b_ih]
    w_ihg = w_ihg_ref[...]        # (Hp, 3Hp)   bf16  W_ih rows for gcn features
    w_hh = w_hh_ref[...]          # (Hp, 3Hp)   bf16
    b_hh = b_hh_ref[...]          # (1, 3Hp)    f32
    w_out = w_out_ref[...]        # (1, Hp)     f32   (padded lanes are zero)
    b_out = b_out_ref[...]        # (1, 1)      f32

    def step(t, carry):
        hn, xn = carry                              # (N, Hp) f32, (N, 1) f32
        xs_t = xs_ref[t]                            # (N, Dp) bf16

        # Fused static matmul: [root | x@W_rel | gi_x] in a single MXU push.
        pre = jnp.dot(xs_t, w_stat, preferred_element_type=f32)   # (N, 5Hp)
        pre = pre + xn * w_xn + b_comb              # add xn column + biases (f32)
        root = pre[:, :Hp]                          # includes b_g
        xw = pre[:, Hp:2 * Hp]                      # x @ W_rel   (no bias)
        gi = pre[:, 2 * Hp:]                        # x @ W_ih_x  (includes b_ih)

        # GraphConv aggregation: block-diagonal batch graph -> per-batch matmul.
        # (A^T x) W_rel == A^T (x W_rel)
        aggr = jnp.dot(At, xw.astype(bf16), preferred_element_type=f32)
        gcn = jax.nn.sigmoid(root + aggr)           # (N, Hp); padded lanes = 0.5
                                                    # (killed by zero rows of w_ihg)

        # GRU cell on concat([x, gcn]) against hn.
        gi = gi + jnp.dot(gcn.astype(bf16), w_ihg, preferred_element_type=f32)
        gh = jnp.dot(hn.astype(bf16), w_hh, preferred_element_type=f32) + b_hh

        # Lane-aligned (128-wide) gate slices.
        r = jax.nn.sigmoid(gi[:, :Hp] + gh[:, :Hp])
        z = jax.nn.sigmoid(gi[:, Hp:2 * Hp] + gh[:, Hp:2 * Hp])
        n = jnp.tanh(gi[:, 2 * Hp:] + r * gh[:, 2 * Hp:])
        hn_new = (1.0 - z) * n + z * hn             # padded lanes stay exactly 0

        # fc_out: hid -> 1 (w_out padded lanes are zero).
        xn_new = jnp.sum(hn_new * w_out, axis=-1, keepdims=True) + b_out
        return hn_new, xn_new

    hn0 = jnp.zeros((N, Hp), f32)
    xn0 = jnp.zeros((N, 1), f32)
    hn_f, xn_f = lax.fori_loop(0, T, step, (hn0, xn0), unroll=True)

    hn_ref[...] = hn_f
    xn_ref[...] = xn_f


def make_encoder_call(T, B, N, Dp, Hp):
    in_specs = [
        pl.BlockSpec((pl.Squeezed(), T, N, Dp), lambda b: (b, 0, 0, 0)),  # xs[b]
        pl.BlockSpec((N, N), lambda b: (0, 0)),                           # A^T
        pl.BlockSpec((Dp, 5 * Hp), lambda b: (0, 0)),                     # fused static W
        pl.BlockSpec((1, 5 * Hp), lambda b: (0, 0)),                      # xn-column W
        pl.BlockSpec((1, 5 * Hp), lambda b: (0, 0)),                      # fused biases
        pl.BlockSpec((Hp, 3 * Hp), lambda b: (0, 0)),                     # W_ih (gcn rows)
        pl.BlockSpec((Hp, 3 * Hp), lambda b: (0, 0)),                     # W_hh
        pl.BlockSpec((1, 3 * Hp), lambda b: (0, 0)),                      # b_hh
        pl.BlockSpec((1, Hp), lambda b: (0, 0)),                          # fc_out weight
        pl.BlockSpec((1, 1), lambda b: (0, 0)),                           # fc_out bias
    ]
    out_specs = [
        pl.BlockSpec((N, Hp), lambda b: (b, 0)),                          # hn rows of batch b
        pl.BlockSpec((N, 1), lambda b: (b, 0)),                           # xn rows of batch b
    ]
    return pl.pallas_call(
        encoder_kernel,
        out_shape=(jax.ShapeDtypeStruct((B * N, Hp), jnp.float32),
                   jax.ShapeDtypeStruct((B * N, 1), jnp.float32)),
        grid_spec=pltpu.PrefetchScalarGridSpec(
            num_scalar_prefetch=0,
            grid=(B,),
            in_specs=in_specs,
            out_specs=out_specs),
        compiler_params=pltpu.CompilerParams(
            dimension_semantics=("parallel",),        # shard batches across TCs (v7x)
            vmem_limit_bytes=32 * 1024 * 1024),
    )


def init_params(key, in_dim, emb_dim, hid_dim, num_embeddings, city_num):
    D = in_dim - 1 + emb_dim + 2          # GraphConv / GRU "x" feature width
    ks = jax.random.split(key, 12)
    s = 0.1
    p = {}
    p['emb'] = jax.random.normal(ks[0], (num_embeddings, emb_dim), jnp.float32) * s
    p['w_root'] = jax.random.normal(ks[1], (D, hid_dim), jnp.float32) * s
    p['w_rel'] = jax.random.normal(ks[2], (D, hid_dim), jnp.float32) * s
    p['b_g'] = jax.random.normal(ks[3], (1, hid_dim), jnp.float32) * s
    p['w_ih'] = jax.random.normal(ks[4], (D + hid_dim, 3 * hid_dim), jnp.float32) * s
    p['b_ih'] = jax.random.normal(ks[5], (1, 3 * hid_dim), jnp.float32) * s
    p['w_hh'] = jax.random.normal(ks[6], (hid_dim, 3 * hid_dim), jnp.float32) * s
    p['b_hh'] = jax.random.normal(ks[7], (1, 3 * hid_dim), jnp.float32) * s
    p['w_out'] = jax.random.normal(ks[8], (1, hid_dim), jnp.float32) * s
    p['b_out'] = jax.random.normal(ks[9], (1, 1), jnp.float32) * s
    # Synthetic weighted adjacency (stands in for edge_indices / edge_weights).
    a_w = jax.random.uniform(ks[10], (city_num, city_num), jnp.float32)
    a_m = (jax.random.uniform(ks[11], (city_num, city_num)) < 0.3).astype(jnp.float32)
    p['A'] = a_w * a_m
    return p


def encoder_forward(params, X, y, hist_len):
    """X: [B, T, N, F] (last feature = embedding index), y: [B, T, N, 1]."""
    B, _, N, F = X.shape
    E = params['emb'].shape[1]
    H = params['w_hh'].shape[0]
    D = F - 1 + E + 2          # width of concat x = [xn | y | X_cont | emb]
    D1 = D - 1                 # width of the xn-independent features
    assert N % 8 == 0, "city_num must be a multiple of 8"
    # TODO(synk): for general city_num pad nodes (and adjacency rows/cols) with zeros.

    Hp = _round_up(H, 128)
    Dp = _round_up(D1, 128)
    bf16 = jnp.bfloat16

    # ---- glue (plain JAX): embedding gather + time-stacked xn-independent feats ----
    idx = X[:, :hist_len, :, -1].astype(jnp.int32)                         # (B,T,N)
    emb = jnp.take(params['emb'], idx, axis=0)                             # (B,T,N,E)
    xs = jnp.concatenate([y[:, :hist_len], X[:, :hist_len, :, :-1], emb], axis=-1)
    xs = _pad_last(xs, Dp).astype(bf16)                                    # (B,T,N,Dp)

    # Per-graph transposed adjacency (block-diagonal batched graph is handled by
    # the batch grid axis -- no kron / (B*N)^2 matrix).
    At = params['A'].T.astype(bf16)                                        # (N,N)

    # ---- weight packing: fused, gate-padded (lane-aligned), bf16 matmul operands ----
    w_root, w_rel, w_ih = params['w_root'], params['w_rel'], params['w_ih']
    w_stat = jnp.concatenate([
        _pad_last(w_root[1:], Hp),                  # (D1, Hp)
        _pad_last(w_rel[1:], Hp),                   # (D1, Hp)
        _pad_gates(w_ih[1:D], H, Hp),               # (D1, 3Hp)
    ], axis=1)
    w_stat = jnp.pad(w_stat, ((0, Dp - D1), (0, 0))).astype(bf16)          # (Dp, 5Hp)

    w_xn = jnp.concatenate([
        _pad_last(w_root[:1], Hp), _pad_last(w_rel[:1], Hp),
        _pad_gates(w_ih[:1], H, Hp)], axis=1)                              # (1, 5Hp) f32

    b_comb = jnp.concatenate([
        _pad_last(params['b_g'], Hp), jnp.zeros((1, Hp), jnp.float32),
        _pad_gates(params['b_ih'], H, Hp)], axis=1)                        # (1, 5Hp) f32

    w_ihg = jnp.pad(_pad_gates(w_ih[D:], H, Hp), ((0, Hp - H), (0, 0))).astype(bf16)
    w_hh = jnp.pad(_pad_gates(params['w_hh'], H, Hp), ((0, Hp - H), (0, 0))).astype(bf16)
    b_hh = _pad_gates(params['b_hh'], H, Hp)                               # (1, 3Hp) f32
    w_out = _pad_last(params['w_out'], Hp)                                 # (1, Hp) f32
    b_out = params['b_out']                                                # (1, 1) f32

    call = make_encoder_call(hist_len, B, N, Dp, Hp)
    hn_p, xn_p = call(xs, At, w_stat, w_xn, b_comb, w_ihg, w_hh, b_hh, w_out, b_out)
    return hn_p[:, :H], xn_p.reshape(B, N, 1)


def encoder_reference(params, X, y, hist_len):
    """Pure-JAX (f32) mirror of the torch forward, for validation."""
    B, _, N, F = X.shape
    H = params['w_hh'].shape[0]
    A = params['A']
    hn = jnp.zeros((B, N, H), jnp.float32)
    xn = jnp.zeros((B, N, 1), jnp.float32)
    for i in range(hist_len):
        idx = X[:, i, :, -1].astype(jnp.int32)
        emb = params['emb'][idx]
        x = jnp.concatenate([xn, y[:, i], X[:, i, :, :-1], emb], axis=-1)   # (B,N,D)
        aggr = jnp.einsum('ji,bjd->bid', A, x)                              # src->dst sum-aggr
        gcn = jax.nn.sigmoid(x @ params['w_root'] + aggr @ params['w_rel'] + params['b_g'])
        xf = jnp.concatenate([x, gcn], axis=-1)
        gi = xf @ params['w_ih'] + params['b_ih']
        gh = hn @ params['w_hh'] + params['b_hh']
        r = jax.nn.sigmoid(gi[..., :H] + gh[..., :H])
        z = jax.nn.sigmoid(gi[..., H:2 * H] + gh[..., H:2 * H])
        n = jnp.tanh(gi[..., 2 * H:] + r * gh[..., 2 * H:])
        hn = (1.0 - z) * n + z * hn
        xn = hn @ params['w_out'].T + params['b_out']
    return hn.reshape(B * N, H), xn


if __name__ == "__main__":
    # Small shapes consistent with the module signature.
    batch_size, city_num, in_dim = 2, 16, 4
    emb_dim, hid_dim = 8, 32
    hist_len, forecast_len = 6, 4
    num_embeddings = 10
    T_total = hist_len + forecast_len

    key = jax.random.PRNGKey(0)
    kp, kx, ky, ki = jax.random.split(key, 4)
    params = init_params(kp, in_dim, emb_dim, hid_dim, num_embeddings, city_num)

    x_cont = jax.random.normal(kx, (batch_size, T_total, city_num, in_dim - 1), jnp.float32)
    x_idx = jax.random.randint(ki, (batch_size, T_total, city_num, 1),
                               0, num_embeddings).astype(jnp.float32)
    X = jnp.concatenate([x_cont, x_idx], axis=-1)          # [B, T, N, in_dim]
    y = jax.random.normal(ky, (batch_size, T_total, city_num, 1), jnp.float32)

    hn, xn = encoder_forward(params, X, y, hist_len)
    (hn, xn) = jax.block_until_ready((hn, xn))

    hn_ref, xn_ref = encoder_reference(params, X, y, hist_len)
    # bf16 MXU operands (f32 accumulation) vs an all-f32 reference -> loose tolerance.
    assert bool(jnp.allclose(hn, hn_ref, atol=2e-2, rtol=2e-2)), "hn mismatch"
    assert bool(jnp.allclose(xn, xn_ref, atol=2e-2, rtol=2e-2)), "xn mismatch"

    print("KERNEL_OK")
</pallas_src>

<mosaic_0001>
module attributes {stable_mosaic.version = 11 : i64} {
  func.func @encoder_kernel(%arg0: i32, %arg1: memref<1x6x16x128xbf16, #tpu.memory_space<vmem>>, %arg2: memref<16x16xbf16, #tpu.memory_space<vmem>>, %arg3: memref<128x640xbf16, #tpu.memory_space<vmem>>, %arg4: memref<1x640xf32, #tpu.memory_space<vmem>>, %arg5: memref<1x640xf32, #tpu.memory_space<vmem>>, %arg6: memref<128x384xbf16, #tpu.memory_space<vmem>>, %arg7: memref<128x384xbf16, #tpu.memory_space<vmem>>, %arg8: memref<1x384xf32, #tpu.memory_space<vmem>>, %arg9: memref<1x128xf32, #tpu.memory_space<vmem>>, %arg10: memref<1x1xf32, #tpu.memory_space<vmem>>, %arg11: memref<16x128xf32, #tpu.memory_space<vmem>>, %arg12: memref<16x1xf32, #tpu.memory_space<vmem>>) attributes {dimension_semantics = [#tpu.dimension_semantics<parallel>], iteration_bounds = array<i64: 2>, scalar_prefetch = 0 : i64, scratch_operands = 0 : i64, tpu.core_type = #tpu.core_type<tc>, window_params = [{transform_indices = @transform_0, window_bounds = array<i64: 1, 6, 16, 128>}, {pipeline_mode = #tpu.pipeline_mode<synchronous>, transform_indices = @transform_1, window_bounds = array<i64: 16, 16>}, {pipeline_mode = #tpu.pipeline_mode<synchronous>, transform_indices = @transform_2, window_bounds = array<i64: 128, 640>}, {pipeline_mode = #tpu.pipeline_mode<synchronous>, transform_indices = @transform_3, window_bounds = array<i64: 1, 640>}, {pipeline_mode = #tpu.pipeline_mode<synchronous>, transform_indices = @transform_4, window_bounds = array<i64: 1, 640>}, {pipeline_mode = #tpu.pipeline_mode<synchronous>, transform_indices = @transform_5, window_bounds = array<i64: 128, 384>}, {pipeline_mode = #tpu.pipeline_mode<synchronous>, transform_indices = @transform_6, window_bounds = array<i64: 128, 384>}, {pipeline_mode = #tpu.pipeline_mode<synchronous>, transform_indices = @transform_7, window_bounds = array<i64: 1, 384>}, {pipeline_mode = #tpu.pipeline_mode<synchronous>, transform_indices = @transform_8, window_bounds = array<i64: 1, 128>}, {pipeline_mode = #tpu.pipeline_mode<synchronous>, transform_indices = @transform_9, window_bounds = array<i64: 1, 1>}, {transform_indices = @transform_10, window_bounds = array<i64: 16, 128>}, {transform_indices = @transform_11, window_bounds = array<i64: 16, 1>}]} {
    %c0 = arith.constant 0 : index
    %c0_0 = arith.constant 0 : index
    %0 = vector.load %arg2[%c0, %c0_0] : memref<16x16xbf16, #tpu.memory_space<vmem>>, vector<16x16xbf16>
    %c0_1 = arith.constant 0 : index
    %c0_2 = arith.constant 0 : index
    %1 = vector.load %arg3[%c0_1, %c0_2] : memref<128x640xbf16, #tpu.memory_space<vmem>>, vector<128x640xbf16>
    %c0_3 = arith.constant 0 : index
    %c0_4 = arith.constant 0 : index
    %2 = vector.load %arg4[%c0_3, %c0_4] : memref<1x640xf32, #tpu.memory_space<vmem>>, vector<1x640xf32>
    %c0_5 = arith.constant 0 : index
    %c0_6 = arith.constant 0 : index
    %3 = vector.load %arg5[%c0_5, %c0_6] : memref<1x640xf32, #tpu.memory_space<vmem>>, vector<1x640xf32>
    %c0_7 = arith.constant 0 : index
    %c0_8 = arith.constant 0 : index
    %4 = vector.load %arg6[%c0_7, %c0_8] : memref<128x384xbf16, #tpu.memory_space<vmem>>, vector<128x384xbf16>
    %c0_9 = arith.constant 0 : index
    %c0_10 = arith.constant 0 : index
    %5 = vector.load %arg7[%c0_9, %c0_10] : memref<128x384xbf16, #tpu.memory_space<vmem>>, vector<128x384xbf16>
    %c0_11 = arith.constant 0 : index
    %c0_12 = arith.constant 0 : index
    %6 = vector.load %arg8[%c0_11, %c0_12] : memref<1x384xf32, #tpu.memory_space<vmem>>, vector<1x384xf32>
    %c0_13 = arith.constant 0 : index
    %c0_14 = arith.constant 0 : index
    %7 = vector.load %arg9[%c0_13, %c0_14] : memref<1x128xf32, #tpu.memory_space<vmem>>, vector<1x128xf32>
    %c0_15 = arith.constant 0 : index
    %c0_16 = arith.constant 0 : index
    %8 = vector.load %arg10[%c0_15, %c0_16] : memref<1x1xf32, #tpu.memory_space<vmem>>, vector<1x1xf32>
    %cst = arith.constant 0.000000e+00 : f32
    %9 = vector.broadcast %cst : f32 to vector<16x128xf32>
    %cst_17 = arith.constant 0.000000e+00 : f32
    %10 = vector.broadcast %cst_17 : f32 to vector<16x1xf32>
    %c0_i32 = arith.constant 0 : i32
    %c0_18 = arith.constant 0 : index
    %11 = arith.index_cast %c0_i32 : i32 to index
    %c0_19 = arith.constant 0 : index
    %c0_20 = arith.constant 0 : index
    %12 = vector.load %arg1[%c0_18, %11, %c0_19, %c0_20] : memref<1x6x16x128xbf16, #tpu.memory_space<vmem>>, vector<1x1x16x128xbf16>
    %13 = vector.shape_cast %12 : vector<1x1x16x128xbf16> to vector<16x128xbf16>
    %cst_21 = arith.constant dense<0.000000e+00> : vector<16x640xf32>
    %14 = tpu.matmul %13, %1, %cst_21 {dimension_numbers = #tpu.dot_dimension_numbers<[1], [0], [0], [1], [0, 0, 1, 1], [], []>} : vector<16x128xbf16>, vector<128x640xbf16>, vector<16x640xf32> -> vector<16x640xf32>
    %15 = vector.broadcast %10 : vector<16x1xf32> to vector<16x640xf32>
    %16 = vector.broadcast %2 : vector<1x640xf32> to vector<16x640xf32>
    %17 = arith.mulf %15, %16 : vector<16x640xf32>
    %18 = arith.addf %14, %17 : vector<16x640xf32>
    %19 = vector.broadcast %3 : vector<1x640xf32> to vector<16x640xf32>
    %20 = arith.addf %18, %19 : vector<16x640xf32>
    %21 = vector.extract_strided_slice %20 {offsets = [0, 0], sizes = [16, 128], strides = [1, 1]} : vector<16x640xf32> to vector<16x128xf32>
    %22 = vector.extract_strided_slice %20 {offsets = [0, 128], sizes = [16, 128], strides = [1, 1]} : vector<16x640xf32> to vector<16x128xf32>
    %23 = vector.extract_strided_slice %20 {offsets = [0, 256], sizes = [16, 384], strides = [1, 1]} : vector<16x640xf32> to vector<16x384xf32>
    %24 = arith.truncf %22 : vector<16x128xf32> to vector<16x128xbf16>
    %cst_22 = arith.constant dense<0.000000e+00> : vector<16x128xf32>
    %25 = tpu.matmul %0, %24, %cst_22 {dimension_numbers = #tpu.dot_dimension_numbers<[1], [0], [0], [1], [0, 0, 1, 1], [], []>} : vector<16x16xbf16>, vector<16x128xbf16>, vector<16x128xf32> -> vector<16x128xf32>
    %26 = arith.addf %21, %25 : vector<16x128xf32>
    %27 = arith.negf %26 : vector<16x128xf32>
    %28 = math.exp %27 : vector<16x128xf32>
    %cst_23 = arith.constant 1.000000e+00 : f32
    %29 = vector.broadcast %cst_23 : f32 to vector<16x128xf32>
    %30 = arith.addf %29, %28 : vector<16x128xf32>
    %31 = arith.divf %29, %30 : vector<16x128xf32>
    %32 = arith.truncf %31 : vector<16x128xf32> to vector<16x128xbf16>
    %cst_24 = arith.constant dense<0.000000e+00> : vector<16x384xf32>
    %33 = tpu.matmul %32, %4, %cst_24 {dimension_numbers = #tpu.dot_dimension_numbers<[1], [0], [0], [1], [0, 0, 1, 1], [], []>} : vector<16x128xbf16>, vector<128x384xbf16>, vector<16x384xf32> -> vector<16x384xf32>
    %34 = arith.addf %23, %33 : vector<16x384xf32>
    %35 = arith.truncf %9 : vector<16x128xf32> to vector<16x128xbf16>
    %cst_25 = arith.constant dense<0.000000e+00> : vector<16x384xf32>
    %36 = tpu.matmul %35, %5, %cst_25 {dimension_numbers = #tpu.dot_dimension_numbers<[1], [0], [0], [1], [0, 0, 1, 1], [], []>} : vector<16x128xbf16>, vector<128x384xbf16>, vector<16x384xf32> -> vector<16x384xf32>
    %37 = vector.broadcast %6 : vector<1x384xf32> to vector<16x384xf32>
    %38 = arith.addf %36, %37 : vector<16x384xf32>
    %39 = vector.extract_strided_slice %34 {offsets = [0, 0], sizes = [16, 128], strides = [1, 1]} : vector<16x384xf32> to vector<16x128xf32>
    %40 = vector.extract_strided_slice %38 {offsets = [0, 0], sizes = [16, 128], strides = [1, 1]} : vector<16x384xf32> to vector<16x128xf32>
    %41 = arith.addf %39, %40 : vector<16x128xf32>
    %42 = arith.negf %41 : vector<16x128xf32>
    %43 = math.exp %42 : vector<16x128xf32>
    %cst_26 = arith.constant 1.000000e+00 : f32
    %44 = vector.broadcast %cst_26 : f32 to vector<16x128xf32>
    %45 = arith.addf %44, %43 : vector<16x128xf32>
    %46 = arith.divf %44, %45 : vector<16x128xf32>
    %47 = vector.extract_strided_slice %34 {offsets = [0, 128], sizes = [16, 128], strides = [1, 1]} : vector<16x384xf32> to vector<16x128xf32>
    %48 = vector.extract_strided_slice %38 {offsets = [0, 128], sizes = [16, 128], strides = [1, 1]} : vector<16x384xf32> to vector<16x128xf32>
    %49 = arith.addf %47, %48 : vector<16x128xf32>
    %50 = arith.negf %49 : vector<16x128xf32>
    %51 = math.exp %50 : vector<16x128xf32>
    %cst_27 = arith.constant 1.000000e+00 : f32
    %52 = vector.broadcast %cst_27 : f32 to vector<16x128xf32>
    %53 = arith.addf %52, %51 : vector<16x128xf32>
    %54 = arith.divf %52, %53 : vector<16x128xf32>
    %55 = vector.extract_strided_slice %34 {offsets = [0, 256], sizes = [16, 128], strides = [1, 1]} : vector<16x384xf32> to vector<16x128xf32>
    %56 = vector.extract_strided_slice %38 {offsets = [0, 256], sizes = [16, 128], strides = [1, 1]} : vector<16x384xf32> to vector<16x128xf32>
    %57 = arith.mulf %46, %56 : vector<16x128xf32>
    %58 = arith.addf %55, %57 : vector<16x128xf32>
    %59 = math.tanh %58 : vector<16x128xf32>
    %cst_28 = arith.constant 1.000000e+00 : f32
    %60 = vector.broadcast %cst_28 : f32 to vector<16x128xf32>
    %61 = arith.subf %60, %54 : vector<16x128xf32>
    %62 = arith.mulf %61, %59 : vector<16x128xf32>
    %63 = arith.mulf %54, %9 : vector<16x128xf32>
    %64 = arith.addf %62, %63 : vector<16x128xf32>
    %65 = vector.broadcast %7 : vector<1x128xf32> to vector<16x128xf32>
    %66 = arith.mulf %64, %65 : vector<16x128xf32>
    %cst_29 = arith.constant dense<0.000000e+00> : vector<16xf32>
    %67 = vector.multi_reduction <add>, %66, %cst_29 [1] : vector<16x128xf32> to vector<16xf32>
    %68 = vector.shape_cast %67 : vector<16xf32> to vector<16x1xf32>
    %69 = vector.broadcast %8 : vector<1x1xf32> to vector<16x1xf32>
    %70 = arith.addf %68, %69 : vector<16x1xf32>
    %c1_i32 = arith.constant 1 : i32
    %c0_30 = arith.constant 0 : index
    %71 = arith.index_cast %c1_i32 : i32 to index
    %c0_31 = arith.constant 0 : index
    %c0_32 = arith.constant 0 : index
    %72 = vector.load %arg1[%c0_30, %71, %c0_31, %c0_32] : memref<1x6x16x128xbf16, #tpu.memory_space<vmem>>, vector<1x1x16x128xbf16>
    %73 = vector.shape_cast %72 : vector<1x1x16x128xbf16> to vector<16x128xbf16>
    %cst_33 = arith.constant dense<0.000000e+00> : vector<16x640xf32>
    %74 = tpu.matmul %73, %1, %cst_33 {dimension_numbers = #tpu.dot_dimension_numbers<[1], [0], [0], [1], [0, 0, 1, 1], [], []>} : vector<16x128xbf16>, vector<128x640xbf16>, vector<16x640xf32> -> vector<16x640xf32>
    %75 = vector.broadcast %70 : vector<16x1xf32> to vector<16x640xf32>
    %76 = vector.broadcast %2 : vector<1x640xf32> to vector<16x640xf32>
    %77 = arith.mulf %75, %76 : vector<16x640xf32>
    %78 = arith.addf %74, %77 : vector<16x640xf32>
    %79 = vector.broadcast %3 : vector<1x640xf32> to vector<16x640xf32>
    %80 = arith.addf %78, %79 : vector<16x640xf32>
    %81 = vector.extract_strided_slice %80 {offsets = [0, 0], sizes = [16, 128], strides = [1, 1]} : vector<16x640xf32> to vector<16x128xf32>
    %82 = vector.extract_strided_slice %80 {offsets = [0, 128], sizes = [16, 128], strides = [1, 1]} : vector<16x640xf32> to vector<16x128xf32>
    %83 = vector.extract_strided_slice %80 {offsets = [0, 256], sizes = [16, 384], strides = [1, 1]} : vector<16x640xf32> to vector<16x384xf32>
    %84 = arith.truncf %82 : vector<16x128xf32> to vector<16x128xbf16>
    %cst_34 = arith.constant dense<0.000000e+00> : vector<16x128xf32>
    %85 = tpu.matmul %0, %84, %cst_34 {dimension_numbers = #tpu.dot_dimension_numbers<[1], [0], [0], [1], [0, 0, 1, 1], [], []>} : vector<16x16xbf16>, vector<16x128xbf16>, vector<16x128xf32> -> vector<16x128xf32>
    %86 = arith.addf %81, %85 : vector<16x128xf32>
    %87 = arith.negf %86 : vector<16x128xf32>
    %88 = math.exp %87 : vector<16x128xf32>
    %cst_35 = arith.constant 1.000000e+00 : f32
    %89 = vector.broadcast %cst_35 : f32 to vector<16x128xf32>
    %90 = arith.addf %89, %88 : vector<16x128xf32>
    %91 = arith.divf %89, %90 : vector<16x128xf32>
    %92 = arith.truncf %91 : vector<16x128xf32> to vector<16x128xbf16>
    %cst_36 = arith.constant dense<0.000000e+00> : vector<16x384xf32>
    %93 = tpu.matmul %92, %4, %cst_36 {dimension_numbers = #tpu.dot_dimension_numbers<[1], [0], [0], [1], [0, 0, 1, 1], [], []>} : vector<16x128xbf16>, vector<128x384xbf16>, vector<16x384xf32> -> vector<16x384xf32>
    %94 = arith.addf %83, %93 : vector<16x384xf32>
    %95 = arith.truncf %64 : vector<16x128xf32> to vector<16x128xbf16>
    %cst_37 = arith.constant dense<0.000000e+00> : vector<16x384xf32>
    %96 = tpu.matmul %95, %5, %cst_37 {dimension_numbers = #tpu.dot_dimension_numbers<[1], [0], [0], [1], [0, 0, 1, 1], [], []>} : vector<16x128xbf16>, vector<128x384xbf16>, vector<16x384xf32> -> vector<16x384xf32>
    %97 = vector.broadcast %6 : vector<1x384xf32> to vector<16x384xf32>
    %98 = arith.addf %96, %97 : vector<16x384xf32>
    %99 = vector.extract_strided_slice %94 {offsets = [0, 0], sizes = [16, 128], strides = [1, 1]} : vector<16x384xf32> to vector<16x128xf32>
    %100 = vector.extract_strided_slice %98 {offsets = [0, 0], sizes = [16, 128], strides = [1, 1]} : vector<16x384xf32> to vector<16x128xf32>
    %101 = arith.addf %99, %100 : vector<16x128xf32>
    %102 = arith.negf %101 : vector<16x128xf32>
    %103 = math.exp %102 : vector<16x128xf32>
    %cst_38 = arith.constant 1.000000e+00 : f32
    %104 = vector.broadcast %cst_38 : f32 to vector<16x128xf32>
    %105 = arith.addf %104, %103 : vector<16x128xf32>
    %106 = arith.divf %104, %105 : vector<16x128xf32>
    %107 = vector.extract_strided_slice %94 {offsets = [0, 128], sizes = [16, 128], strides = [1, 1]} : vector<16x384xf32> to vector<16x128xf32>
    %108 = vector.extract_strided_slice %98 {offsets = [0, 128], sizes = [16, 128], strides = [1, 1]} : vector<16x384xf32> to vector<16x128xf32>
    %109 = arith.addf %107, %108 : vector<16x128xf32>
    %110 = arith.negf %109 : vector<16x128xf32>
    %111 = math.exp %110 : vector<16x128xf32>
    %cst_39 = arith.constant 1.000000e+00 : f32
    %112 = vector.broadcast %cst_39 : f32 to vector<16x128xf32>
    %113 = arith.addf %112, %111 : vector<16x128xf32>
    %114 = arith.divf %112, %113 : vector<16x128xf32>
    %115 = vector.extract_strided_slice %94 {offsets = [0, 256], sizes = [16, 128], strides = [1, 1]} : vector<16x384xf32> to vector<16x128xf32>
    %116 = vector.extract_strided_slice %98 {offsets = [0, 256], sizes = [16, 128], strides = [1, 1]} : vector<16x384xf32> to vector<16x128xf32>
    %117 = arith.mulf %106, %116 : vector<16x128xf32>
    %118 = arith.addf %115, %117 : vector<16x128xf32>
    %119 = math.tanh %118 : vector<16x128xf32>
    %cst_40 = arith.constant 1.000000e+00 : f32
    %120 = vector.broadcast %cst_40 : f32 to vector<16x128xf32>
    %121 = arith.subf %120, %114 : vector<16x128xf32>
    %122 = arith.mulf %121, %119 : vector<16x128xf32>
    %123 = arith.mulf %114, %64 : vector<16x128xf32>
    %124 = arith.addf %122, %123 : vector<16x128xf32>
    %125 = vector.broadcast %7 : vector<1x128xf32> to vector<16x128xf32>
    %126 = arith.mulf %124, %125 : vector<16x128xf32>
    %cst_41 = arith.constant dense<0.000000e+00> : vector<16xf32>
    %127 = vector.multi_reduction <add>, %126, %cst_41 [1] : vector<16x128xf32> to vector<16xf32>
    %128 = vector.shape_cast %127 : vector<16xf32> to vector<16x1xf32>
    %129 = vector.broadcast %8 : vector<1x1xf32> to vector<16x1xf32>
    %130 = arith.addf %128, %129 : vector<16x1xf32>
    %c2_i32 = arith.constant 2 : i32
    %c0_42 = arith.constant 0 : index
    %131 = arith.index_cast %c2_i32 : i32 to index
    %c0_43 = arith.constant 0 : index
    %c0_44 = arith.constant 0 : index
    %132 = vector.load %arg1[%c0_42, %131, %c0_43, %c0_44] : memref<1x6x16x128xbf16, #tpu.memory_space<vmem>>, vector<1x1x16x128xbf16>
    %133 = vector.shape_cast %132 : vector<1x1x16x128xbf16> to vector<16x128xbf16>
    %cst_45 = arith.constant dense<0.000000e+00> : vector<16x640xf32>
    %134 = tpu.matmul %133, %1, %cst_45 {dimension_numbers = #tpu.dot_dimension_numbers<[1], [0], [0], [1], [0, 0, 1, 1], [], []>} : vector<16x128xbf16>, vector<128x640xbf16>, vector<16x640xf32> -> vector<16x640xf32>
    %135 = vector.broadcast %130 : vector<16x1xf32> to vector<16x640xf32>
    %136 = vector.broadcast %2 : vector<1x640xf32> to vector<16x640xf32>
    %137 = arith.mulf %135, %136 : vector<16x640xf32>
    %138 = arith.addf %134, %137 : vector<16x640xf32>
    %139 = vector.broadcast %3 : vector<1x640xf32> to vector<16x640xf32>
    %140 = arith.addf %138, %139 : vector<16x640xf32>
    %141 = vector.extract_strided_slice %140 {offsets = [0, 0], sizes = [16, 128], strides = [1, 1]} : vector<16x640xf32> to vector<16x128xf32>
    %142 = vector.extract_strided_slice %140 {offsets = [0, 128], sizes = [16, 128], strides = [1, 1]} : vector<16x640xf32> to vector<16x128xf32>
    %143 = vector.extract_strided_slice %140 {offsets = [0, 256], sizes = [16, 384], strides = [1, 1]} : vector<16x640xf32> to vector<16x384xf32>
    %144 = arith.truncf %142 : vector<16x128xf32> to vector<16x128xbf16>
    %cst_46 = arith.constant dense<0.000000e+00> : vector<16x128xf32>
    %145 = tpu.matmul %0, %144, %cst_46 {dimension_numbers = #tpu.dot_dimension_numbers<[1], [0], [0], [1], [0, 0, 1, 1], [], []>} : vector<16x16xbf16>, vector<16x128xbf16>, vector<16x128xf32> -> vector<16x128xf32>
    %146 = arith.addf %141, %145 : vector<16x128xf32>
    %147 = arith.negf %146 : vector<16x128xf32>
    %148 = math.exp %147 : vector<16x128xf32>
    %cst_47 = arith.constant 1.000000e+00 : f32
    %149 = vector.broadcast %cst_47 : f32 to vector<16x128xf32>
    %150 = arith.addf %149, %148 : vector<16x128xf32>
    %151 = arith.divf %149, %150 : vector<16x128xf32>
    %152 = arith.truncf %151 : vector<16x128xf32> to vector<16x128xbf16>
    %cst_48 = arith.constant dense<0.000000e+00> : vector<16x384xf32>
    %153 = tpu.matmul %152, %4, %cst_48 {dimension_numbers = #tpu.dot_dimension_numbers<[1], [0], [0], [1], [0, 0, 1, 1], [], []>} : vector<16x128xbf16>, vector<128x384xbf16>, vector<16x384xf32> -> vector<16x384xf32>
    %154 = arith.addf %143, %153 : vector<16x384xf32>
    %155 = arith.truncf %124 : vector<16x128xf32> to vector<16x128xbf16>
    %cst_49 = arith.constant dense<0.000000e+00> : vector<16x384xf32>
    %156 = tpu.matmul %155, %5, %cst_49 {dimension_numbers = #tpu.dot_dimension_numbers<[1], [0], [0], [1], [0, 0, 1, 1], [], []>} : vector<16x128xbf16>, vector<128x384xbf16>, vector<16x384xf32> -> vector<16x384xf32>
    %157 = vector.broadcast %6 : vector<1x384xf32> to vector<16x384xf32>
    %158 = arith.addf %156, %157 : vector<16x384xf32>
    %159 = vector.extract_strided_slice %154 {offsets = [0, 0], sizes = [16, 128], strides = [1, 1]} : vector<16x384xf32> to vector<16x128xf32>
    %160 = vector.extract_strided_slice %158 {offsets = [0, 0], sizes = [16, 128], strides = [1, 1]} : vector<16x384xf32> to vector<16x128xf32>
    %161 = arith.addf %159, %160 : vector<16x128xf32>
    %162 = arith.negf %161 : vector<16x128xf32>
    %163 = math.exp %162 : vector<16x128xf32>
    %cst_50 = arith.constant 1.000000e+00 : f32
    %164 = vector.broadcast %cst_50 : f32 to vector<16x128xf32>
    %165 = arith.addf %164, %163 : vector<16x128xf32>
    %166 = arith.divf %164, %165 : vector<16x128xf32>
    %167 = vector.extract_strided_slice %154 {offsets = [0, 128], sizes = [16, 128], strides = [1, 1]} : vector<16x384xf32> to vector<16x128xf32>
    %168 = vector.extract_strided_slice %158 {offsets = [0, 128], sizes = [16, 128], strides = [1, 1]} : vector<16x384xf32> to vector<16x128xf32>
    %169 = arith.addf %167, %168 : vector<16x128xf32>
    %170 = arith.negf %169 : vector<16x128xf32>
    %171 = math.exp %170 : vector<16x128xf32>
    %cst_51 = arith.constant 1.000000e+00 : f32
    %172 = vector.broadcast %cst_51 : f32 to vector<16x128xf32>
    %173 = arith.addf %172, %171 : vector<16x128xf32>
    %174 = arith.divf %172, %173 : vector<16x128xf32>
    %175 = vector.extract_strided_slice %154 {offsets = [0, 256], sizes = [16, 128], strides = [1, 1]} : vector<16x384xf32> to vector<16x128xf32>
    %176 = vector.extract_strided_slice %158 {offsets = [0, 256], sizes = [16, 128], strides = [1, 1]} : vector<16x384xf32> to vector<16x128xf32>
    %177 = arith.mulf %166, %176 : vector<16x128xf32>
    %178 = arith.addf %175, %177 : vector<16x128xf32>
    %179 = math.tanh %178 : vector<16x128xf32>
    %cst_52 = arith.constant 1.000000e+00 : f32
    %180 = vector.broadcast %cst_52 : f32 to vector<16x128xf32>
    %181 = arith.subf %180, %174 : vector<16x128xf32>
    %182 = arith.mulf %181, %179 : vector<16x128xf32>
    %183 = arith.mulf %174, %124 : vector<16x128xf32>
    %184 = arith.addf %182, %183 : vector<16x128xf32>
    %185 = vector.broadcast %7 : vector<1x128xf32> to vector<16x128xf32>
    %186 = arith.mulf %184, %185 : vector<16x128xf32>
    %cst_53 = arith.constant dense<0.000000e+00> : vector<16xf32>
    %187 = vector.multi_reduction <add>, %186, %cst_53 [1] : vector<16x128xf32> to vector<16xf32>
    %188 = vector.shape_cast %187 : vector<16xf32> to vector<16x1xf32>
    %189 = vector.broadcast %8 : vector<1x1xf32> to vector<16x1xf32>
    %190 = arith.addf %188, %189 : vector<16x1xf32>
    %c3_i32 = arith.constant 3 : i32
    %c0_54 = arith.constant 0 : index
    %191 = arith.index_cast %c3_i32 : i32 to index
    %c0_55 = arith.constant 0 : index
    %c0_56 = arith.constant 0 : index
    %192 = vector.load %arg1[%c0_54, %191, %c0_55, %c0_56] : memref<1x6x16x128xbf16, #tpu.memory_space<vmem>>, vector<1x1x16x128xbf16>
    %193 = vector.shape_cast %192 : vector<1x1x16x128xbf16> to vector<16x128xbf16>
    %cst_57 = arith.constant dense<0.000000e+00> : vector<16x640xf32>
    %194 = tpu.matmul %193, %1, %cst_57 {dimension_numbers = #tpu.dot_dimension_numbers<[1], [0], [0], [1], [0, 0, 1, 1], [], []>} : vector<16x128xbf16>, vector<128x640xbf16>, vector<16x640xf32> -> vector<16x640xf32>
    %195 = vector.broadcast %190 : vector<16x1xf32> to vector<16x640xf32>
    %196 = vector.broadcast %2 : vector<1x640xf32> to vector<16x640xf32>
    %197 = arith.mulf %195, %196 : vector<16x640xf32>
    %198 = arith.addf %194, %197 : vector<16x640xf32>
    %199 = vector.broadcast %3 : vector<1x640xf32> to vector<16x640xf32>
    %200 = arith.addf %198, %199 : vector<16x640xf32>
    %201 = vector.extract_strided_slice %200 {offsets = [0, 0], sizes = [16, 128], strides = [1, 1]} : vector<16x640xf32> to vector<16x128xf32>
    %202 = vector.extract_strided_slice %200 {offsets = [0, 128], sizes = [16, 128], strides = [1, 1]} : vector<16x640xf32> to vector<16x128xf32>
    %203 = vector.extract_strided_slice %200 {offsets = [0, 256], sizes = [16, 384], strides = [1, 1]} : vector<16x640xf32> to vector<16x384xf32>
    %204 = arith.truncf %202 : vector<16x128xf32> to vector<16x128xbf16>
    %cst_58 = arith.constant dense<0.000000e+00> : vector<16x128xf32>
    %205 = tpu.matmul %0, %204, %cst_58 {dimension_numbers = #tpu.dot_dimension_numbers<[1], [0], [0], [1], [0, 0, 1, 1], [], []>} : vector<16x16xbf16>, vector<16x128xbf16>, vector<16x128xf32> -> vector<16x128xf32>
    %206 = arith.addf %201, %205 : vector<16x128xf32>
    %207 = arith.negf %206 : vector<16x128xf32>
    %208 = math.exp %207 : vector<16x128xf32>
    %cst_59 = arith.constant 1.000000e+00 : f32
    %209 = vector.broadcast %cst_59 : f32 to vector<16x128xf32>
    %210 = arith.addf %209, %208 : vector<16x128xf32>
    %211 = arith.divf %209, %210 : vector<16x128xf32>
    %212 = arith.truncf %211 : vector<16x128xf32> to vector<16x128xbf16>
    %cst_60 = arith.constant dense<0.000000e+00> : vector<16x384xf32>
    %213 = tpu.matmul %212, %4, %cst_60 {dimension_numbers = #tpu.dot_dimension_numbers<[1], [0], [0], [1], [0, 0, 1, 1], [], []>} : vector<16x128xbf16>, vector<128x384xbf16>, vector<16x384xf32> -> vector<16x384xf32>
    %214 = arith.addf %203, %213 : vector<16x384xf32>
    %215 = arith.truncf %184 : vector<16x128xf32> to vector<16x128xbf16>
    %cst_61 = arith.constant dense<0.000000e+00> : vector<16x384xf32>
    %216 = tpu.matmul %215, %5, %cst_61 {dimension_numbers = #tpu.dot_dimension_numbers<[1], [0], [0], [1], [0, 0, 1, 1], [], []>} : vector<16x128xbf16>, vector<128x384xbf16>, vector<16x384xf32> -> vector<16x384xf32>
    %217 = vector.broadcast %6 : vector<1x384xf32> to vector<16x384xf32>
    %218 = arith.addf %216, %217 : vector<16x384xf32>
    %219 = vector.extract_strided_slice %214 {offsets = [0, 0], sizes = [16, 128], strides = [1, 1]} : vector<16x384xf32> to vector<16x128xf32>
    %220 = vector.extract_strided_slice %218 {offsets = [0, 0], sizes = [16, 128], strides = [1, 1]} : vector<16x384xf32> to vector<16x128xf32>
    %221 = arith.addf %219, %220 : vector<16x128xf32>
    %222 = arith.negf %221 : vector<16x128xf32>
    %223 = math.exp %222 : vector<16x128xf32>
    %cst_62 = arith.constant 1.000000e+00 : f32
    %224 = vector.broadcast %cst_62 : f32 to vector<16x128xf32>
    %225 = arith.addf %224, %223 : vector<16x128xf32>
    %226 = arith.divf %224, %225 : vector<16x128xf32>
    %227 = vector.extract_strided_slice %214 {offsets = [0, 128], sizes = [16, 128], strides = [1, 1]} : vector<16x384xf32> to vector<16x128xf32>
    %228 = vector.extract_strided_slice %218 {offsets = [0, 128], sizes = [16, 128], strides = [1, 1]} : vector<16x384xf32> to vector<16x128xf32>
    %229 = arith.addf %227, %228 : vector<16x128xf32>
    %230 = arith.negf %229 : vector<16x128xf32>
    %231 = math.exp %230 : vector<16x128xf32>
    %cst_63 = arith.constant 1.000000e+00 : f32
    %232 = vector.broadcast %cst_63 : f32 to vector<16x128xf32>
    %233 = arith.addf %232, %231 : vector<16x128xf32>
    %234 = arith.divf %232, %233 : vector<16x128xf32>
    %235 = vector.extract_strided_slice %214 {offsets = [0, 256], sizes = [16, 128], strides = [1, 1]} : vector<16x384xf32> to vector<16x128xf32>
    %236 = vector.extract_strided_slice %218 {offsets = [0, 256], sizes = [16, 128], strides = [1, 1]} : vector<16x384xf32> to vector<16x128xf32>
    %237 = arith.mulf %226, %236 : vector<16x128xf32>
    %238 = arith.addf %235, %237 : vector<16x128xf32>
    %239 = math.tanh %238 : vector<16x128xf32>
    %cst_64 = arith.constant 1.000000e+00 : f32
    %240 = vector.broadcast %cst_64 : f32 to vector<16x128xf32>
    %241 = arith.subf %240, %234 : vector<16x128xf32>
    %242 = arith.mulf %241, %239 : vector<16x128xf32>
    %243 = arith.mulf %234, %184 : vector<16x128xf32>
    %244 = arith.addf %242, %243 : vector<16x128xf32>
    %245 = vector.broadcast %7 : vector<1x128xf32> to vector<16x128xf32>
    %246 = arith.mulf %244, %245 : vector<16x128xf32>
    %cst_65 = arith.constant dense<0.000000e+00> : vector<16xf32>
    %247 = vector.multi_reduction <add>, %246, %cst_65 [1] : vector<16x128xf32> to vector<16xf32>
    %248 = vector.shape_cast %247 : vector<16xf32> to vector<16x1xf32>
    %249 = vector.broadcast %8 : vector<1x1xf32> to vector<16x1xf32>
    %250 = arith.addf %248, %249 : vector<16x1xf32>
    %c4_i32 = arith.constant 4 : i32
    %c0_66 = arith.constant 0 : index
    %251 = arith.index_cast %c4_i32 : i32 to index
    %c0_67 = arith.constant 0 : index
    %c0_68 = arith.constant 0 : index
    %252 = vector.load %arg1[%c0_66, %251, %c0_67, %c0_68] : memref<1x6x16x128xbf16, #tpu.memory_space<vmem>>, vector<1x1x16x128xbf16>
    %253 = vector.shape_cast %252 : vector<1x1x16x128xbf16> to vector<16x128xbf16>
    %cst_69 = arith.constant dense<0.000000e+00> : vector<16x640xf32>
    %254 = tpu.matmul %253, %1, %cst_69 {dimension_numbers = #tpu.dot_dimension_numbers<[1], [0], [0], [1], [0, 0, 1, 1], [], []>} : vector<16x128xbf16>, vector<128x640xbf16>, vector<16x640xf32> -> vector<16x640xf32>
    %255 = vector.broadcast %250 : vector<16x1xf32> to vector<16x640xf32>
    %256 = vector.broadcast %2 : vector<1x640xf32> to vector<16x640xf32>
    %257 = arith.mulf %255, %256 : vector<16x640xf32>
    %258 = arith.addf %254, %257 : vector<16x640xf32>
    %259 = vector.broadcast %3 : vector<1x640xf32> to vector<16x640xf32>
    %260 = arith.addf %258, %259 : vector<16x640xf32>
    %261 = vector.extract_strided_slice %260 {offsets = [0, 0], sizes = [16, 128], strides = [1, 1]} : vector<16x640xf32> to vector<16x128xf32>
    %262 = vector.extract_strided_slice %260 {offsets = [0, 128], sizes = [16, 128], strides = [1, 1]} : vector<16x640xf32> to vector<16x128xf32>
    %263 = vector.extract_strided_slice %260 {offsets = [0, 256], sizes = [16, 384], strides = [1, 1]} : vector<16x640xf32> to vector<16x384xf32>
    %264 = arith.truncf %262 : vector<16x128xf32> to vector<16x128xbf16>
    %cst_70 = arith.constant dense<0.000000e+00> : vector<16x128xf32>
    %265 = tpu.matmul %0, %264, %cst_70 {dimension_numbers = #tpu.dot_dimension_numbers<[1], [0], [0], [1], [0, 0, 1, 1], [], []>} : vector<16x16xbf16>, vector<16x128xbf16>, vector<16x128xf32> -> vector<16x128xf32>
    %266 = arith.addf %261, %265 : vector<16x128xf32>
    %267 = arith.negf %266 : vector<16x128xf32>
    %268 = math.exp %267 : vector<16x128xf32>
    %cst_71 = arith.constant 1.000000e+00 : f32
    %269 = vector.broadcast %cst_71 : f32 to vector<16x128xf32>
    %270 = arith.addf %269, %268 : vector<16x128xf32>
    %271 = arith.divf %269, %270 : vector<16x128xf32>
    %272 = arith.truncf %271 : vector<16x128xf32> to vector<16x128xbf16>
    %cst_72 = arith.constant dense<0.000000e+00> : vector<16x384xf32>
    %273 = tpu.matmul %272, %4, %cst_72 {dimension_numbers = #tpu.dot_dimension_numbers<[1], [0], [0], [1], [0, 0, 1, 1], [], []>} : vector<16x128xbf16>, vector<128x384xbf16>, vector<16x384xf32> -> vector<16x384xf32>
    %274 = arith.addf %263, %273 : vector<16x384xf32>
    %275 = arith.truncf %244 : vector<16x128xf32> to vector<16x128xbf16>
    %cst_73 = arith.constant dense<0.000000e+00> : vector<16x384xf32>
    %276 = tpu.matmul %275, %5, %cst_73 {dimension_numbers = #tpu.dot_dimension_numbers<[1], [0], [0], [1], [0, 0, 1, 1], [], []>} : vector<16x128xbf16>, vector<128x384xbf16>, vector<16x384xf32> -> vector<16x384xf32>
    %277 = vector.broadcast %6 : vector<1x384xf32> to vector<16x384xf32>
    %278 = arith.addf %276, %277 : vector<16x384xf32>
    %279 = vector.extract_strided_slice %274 {offsets = [0, 0], sizes = [16, 128], strides = [1, 1]} : vector<16x384xf32> to vector<16x128xf32>
    %280 = vector.extract_strided_slice %278 {offsets = [0, 0], sizes = [16, 128], strides = [1, 1]} : vector<16x384xf32> to vector<16x128xf32>
    %281 = arith.addf %279, %280 : vector<16x128xf32>
    %282 = arith.negf %281 : vector<16x128xf32>
    %283 = math.exp %282 : vector<16x128xf32>
    %cst_74 = arith.constant 1.000000e+00 : f32
    %284 = vector.broadcast %cst_74 : f32 to vector<16x128xf32>
    %285 = arith.addf %284, %283 : vector<16x128xf32>
    %286 = arith.divf %284, %285 : vector<16x128xf32>
    %287 = vector.extract_strided_slice %274 {offsets = [0, 128], sizes = [16, 128], strides = [1, 1]} : vector<16x384xf32> to vector<16x128xf32>
    %288 = vector.extract_strided_slice %278 {offsets = [0, 128], sizes = [16, 128], strides = [1, 1]} : vector<16x384xf32> to vector<16x128xf32>
    %289 = arith.addf %287, %288 : vector<16x128xf32>
    %290 = arith.negf %289 : vector<16x128xf32>
    %291 = math.exp %290 : vector<16x128xf32>
    %cst_75 = arith.constant 1.000000e+00 : f32
    %292 = vector.broadcast %cst_75 : f32 to vector<16x128xf32>
    %293 = arith.addf %292, %291 : vector<16x128xf32>
    %294 = arith.divf %292, %293 : vector<16x128xf32>
    %295 = vector.extract_strided_slice %274 {offsets = [0, 256], sizes = [16, 128], strides = [1, 1]} : vector<16x384xf32> to vector<16x128xf32>
    %296 = vector.extract_strided_slice %278 {offsets = [0, 256], sizes = [16, 128], strides = [1, 1]} : vector<16x384xf32> to vector<16x128xf32>
    %297 = arith.mulf %286, %296 : vector<16x128xf32>
    %298 = arith.addf %295, %297 : vector<16x128xf32>
    %299 = math.tanh %298 : vector<16x128xf32>
    %cst_76 = arith.constant 1.000000e+00 : f32
    %300 = vector.broadcast %cst_76 : f32 to vector<16x128xf32>
    %301 = arith.subf %300, %294 : vector<16x128xf32>
    %302 = arith.mulf %301, %299 : vector<16x128xf32>
    %303 = arith.mulf %294, %244 : vector<16x128xf32>
    %304 = arith.addf %302, %303 : vector<16x128xf32>
    %305 = vector.broadcast %7 : vector<1x128xf32> to vector<16x128xf32>
    %306 = arith.mulf %304, %305 : vector<16x128xf32>
    %cst_77 = arith.constant dense<0.000000e+00> : vector<16xf32>
    %307 = vector.multi_reduction <add>, %306, %cst_77 [1] : vector<16x128xf32> to vector<16xf32>
    %308 = vector.shape_cast %307 : vector<16xf32> to vector<16x1xf32>
    %309 = vector.broadcast %8 : vector<1x1xf32> to vector<16x1xf32>
    %310 = arith.addf %308, %309 : vector<16x1xf32>
    %c5_i32 = arith.constant 5 : i32
    %c0_78 = arith.constant 0 : index
    %311 = arith.index_cast %c5_i32 : i32 to index
    %c0_79 = arith.constant 0 : index
    %c0_80 = arith.constant 0 : index
    %312 = vector.load %arg1[%c0_78, %311, %c0_79, %c0_80] : memref<1x6x16x128xbf16, #tpu.memory_space<vmem>>, vector<1x1x16x128xbf16>
    %313 = vector.shape_cast %312 : vector<1x1x16x128xbf16> to vector<16x128xbf16>
    %cst_81 = arith.constant dense<0.000000e+00> : vector<16x640xf32>
    %314 = tpu.matmul %313, %1, %cst_81 {dimension_numbers = #tpu.dot_dimension_numbers<[1], [0], [0], [1], [0, 0, 1, 1], [], []>} : vector<16x128xbf16>, vector<128x640xbf16>, vector<16x640xf32> -> vector<16x640xf32>
    %315 = vector.broadcast %310 : vector<16x1xf32> to vector<16x640xf32>
    %316 = vector.broadcast %2 : vector<1x640xf32> to vector<16x640xf32>
    %317 = arith.mulf %315, %316 : vector<16x640xf32>
    %318 = arith.addf %314, %317 : vector<16x640xf32>
    %319 = vector.broadcast %3 : vector<1x640xf32> to vector<16x640xf32>
    %320 = arith.addf %318, %319 : vector<16x640xf32>
    %321 = vector.extract_strided_slice %320 {offsets = [0, 0], sizes = [16, 128], strides = [1, 1]} : vector<16x640xf32> to vector<16x128xf32>
    %322 = vector.extract_strided_slice %320 {offsets = [0, 128], sizes = [16, 128], strides = [1, 1]} : vector<16x640xf32> to vector<16x128xf32>
    %323 = vector.extract_strided_slice %320 {offsets = [0, 256], sizes = [16, 384], strides = [1, 1]} : vector<16x640xf32> to vector<16x384xf32>
    %324 = arith.truncf %322 : vector<16x128xf32> to vector<16x128xbf16>
    %cst_82 = arith.constant dense<0.000000e+00> : vector<16x128xf32>
    %325 = tpu.matmul %0, %324, %cst_82 {dimension_numbers = #tpu.dot_dimension_numbers<[1], [0], [0], [1], [0, 0, 1, 1], [], []>} : vector<16x16xbf16>, vector<16x128xbf16>, vector<16x128xf32> -> vector<16x128xf32>
    %326 = arith.addf %321, %325 : vector<16x128xf32>
    %327 = arith.negf %326 : vector<16x128xf32>
    %328 = math.exp %327 : vector<16x128xf32>
    %cst_83 = arith.constant 1.000000e+00 : f32
    %329 = vector.broadcast %cst_83 : f32 to vector<16x128xf32>
    %330 = arith.addf %329, %328 : vector<16x128xf32>
    %331 = arith.divf %329, %330 : vector<16x128xf32>
    %332 = arith.truncf %331 : vector<16x128xf32> to vector<16x128xbf16>
    %cst_84 = arith.constant dense<0.000000e+00> : vector<16x384xf32>
    %333 = tpu.matmul %332, %4, %cst_84 {dimension_numbers = #tpu.dot_dimension_numbers<[1], [0], [0], [1], [0, 0, 1, 1], [], []>} : vector<16x128xbf16>, vector<128x384xbf16>, vector<16x384xf32> -> vector<16x384xf32>
    %334 = arith.addf %323, %333 : vector<16x384xf32>
    %335 = arith.truncf %304 : vector<16x128xf32> to vector<16x128xbf16>
    %cst_85 = arith.constant dense<0.000000e+00> : vector<16x384xf32>
    %336 = tpu.matmul %335, %5, %cst_85 {dimension_numbers = #tpu.dot_dimension_numbers<[1], [0], [0], [1], [0, 0, 1, 1], [], []>} : vector<16x128xbf16>, vector<128x384xbf16>, vector<16x384xf32> -> vector<16x384xf32>
    %337 = vector.broadcast %6 : vector<1x384xf32> to vector<16x384xf32>
    %338 = arith.addf %336, %337 : vector<16x384xf32>
    %339 = vector.extract_strided_slice %334 {offsets = [0, 0], sizes = [16, 128], strides = [1, 1]} : vector<16x384xf32> to vector<16x128xf32>
    %340 = vector.extract_strided_slice %338 {offsets = [0, 0], sizes = [16, 128], strides = [1, 1]} : vector<16x384xf32> to vector<16x128xf32>
    %341 = arith.addf %339, %340 : vector<16x128xf32>
    %342 = arith.negf %341 : vector<16x128xf32>
    %343 = math.exp %342 : vector<16x128xf32>
    %cst_86 = arith.constant 1.000000e+00 : f32
    %344 = vector.broadcast %cst_86 : f32 to vector<16x128xf32>
    %345 = arith.addf %344, %343 : vector<16x128xf32>
    %346 = arith.divf %344, %345 : vector<16x128xf32>
    %347 = vector.extract_strided_slice %334 {offsets = [0, 128], sizes = [16, 128], strides = [1, 1]} : vector<16x384xf32> to vector<16x128xf32>
    %348 = vector.extract_strided_slice %338 {offsets = [0, 128], sizes = [16, 128], strides = [1, 1]} : vector<16x384xf32> to vector<16x128xf32>
    %349 = arith.addf %347, %348 : vector<16x128xf32>
    %350 = arith.negf %349 : vector<16x128xf32>
    %351 = math.exp %350 : vector<16x128xf32>
    %cst_87 = arith.constant 1.000000e+00 : f32
    %352 = vector.broadcast %cst_87 : f32 to vector<16x128xf32>
    %353 = arith.addf %352, %351 : vector<16x128xf32>
    %354 = arith.divf %352, %353 : vector<16x128xf32>
    %355 = vector.extract_strided_slice %334 {offsets = [0, 256], sizes = [16, 128], strides = [1, 1]} : vector<16x384xf32> to vector<16x128xf32>
    %356 = vector.extract_strided_slice %338 {offsets = [0, 256], sizes = [16, 128], strides = [1, 1]} : vector<16x384xf32> to vector<16x128xf32>
    %357 = arith.mulf %346, %356 : vector<16x128xf32>
    %358 = arith.addf %355, %357 : vector<16x128xf32>
    %359 = math.tanh %358 : vector<16x128xf32>
    %cst_88 = arith.constant 1.000000e+00 : f32
    %360 = vector.broadcast %cst_88 : f32 to vector<16x128xf32>
    %361 = arith.subf %360, %354 : vector<16x128xf32>
    %362 = arith.mulf %361, %359 : vector<16x128xf32>
    %363 = arith.mulf %354, %304 : vector<16x128xf32>
    %364 = arith.addf %362, %363 : vector<16x128xf32>
    %365 = vector.broadcast %7 : vector<1x128xf32> to vector<16x128xf32>
    %366 = arith.mulf %364, %365 : vector<16x128xf32>
    %cst_89 = arith.constant dense<0.000000e+00> : vector<16xf32>
    %367 = vector.multi_reduction <add>, %366, %cst_89 [1] : vector<16x128xf32> to vector<16xf32>
    %368 = vector.shape_cast %367 : vector<16xf32> to vector<16x1xf32>
    %369 = vector.broadcast %8 : vector<1x1xf32> to vector<16x1xf32>
    %370 = arith.addf %368, %369 : vector<16x1xf32>
    %c6_i32 = arith.constant 6 : i32
    %c0_90 = arith.constant 0 : index
    %c0_91 = arith.constant 0 : index
    %371 = vector.load %arg11[%c0_90, %c0_91] : memref<16x128xf32, #tpu.memory_space<vmem>>, vector<16x128xf32>
    tpu.vector_store %arg11[%c0_90, %c0_91], %364 {strides = array<i32>} : memref<16x128xf32, #tpu.memory_space<vmem>>, vector<16x128xf32>,
    %c0_92 = arith.constant 0 : index
    %c0_93 = arith.constant 0 : index
    %372 = vector.load %arg12[%c0_92, %c0_93] : memref<16x1xf32, #tpu.memory_space<vmem>>, vector<16x1xf32>
    tpu.vector_store %arg12[%c0_92, %c0_93], %370 {strides = array<i32>} : memref<16x1xf32, #tpu.memory_space<vmem>>, vector<16x1xf32>,
    return
  }
  func.func @transform_0(%arg0: i32) -> (i32, i32, i32, i32) {
    %c0_i32 = arith.constant 0 : i32
    %c0_i32_0 = arith.constant 0 : i32
    %c0_i32_1 = arith.constant 0 : i32
    %c0_i32_2 = arith.constant 0 : i32
    return %arg0, %c0_i32, %c0_i32_0, %c0_i32_1 : i32, i32, i32, i32
  }
  func.func @transform_1(%arg0: i32) -> (i32, i32) {
    %c0_i32 = arith.constant 0 : i32
    %c0_i32_0 = arith.constant 0 : i32
    %c0_i32_1 = arith.constant 0 : i32
    return %c0_i32, %c0_i32_0 : i32, i32
  }
  func.func @transform_2(%arg0: i32) -> (i32, i32) {
    %c0_i32 = arith.constant 0 : i32
    %c0_i32_0 = arith.constant 0 : i32
    %c0_i32_1 = arith.constant 0 : i32
    return %c0_i32, %c0_i32_0 : i32, i32
  }
  func.func @transform_3(%arg0: i32) -> (i32, i32) {
    %c0_i32 = arith.constant 0 : i32
    %c0_i32_0 = arith.constant 0 : i32
    %c0_i32_1 = arith.constant 0 : i32
    return %c0_i32, %c0_i32_0 : i32, i32
  }
  func.func @transform_4(%arg0: i32) -> (i32, i32) {
    %c0_i32 = arith.constant 0 : i32
    %c0_i32_0 = arith.constant 0 : i32
    %c0_i32_1 = arith.constant 0 : i32
    return %c0_i32, %c0_i32_0 : i32, i32
  }
  func.func @transform_5(%arg0: i32) -> (i32, i32) {
    %c0_i32 = arith.constant 0 : i32
    %c0_i32_0 = arith.constant 0 : i32
    %c0_i32_1 = arith.constant 0 : i32
    return %c0_i32, %c0_i32_0 : i32, i32
  }
  func.func @transform_6(%arg0: i32) -> (i32, i32) {
    %c0_i32 = arith.constant 0 : i32
    %c0_i32_0 = arith.constant 0 : i32
    %c0_i32_1 = arith.constant 0 : i32
    return %c0_i32, %c0_i32_0 : i32, i32
  }
  func.func @transform_7(%arg0: i32) -> (i32, i32) {
    %c0_i32 = arith.constant 0 : i32
    %c0_i32_0 = arith.constant 0 : i32
    %c0_i32_1 = arith.constant 0 : i32
    return %c0_i32, %c0_i32_0 : i32, i32
  }
  func.func @transform_8(%arg0: i32) -> (i32, i32) {
    %c0_i32 = arith.constant 0 : i32
    %c0_i32_0 = arith.constant 0 : i32
    %c0_i32_1 = arith.constant 0 : i32
    return %c0_i32, %c0_i32_0 : i32, i32
  }
  func.func @transform_9(%arg0: i32) -> (i32, i32) {
    %c0_i32 = arith.constant 0 : i32
    %c0_i32_0 = arith.constant 0 : i32
    %c0_i32_1 = arith.constant 0 : i32
    return %c0_i32, %c0_i32_0 : i32, i32
  }
  func.func @transform_10(%arg0: i32) -> (i32, i32) {
    %c0_i32 = arith.constant 0 : i32
    %c0_i32_0 = arith.constant 0 : i32
    return %arg0, %c0_i32 : i32, i32
  }
  func.func @transform_11(%arg0: i32) -> (i32, i32) {
    %c0_i32 = arith.constant 0 : i32
    %c0_i32_0 = arith.constant 0 : i32
    return %arg0, %c0_i32 : i32, i32
  }
}

</mosaic_0001>

<llo_original>
// kernel: tpu_custom_call.1
$region0: #{tpu_custom_call.1}
  #allocation0 [shape = 'u32[]', space=smem, size = 0x4, offset = 0x4, fixed_abs, tag = 'smem constant byte address 0x4 - core index']
  #allocation1 [shape = 'u32[144,128]{1,0:T(1,128)}', space=vmem, size = 0x12000, scoped, tag = 'internal scratch']
  #allocation2 [shape = 'f32[1,1]{1,0:T(1,128)S(1)}', space=vmem, size = 0x200, scoped, tag = 'scoped memory for tpu_custom_call.1']
  %s0 = inlined_call_operand.hbm [shape: bf16[2,6,16,128], index: 0, kind: input, shape index: {}]
  %s1 = inlined_call_operand.hbm [shape: bf16[16,16], index: 1, kind: input, shape index: {}]
  %s2 = inlined_call_operand.hbm [shape: bf16[128,640], index: 2, kind: input, shape index: {}]
  %s3 = inlined_call_operand.vmem [shape: f32[1,640], index: 3, kind: input, shape index: {}]
  %s4 = inlined_call_operand.vmem [shape: f32[1,640], index: 4, kind: input, shape index: {}]
  %s5 = inlined_call_operand.hbm [shape: bf16[128,384], index: 5, kind: input, shape index: {}]
  %s6 = inlined_call_operand.hbm [shape: bf16[128,384], index: 6, kind: input, shape index: {}]
  %s7 = inlined_call_operand.vmem [shape: f32[1,384], index: 7, kind: input, shape index: {}]
  %s8 = inlined_call_operand.vmem [shape: f32[1,128], index: 8, kind: input, shape index: {}]
  %s9 = inlined_call_operand.<no memory space> [shape: f32[1,1], index: 9, kind: input, shape index: {}]
  %s10 = inlined_call_operand.hbm [shape: f32[32,128], index: 10, kind: output, shape index: {0}]
  %s11 = inlined_call_operand.vmem [shape: f32[32,1], index: 11, kind: output, shape index: {1}]
  %12 = xla_tuple %s10, %s11
  %s13 = sld [smem:[#allocation0]]
  $region101: #{tpu_custom_call.1} parent=0
    _
  %s15 = ssub.s32 1, %s13
  %s16 = scalar_select 0, %s15, %s13
  %v17 = vstv %s9
  %18 = vst [vmem:[#allocation2] sm:$0x1] %v17
  $region1: #{tpu_custom_call.1} parent=0
    #allocation3 [shape = 'u8[49152]{0}', space=vmem, size = 0xc000, scoped, tag = 'input window, operand 0']
    #allocation4 [shape = 's32[2]{0}', space=sflag, size = 0x8, scoped, tag = 'scoped memory for tpu_custom_call.1']
    #allocation5 [shape = 's32[2]{0}', space=sflag, size = 0x8, scoped, tag = 'scoped memory for tpu_custom_call.1']
    #allocation6 [shape = 'u8[4096]{0}', space=vmem, size = 0x1000, scoped, tag = 'input window, operand 1, single buffered']
    #allocation7 [shape = 's32[1]{0}', space=sflag, size = 0x4, scoped, tag = 'scoped memory for tpu_custom_call.1']
    #allocation8 [shape = 'u8[163840]{0}', space=vmem, size = 0x28000, scoped, tag = 'input window, operand 2, single buffered']
    #allocation9 [shape = 'u8[98304]{0}', space=vmem, size = 0x18000, scoped, tag = 'input window, operand 5, single buffered']
    #allocation10 [shape = 's32[1]{0}', space=sflag, size = 0x4, scoped, tag = 'scoped memory for tpu_custom_call.1']
    #allocation11 [shape = 'u8[98304]{0}', space=vmem, size = 0x18000, scoped, tag = 'input window, operand 6, single buffered']
    #allocation12 [shape = 'u8[16384]{0}', space=vmem, size = 0x4000, scoped, tag = 'output window, operand 0']
    %19 = vsyncpa [#allocation4], 0
    %s20 = scalar_lea.sflag [#allocation4], 1
    %21 = vsyncpa %s20, 0
    %22 = vsyncpa [#allocation7], 0
    %23 = vsyncpa [#allocation10], 0
    %24 = vsyncpa [#allocation5], 0
    %s25 = scalar_lea.sflag [#allocation5], 1
    %26 = vsyncpa %s25, 0
    loop: start=0, step=1, limit=4
    $region2: #{tpu_custom_call.1} parent=1 // loop_pre_header
      _
    $region3: #{tpu_custom_call.1} parent=1 // loop_header
      %s28 = sphi 0, %s32
      %p29 = scmp.ge.s32.totalorder %s28, 4
      %s38 = sphi 0, %s40
      %s41 = sphi 0, %s38
      %s42 = sphi 0, %s41
      %s58 = sphi 0, %s42
      %s62 = sphi 0, %s62
      %s64 = sphi 0, %s62
      %s65 = sphi 0, %s64
      %s79 = sphi 0, %s65
      %s83 = sphi 0, %s83
      %s85 = sphi 0, %s83
      %s86 = sphi 0, %s85
      %s100 = sphi 0, %s86
      %s104 = sphi 0, %s104
      %s106 = sphi 0, %s104
      %s107 = sphi 0, %s106
      %s121 = sphi 0, %s107
      %s125 = sphi 0, %s125
      %s127 = sphi 0, %s125
      %s128 = sphi 0, %s127
      %s142 = sphi 0, %s128
      %s146 = sphi 0, %s146
      %s148 = sphi 0, %s146
      %s149 = sphi 0, %s148
      %s163 = sphi 0, %s149
      %s167 = sphi 0, %s167
      %s169 = sphi 0, %s167
      %s170 = sphi 0, %s169
      %s184 = sphi 0, %s170
      %s188 = sphi 0, %s188
      %s190 = sphi 0, %s188
      %s191 = sphi 0, %s190
      %s205 = sphi 0, %s191
      %s209 = sphi 0, %s209
      %s211 = sphi 0, %s209
      %s212 = sphi 0, %s211
      %s226 = sphi 0, %s212
      %s230 = sphi 0, %s230
      %s232 = sphi 0, %s230
      %s233 = sphi 0, %s232
      %s247 = sphi 0, %s233
      %s253 = sphi 0, %s255
      %s256 = sphi 0, %s253
      %s257 = sphi 0, %s256
      %s273 = sphi 0, %s257
      %s279 = sphi 0, %s281
      %s282 = sphi 0, %s279
      %s283 = sphi 0, %s282
      %s299 = sphi 0, %s283
    $region4: #{tpu_custom_call.1} parent=1 // loop_header_branch
      %31 = sbr.rel (%p29) target = $region8
    $region5: #{tpu_custom_call.1} parent=1 // loop_body
      %s33 = ssub.s32 %s28, 1
      %s34 = ssub.s32 %s28, 2
      %s35 = sadd.s32 %s28, 1
      %s36 = ssub.s32 %s28, %s35
      %p37 = scmp.eq.s32.totalorder %s36, 0
      %s39 = sadd.s32 %s38, 1
      %s40 = scalar_select %p37, %s38, %s39
      %p43 = pneg %p37
      %p44 = scmp.eq.s32.totalorder %s28, 1
      %p45 = por %p43, %p44
      %p46 = scmp.ne.s32.totalorder %s38, %s41
      %p47 = scmp.eq.s32.totalorder %s28, 0
      %p48 = por %p46, %p47
      %p49 = scmp.ne.s32.totalorder %s38, %s41
      %p50 = scmp.eq.s32.totalorder %s33, 1
      %p51 = por %p49, %p50
      %p52 = scmp.ne.s32.totalorder %s41, %s42
      %p53 = scmp.eq.s32.totalorder %s33, 0
      %p54 = por %p52, %p53
      %p55 = scmp.ne.s32.totalorder %s41, %s42
      %p56 = scmp.eq.s32.totalorder %s34, 1
      %p57 = por %p55, %p56
      %p59 = scmp.ne.s32.totalorder %s42, %s58
      %p60 = scmp.eq.s32.totalorder %s34, 0
      %p61 = por %p59, %p60
      %s63 = sadd.s32 %s62, 1
      %p66 = scmp.eq.s32.totalorder %s28, 1
      %p67 = scmp.ne.s32.totalorder %s62, %s64
      %p68 = scmp.eq.s32.totalorder %s28, 0
      %p69 = por %p67, %p68
      %p70 = scmp.ne.s32.totalorder %s62, %s64
      %p71 = scmp.eq.s32.totalorder %s33, 1
      %p72 = por %p70, %p71
      %p73 = scmp.ne.s32.totalorder %s64, %s65
      %p74 = scmp.eq.s32.totalorder %s33, 0
      %p75 = por %p73, %p74
      %p76 = scmp.ne.s32.totalorder %s64, %s65
      %p77 = scmp.eq.s32.totalorder %s34, 1
      %p78 = por %p76, %p77
      %p80 = scmp.ne.s32.totalorder %s65, %s79
      %p81 = scmp.eq.s32.totalorder %s34, 0
      %p82 = por %p80, %p81
      %s84 = sadd.s32 %s83, 1
      %p87 = scmp.eq.s32.totalorder %s28, 1
      %p88 = scmp.ne.s32.totalorder %s83, %s85
      %p89 = scmp.eq.s32.totalorder %s28, 0
      %p90 = por %p88, %p89
      %p91 = scmp.ne.s32.totalorder %s83, %s85
      %p92 = scmp.eq.s32.totalorder %s33, 1
      %p93 = por %p91, %p92
      %p94 = scmp.ne.s32.totalorder %s85, %s86
      %p95 = scmp.eq.s32.totalorder %s33, 0
      %p96 = por %p94, %p95
      %p97 = scmp.ne.s32.totalorder %s85, %s86
      %p98 = scmp.eq.s32.totalorder %s34, 1
      %p99 = por %p97, %p98
      %p101 = scmp.ne.s32.totalorder %s86, %s100
      %p102 = scmp.eq.s32.totalorder %s34, 0
      %p103 = por %p101, %p102
      %s105 = sadd.s32 %s104, 1
      %p108 = scmp.eq.s32.totalorder %s28, 1
      %p109 = scmp.ne.s32.totalorder %s104, %s106
      %p110 = scmp.eq.s32.totalorder %s28, 0
      %p111 = por %p109, %p110
      %p112 = scmp.ne.s32.totalorder %s104, %s106
      %p113 = scmp.eq.s32.totalorder %s33, 1
      %p114 = por %p112, %p113
      %p115 = scmp.ne.s32.totalorder %s106, %s107
      %p116 = scmp.eq.s32.totalorder %s33, 0
      %p117 = por %p115, %p116
      %p118 = scmp.ne.s32.totalorder %s106, %s107
      %p119 = scmp.eq.s32.totalorder %s34, 1
      %p120 = por %p118, %p119
      %p122 = scmp.ne.s32.totalorder %s107, %s121
      %p123 = scmp.eq.s32.totalorder %s34, 0
      %p124 = por %p122, %p123
      %s126 = sadd.s32 %s125, 1
      %p129 = scmp.eq.s32.totalorder %s28, 1
      %p130 = scmp.ne.s32.totalorder %s125, %s127
      %p131 = scmp.eq.s32.totalorder %s28, 0
      %p132 = por %p130, %p131
      %p133 = scmp.ne.s32.totalorder %s125, %s127
      %p134 = scmp.eq.s32.totalorder %s33, 1
      %p135 = por %p133, %p134
      %p136 = scmp.ne.s32.totalorder %s127, %s128
      %p137 = scmp.eq.s32.totalorder %s33, 0
      %p138 = por %p136, %p137
      %p139 = scmp.ne.s32.totalorder %s127, %s128
      %p140 = scmp.eq.s32.totalorder %s34, 1
      %p141 = por %p139, %p140
      %p143 = scmp.ne.s32.totalorder %s128, %s142
      %p144 = scmp.eq.s32.totalorder %s34, 0
      %p145 = por %p143, %p144
      %s147 = sadd.s32 %s146, 1
      %p150 = scmp.eq.s32.totalorder %s28, 1
      %p151 = scmp.ne.s32.totalorder %s146, %s148
      %p152 = scmp.eq.s32.totalorder %s28, 0
      %p153 = por %p151, %p152
      %p154 = scmp.ne.s32.totalorder %s146, %s148
      %p155 = scmp.eq.s32.totalorder %s33, 1
      %p156 = por %p154, %p155
      %p157 = scmp.ne.s32.totalorder %s148, %s149
      %p158 = scmp.eq.s32.totalorder %s33, 0
      %p159 = por %p157, %p158
      %p160 = scmp.ne.s32.totalorder %s148, %s149
      %p161 = scmp.eq.s32.totalorder %s34, 1
      %p162 = por %p160, %p161
      %p164 = scmp.ne.s32.totalorder %s149, %s163
      %p165 = scmp.eq.s32.totalorder %s34, 0
      %p166 = por %p164, %p165
      %s168 = sadd.s32 %s167, 1
      %p171 = scmp.eq.s32.totalorder %s28, 1
      %p172 = scmp.ne.s32.totalorder %s167, %s169
      %p173 = scmp.eq.s32.totalorder %s28, 0
      %p174 = por %p172, %p173
      %p175 = scmp.ne.s32.totalorder %s167, %s169
      %p176 = scmp.eq.s32.totalorder %s33, 1
      %p177 = por %p175, %p176
      %p178 = scmp.ne.s32.totalorder %s169, %s170
      %p179 = scmp.eq.s32.totalorder %s33, 0
      %p180 = por %p178, %p179
      %p181 = scmp.ne.s32.totalorder %s169, %s170
      %p182 = scmp.eq.s32.totalorder %s34, 1
      %p183 = por %p181, %p182
      %p185 = scmp.ne.s32.totalorder %s170, %s184
      %p186 = scmp.eq.s32.totalorder %s34, 0
      %p187 = por %p185, %p186
      %s189 = sadd.s32 %s188, 1
      %p192 = scmp.eq.s32.totalorder %s28, 1
      %p193 = scmp.ne.s32.totalorder %s188, %s190
      %p194 = scmp.eq.s32.totalorder %s28, 0
      %p195 = por %p193, %p194
      %p196 = scmp.ne.s32.totalorder %s188, %s190
      %p197 = scmp.eq.s32.totalorder %s33, 1
      %p198 = por %p196, %p197
      %p199 = scmp.ne.s32.totalorder %s190, %s191
      %p200 = scmp.eq.s32.totalorder %s33, 0
      %p201 = por %p199, %p200
      %p202 = scmp.ne.s32.totalorder %s190, %s191
      %p203 = scmp.eq.s32.totalorder %s34, 1
      %p204 = por %p202, %p203
      %p206 = scmp.ne.s32.totalorder %s191, %s205
      %p207 = scmp.eq.s32.totalorder %s34, 0
      %p208 = por %p206, %p207
      %s210 = sadd.s32 %s209, 1
      %p213 = scmp.eq.s32.totalorder %s28, 1
      %p214 = scmp.ne.s32.totalorder %s209, %s211
      %p215 = scmp.eq.s32.totalorder %s28, 0
      %p216 = por %p214, %p215
      %p217 = scmp.ne.s32.totalorder %s209, %s211
      %p218 = scmp.eq.s32.totalorder %s33, 1
      %p219 = por %p217, %p218
      %p220 = scmp.ne.s32.totalorder %s211, %s212
      %p221 = scmp.eq.s32.totalorder %s33, 0
      %p222 = por %p220, %p221
      %p223 = scmp.ne.s32.totalorder %s211, %s212
      %p224 = scmp.eq.s32.totalorder %s34, 1
      %p225 = por %p223, %p224
      %p227 = scmp.ne.s32.totalorder %s212, %s226
      %p228 = scmp.eq.s32.totalorder %s34, 0
      %p229 = por %p227, %p228
      %s231 = sadd.s32 %s230, 1
      %p234 = scmp.eq.s32.totalorder %s28, 1
      %p235 = scmp.ne.s32.totalorder %s230, %s232
      %p236 = scmp.eq.s32.totalorder %s28, 0
      %p237 = por %p235, %p236
      %p238 = scmp.ne.s32.totalorder %s230, %s232
      %p239 = scmp.eq.s32.totalorder %s33, 1
      %p240 = por %p238, %p239
      %p241 = scmp.ne.s32.totalorder %s232, %s233
      %p242 = scmp.eq.s32.totalorder %s33, 0
      %p243 = por %p241, %p242
      %p244 = scmp.ne.s32.totalorder %s232, %s233
      %p245 = scmp.eq.s32.totalorder %s34, 1
      %p246 = por %p244, %p245
      %p248 = scmp.ne.s32.totalorder %s233, %s247
      %p249 = scmp.eq.s32.totalorder %s34, 0
      %p250 = por %p248, %p249
      %s251 = ssub.s32 %s28, %s35
      %p252 = scmp.eq.s32.totalorder %s251, 0
      %s254 = sadd.s32 %s253, 1
      %s255 = scalar_select %p252, %s253, %s254
      %p258 = pneg %p252
      %p259 = scmp.eq.s32.totalorder %s28, 1
      %p260 = por %p258, %p259
      %p261 = scmp.ne.s32.totalorder %s253, %s256
      %p262 = scmp.eq.s32.totalorder %s28, 0
      %p263 = por %p261, %p262
      %p264 = scmp.ne.s32.totalorder %s253, %s256
      %p265 = scmp.eq.s32.totalorder %s33, 1
      %p266 = por %p264, %p265
      %p267 = scmp.ne.s32.totalorder %s256, %s257
      %p268 = scmp.eq.s32.totalorder %s33, 0
      %p269 = por %p267, %p268
      %p270 = scmp.ne.s32.totalorder %s256, %s257
      %p271 = scmp.eq.s32.totalorder %s34, 1
      %p272 = por %p270, %p271
      %p274 = scmp.ne.s32.totalorder %s257, %s273
      %p275 = scmp.eq.s32.totalorder %s34, 0
      %p276 = por %p274, %p275
      %s277 = ssub.s32 %s28, %s35
      %p278 = scmp.eq.s32.totalorder %s277, 0
      %s280 = sadd.s32 %s279, 1
      %s281 = scalar_select %p278, %s279, %s280
      %p284 = pneg %p278
      %p285 = scmp.eq.s32.totalorder %s28, 1
      %p286 = por %p284, %p285
      %p287 = scmp.ne.s32.totalorder %s279, %s282
      %p288 = scmp.eq.s32.totalorder %s28, 0
      %p289 = por %p287, %p288
      %p290 = scmp.ne.s32.totalorder %s279, %s282
      %p291 = scmp.eq.s32.totalorder %s33, 1
      %p292 = por %p290, %p291
      %p293 = scmp.ne.s32.totalorder %s282, %s283
      %p294 = scmp.eq.s32.totalorder %s33, 0
      %p295 = por %p293, %p294
      %p296 = scmp.ne.s32.totalorder %s282, %s283
      %p297 = scmp.eq.s32.totalorder %s34, 1
      %p298 = por %p296, %p297
      %p300 = scmp.ne.s32.totalorder %s283, %s299
      %p301 = scmp.eq.s32.totalorder %s34, 0
      %p302 = por %p300, %p301
      %p303 = scmp.le.s32.totalorder 1, %s28
      %p304 = scmp.lt.s32.totalorder %s28, 3
      %p305 = pnand %p303, %p304
      %p306 = pneg %p305
      // Predicated region
      $region9: #{tpu_custom_call.1} parent=5 // pred_check
        _
      $region10: #{tpu_custom_call.1} parent=5 // pred_check_branch
        %308 = sbr.rel (%p305) target = $region12
      $region11: #{tpu_custom_call.1} parent=5 // pred_region
        %s309 = ssub.s32 %s28, 1
        // Predicated region
        $region13: #{tpu_custom_call.1} parent=11 // pred_check
          %p310 = pneg %p75
        $region14: #{tpu_custom_call.1} parent=11 // pred_check_branch
          %312 = sbr.rel (%p310) target = $region16
        $region15: #{tpu_custom_call.1} parent=11 // pred_region
          %s314 = ssub.s32 128, 128
          %315 = vsyncadd [#allocation7], %s314
          %s316 = sshll.u32 [#allocation6], 4
          %s317 = int_to_ptr.vmem [resolvable:$true] %s316
          %322 = dma.hbm_to_vmem [thread:$0]  %s1, 128, %s317, [#allocation7], 64, 64, 4
        $region16: #{tpu_custom_call.1} parent=11 // pred_fallthru
          _
        // Predicated region
        $region17: #{tpu_custom_call.1} parent=11 // pred_check
          %p323 = pneg %p96
        $region18: #{tpu_custom_call.1} parent=11 // pred_check_branch
          %325 = sbr.rel (%p323) target = $region20
        $region19: #{tpu_custom_call.1} parent=11 // pred_region
          %s327 = ssub.s32 5120, 5120
          %328 = vsyncadd [#allocation7], %s327
          %s329 = sshll.u32 [#allocation8], 4
          %s330 = int_to_ptr.vmem [resolvable:$true] %s329
          %335 = dma.hbm_to_vmem [thread:$0]  %s2, 5120, %s330, [#allocation7], 320, 320, 20
        $region20: #{tpu_custom_call.1} parent=11 // pred_fallthru
          _
        // Predicated region
        $region21: #{tpu_custom_call.1} parent=11 // pred_check
          %p336 = pneg %p117
        $region22: #{tpu_custom_call.1} parent=11 // pred_check_branch
          %338 = sbr.rel (%p336) target = $region24
        $region23: #{tpu_custom_call.1} parent=11 // pred_region
          _
        $region24: #{tpu_custom_call.1} parent=11 // pred_fallthru
          _
        // Predicated region
        $region25: #{tpu_custom_call.1} parent=11 // pred_check
          %p339 = pneg %p138
        $region26: #{tpu_custom_call.1} parent=11 // pred_check_branch
          %341 = sbr.rel (%p339) target = $region28
        $region27: #{tpu_custom_call.1} parent=11 // pred_region
          _
        $region28: #{tpu_custom_call.1} parent=11 // pred_fallthru
          _
        // Predicated region
        $region29: #{tpu_custom_call.1} parent=11 // pred_check
          %p342 = pneg %p159
        $region30: #{tpu_custom_call.1} parent=11 // pred_check_branch
          %344 = sbr.rel (%p342) target = $region32
        $region31: #{tpu_custom_call.1} parent=11 // pred_region
          %s346 = ssub.s32 3072, 3072
          %347 = vsyncadd [#allocation10], %s346
          %s348 = sshll.u32 [#allocation9], 4
          %s349 = int_to_ptr.vmem [resolvable:$true] %s348
          %354 = dma.hbm_to_vmem [thread:$0]  %s5, 3072, %s349, [#allocation10], 192, 192, 12
        $region32: #{tpu_custom_call.1} parent=11 // pred_fallthru
          _
        // Predicated region
        $region33: #{tpu_custom_call.1} parent=11 // pred_check
          %p355 = pneg %p180
        $region34: #{tpu_custom_call.1} parent=11 // pred_check_branch
          %357 = sbr.rel (%p355) target = $region36
        $region35: #{tpu_custom_call.1} parent=11 // pred_region
          %s359 = ssub.s32 3072, 3072
          %360 = vsyncadd [#allocation10], %s359
          %s361 = sshll.u32 [#allocation11], 4
          %s362 = int_to_ptr.vmem [resolvable:$true] %s361
          %367 = dma.hbm_to_vmem [thread:$0]  %s6, 3072, %s362, [#allocation10], 192, 192, 12
        $region36: #{tpu_custom_call.1} parent=11 // pred_fallthru
          _
        // Predicated region
        $region37: #{tpu_custom_call.1} parent=11 // pred_check
          %p368 = pneg %p201
        $region38: #{tpu_custom_call.1} parent=11 // pred_check_branch
          %370 = sbr.rel (%p368) target = $region40
        $region39: #{tpu_custom_call.1} parent=11 // pred_region
          _
        $region40: #{tpu_custom_call.1} parent=11 // pred_fallthru
          _
        // Predicated region
        $region41: #{tpu_custom_call.1} parent=11 // pred_check
          %p371 = pneg %p222
        $region42: #{tpu_custom_call.1} parent=11 // pred_check_branch
          %373 = sbr.rel (%p371) target = $region44
        $region43: #{tpu_custom_call.1} parent=11 // pred_region
          _
        $region44: #{tpu_custom_call.1} parent=11 // pred_fallthru
          _
        // Predicated region
        $region45: #{tpu_custom_call.1} parent=11 // pred_check
          %p374 = pneg %p243
        $region46: #{tpu_custom_call.1} parent=11 // pred_check_branch
          %376 = sbr.rel (%p374) target = $region48
        $region47: #{tpu_custom_call.1} parent=11 // pred_region
          _
        $region48: #{tpu_custom_call.1} parent=11 // pred_fallthru
          _
      $region12: #{tpu_custom_call.1} parent=5 // pred_fallthru
        _
      %p377 = scmp.lt.s32.totalorder %s28, 2
      // Predicated region
      $region49: #{tpu_custom_call.1} parent=5 // pred_check
        %p378 = pneg %p377
      $region50: #{tpu_custom_call.1} parent=5 // pred_check_branch
        %380 = sbr.rel (%p378) target = $region52
      $region51: #{tpu_custom_call.1} parent=5 // pred_region
        // Predicated region
        $region53: #{tpu_custom_call.1} parent=51 // pred_check
          %p381 = pneg %p48
        $region54: #{tpu_custom_call.1} parent=51 // pred_check_branch
          %383 = sbr.rel (%p381) target = $region56
        $region55: #{tpu_custom_call.1} parent=51 // pred_region
          %s384 = sand.u32 %s38, 1
          %s385 = scalar_lea.sflag [#allocation4], %s384
          %s386 = sand.u32 %s38, 1
          %s387 = smul.addr %s386, 48
          %s388 = scalar_lea.vmem [#allocation3], %s387
          %s390 = ssub.s32 768, 768
          %391 = vsyncadd %s385, %s390
          %s392 = smul.addr %s28, 12
          %s393 = smul.addr %s392, 64
          %s394 = scalar_lea.hbm %s0, %s393
          %s395 = sshll.u32 %s388, 4
          %s396 = int_to_ptr.vmem [resolvable:$true] %s395
          %401 = dma.hbm_to_vmem [thread:$0]  %s394, 768, %s396, %s385, 64, 64, 4
        $region56: #{tpu_custom_call.1} parent=51 // pred_fallthru
          _
      $region52: #{tpu_custom_call.1} parent=5 // pred_fallthru
        _
      %p402 = scmp.le.s32.totalorder 1, %s28
      %p403 = scmp.lt.s32.totalorder %s28, 3
      %p404 = pnand %p402, %p403
      %p405 = pneg %p404
      // Predicated region
      $region57: #{tpu_custom_call.1} parent=5 // pred_check
        _
      $region58: #{tpu_custom_call.1} parent=5 // pred_check_branch
        %407 = sbr.rel (%p404) target = $region60
      $region59: #{tpu_custom_call.1} parent=5 // pred_region
        %s408 = ssub.s32 %s28, 1
        %s409 = sand.u32 %s41, 1
        %s410 = scalar_lea.sflag [#allocation4], %s409
        %s411 = sand.u32 %s41, 1
        %s412 = smul.addr %s411, 48
        %s413 = scalar_lea.vmem [#allocation3], %s412
        // Predicated region
        $region61: #{tpu_custom_call.1} parent=59 // pred_check
          %p414 = pneg %p54
        $region62: #{tpu_custom_call.1} parent=59 // pred_check_branch
          %416 = sbr.rel (%p414) target = $region64
        $region63: #{tpu_custom_call.1} parent=59 // pred_region
          %417 = dma.done %s410, 768
        $region64: #{tpu_custom_call.1} parent=59 // pred_fallthru
          _
        // Predicated region
        $region65: #{tpu_custom_call.1} parent=59 // pred_check
          %p418 = pneg %p75
        $region66: #{tpu_custom_call.1} parent=59 // pred_check_branch
          %420 = sbr.rel (%p418) target = $region68
        $region67: #{tpu_custom_call.1} parent=59 // pred_region
          %421 = dma.done [#allocation7], 128
        $region68: #{tpu_custom_call.1} parent=59 // pred_fallthru
          _
        // Predicated region
        $region69: #{tpu_custom_call.1} parent=59 // pred_check
          %p422 = pneg %p96
        $region70: #{tpu_custom_call.1} parent=59 // pred_check_branch
          %424 = sbr.rel (%p422) target = $region72
        $region71: #{tpu_custom_call.1} parent=59 // pred_region
          %425 = dma.done [#allocation7], 5120
        $region72: #{tpu_custom_call.1} parent=59 // pred_fallthru
          _
        // Predicated region
        $region73: #{tpu_custom_call.1} parent=59 // pred_check
          %p426 = pneg %p159
        $region74: #{tpu_custom_call.1} parent=59 // pred_check_branch
          %428 = sbr.rel (%p426) target = $region76
        $region75: #{tpu_custom_call.1} parent=59 // pred_region
          %429 = dma.done [#allocation10], 3072
        $region76: #{tpu_custom_call.1} parent=59 // pred_fallthru
          _
        // Predicated region
        $region77: #{tpu_custom_call.1} parent=59 // pred_check
          %p430 = pneg %p180
        $region78: #{tpu_custom_call.1} parent=59 // pred_check_branch
          %432 = sbr.rel (%p430) target = $region80
        $region79: #{tpu_custom_call.1} parent=59 // pred_region
          %433 = dma.done [#allocation10], 3072
        $region80: #{tpu_custom_call.1} parent=59 // pred_fallthru
          _
        %s434 = sand.u32 %s41, 1
        %s435 = scalar_lea.sflag [#allocation4], %s434
        %s436 = sand.u32 %s41, 1
        %s437 = smul.addr %s436, 48
        %s438 = scalar_lea.vmem [#allocation3], %s437
        %p439 = pneg %p54
        %p440 = pneg %p51
        %p441 = pneg %p75
        %p442 = pneg %p72
        %p443 = pneg %p96
        %p444 = pneg %p93
        %p445 = pneg %p117
        %p446 = pneg %p114
        %p447 = pneg %p138
        %p448 = pneg %p135
        %p449 = pneg %p159
        %p450 = pneg %p156
        %p451 = pneg %p180
        %p452 = pneg %p177
        %p453 = pneg %p201
        %p454 = pneg %p198
        %p455 = pneg %p222
        %p456 = pneg %p219
        %p457 = pneg %p243
        %p458 = pneg %p240
        %p459 = pneg %p269
        %p460 = pneg %p266
        %s461 = sand.u32 %s256, 1
        %s462 = scalar_lea.sflag [#allocation5], %s461
        %s463 = sand.u32 %s256, 1
        %s464 = smul.addr %s463, 16
        %s465 = scalar_lea.vmem [#allocation12], %s464
        %p466 = pneg %p295
        %p467 = pneg %p292
        %s468 = smul.u32 2, %s33
        %p469 = scmp.lt.s32.totalorder %s468, 3
        %s470 = scalar_select %p469, %s468, 3
        %s471 = smul.addr %s470, 8
        %s472 = scalar_lea.vmem %s11, %s471
        %s473 = smul.u32 2, %s33
        %s474 = smul.u32 2, %s33
        %p475 = scmp.lt.s32.totalorder %s474, 3
        %s476 = scalar_select %p475, %s474, 3
        %s477 = smul.addr %s476, 8
        %s478 = scalar_lea.vmem %s11, %s477
        %s479 = smul.u32 2, %s33
        %v481 = vld [vmem:[#allocation6] sm:$0xf]
        %v482 = vld [vmem:[#allocation6 + $0x4] sm:$0xf]
        %v483 = vld [vmem:[#allocation8] sm:$0xff]
        %v484 = vld [vmem:[#allocation8 + $0x8] sm:$0xff]
        %v485 = vld [vmem:[#allocation8 + $0x10] sm:$0xf]
        %v486 = vld [vmem:[#allocation8 + $0x14] sm:$0xff]
        %v487 = vld [vmem:[#allocation8 + $0x1c] sm:$0xff]
        %v488 = vld [vmem:[#allocation8 + $0x24] sm:$0xf]
        %v489 = vld [vmem:[#allocation8 + $0x28] sm:$0xff]
        %v490 = vld [vmem:[#allocation8 + $0x30] sm:$0xff]
        %v491 = vld [vmem:[#allocation8 + $0x38] sm:$0xf]
        %v492 = vld [vmem:[#allocation8 + $0x3c] sm:$0xff]
        %v493 = vld [vmem:[#allocation8 + $0x44] sm:$0xff]
        %v494 = vld [vmem:[#allocation8 + $0x4c] sm:$0xf]
        %v495 = vld [vmem:[#allocation8 + $0x50] sm:$0xff]
        %v496 = vld [vmem:[#allocation8 + $0x58] sm:$0xff]
        %v497 = vld [vmem:[#allocation8 + $0x60] sm:$0xf]
        %v498 = vld [vmem:[#allocation8 + $0x64] sm:$0xff]
        %v499 = vld [vmem:[#allocation8 + $0x6c] sm:$0xff]
        %v500 = vld [vmem:[#allocation8 + $0x74] sm:$0xf]
        %v501 = vld [vmem:[#allocation8 + $0x78] sm:$0xff]
        %v502 = vld [vmem:[#allocation8 + $0x80] sm:$0xff]
        %v503 = vld [vmem:[#allocation8 + $0x88] sm:$0xf]
        %v504 = vld [vmem:[#allocation8 + $0x8c] sm:$0xff]
        %v505 = vld [vmem:[#allocation8 + $0x94] sm:$0xff]
        %v506 = vld [vmem:[#allocation8 + $0x9c] sm:$0xf]
        %v507 = vld [vmem:[#allocation8 + $0xa0] sm:$0xff]
        %v508 = vld [vmem:[#allocation8 + $0xa8] sm:$0xff]
        %v509 = vld [vmem:[#allocation8 + $0xb0] sm:$0xf]
        %v510 = vld [vmem:[#allocation8 + $0xb4] sm:$0xff]
        %v511 = vld [vmem:[#allocation8 + $0xbc] sm:$0xff]
        %v512 = vld [vmem:[#allocation8 + $0xc4] sm:$0xf]
        %v513 = vld [vmem:[#allocation8 + $0xc8] sm:$0xff]
        %v514 = vld [vmem:[#allocation8 + $0xd0] sm:$0xff]
        %v515 = vld [vmem:[#allocation8 + $0xd8] sm:$0xf]
        %v516 = vld [vmem:[#allocation8 + $0xdc] sm:$0xff]
        %v517 = vld [vmem:[#allocation8 + $0xe4] sm:$0xff]
        %v518 = vld [vmem:[#allocation8 + $0xec] sm:$0xf]
        %v519 = vld [vmem:[#allocation8 + $0xf0] sm:$0xff]
        %v520 = vld [vmem:[#allocation8 + $0xf8] sm:$0xff]
        %v521 = vld [vmem:[#allocation8 + $0x100] sm:$0xf]
        %v522 = vld [vmem:[#allocation8 + $0x104] sm:$0xff]
        %v523 = vld [vmem:[#allocation8 + $0x10c] sm:$0xff]
        %v524 = vld [vmem:[#allocation8 + $0x114] sm:$0xf]
        %v525 = vld [vmem:[#allocation8 + $0x118] sm:$0xff]
        %v526 = vld [vmem:[#allocation8 + $0x120] sm:$0xff]
        %v527 = vld [vmem:[#allocation8 + $0x128] sm:$0xf]
        %v528 = vld [vmem:[#allocation8 + $0x12c] sm:$0xff]
        %v529 = vld [vmem:[#allocation8 + $0x134] sm:$0xff]
        %v530 = vld [vmem:[#allocation8 + $0x13c] sm:$0xf]
        %v531 = vld [vmem:[%s3] sm:$0x1f]
        %v532 = vld [vmem:[%s4] sm:$0x1f]
        %v533 = vld [vmem:[#allocation9] sm:$0xff]
        %v534 = vld [vmem:[#allocation9 + $0x8] sm:$0xf]
        %v535 = vld [vmem:[#allocation9 + $0xc] sm:$0xff]
        %v536 = vld [vmem:[#allocation9 + $0x14] sm:$0xf]
        %v537 = vld [vmem:[#allocation9 + $0x18] sm:$0xff]
        %v538 = vld [vmem:[#allocation9 + $0x20] sm:$0xf]
        %v539 = vld [vmem:[#allocation9 + $0x24] sm:$0xff]
        %v540 = vld [vmem:[#allocation9 + $0x2c] sm:$0xf]
        %v541 = vld [vmem:[#allocation9 + $0x30] sm:$0xff]
        %v542 = vld [vmem:[#allocation9 + $0x38] sm:$0xf]
        %v543 = vld [vmem:[#allocation9 + $0x3c] sm:$0xff]
        %v544 = vld [vmem:[#allocation9 + $0x44] sm:$0xf]
        %v545 = vld [vmem:[#allocation9 + $0x48] sm:$0xff]
        %v546 = vld [vmem:[#allocation9 + $0x50] sm:$0xf]
        %v547 = vld [vmem:[#allocation9 + $0x54] sm:$0xff]
        %v548 = vld [vmem:[#allocation9 + $0x5c] sm:$0xf]
        %v549 = vld [vmem:[#allocation9 + $0x60] sm:$0xff]
        %v550 = vld [vmem:[#allocation9 + $0x68] sm:$0xf]
        %v551 = vld [vmem:[#allocation9 + $0x6c] sm:$0xff]
        %v552 = vld [vmem:[#allocation9 + $0x74] sm:$0xf]
        %v553 = vld [vmem:[#allocation9 + $0x78] sm:$0xff]
        %v554 = vld [vmem:[#allocation9 + $0x80] sm:$0xf]
        %v555 = vld [vmem:[#allocation9 + $0x84] sm:$0xff]
        %v556 = vld [vmem:[#allocation9 + $0x8c] sm:$0xf]
        %v557 = vld [vmem:[#allocation9 + $0x90] sm:$0xff]
        %v558 = vld [vmem:[#allocation9 + $0x98] sm:$0xf]
        %v559 = vld [vmem:[#allocation9 + $0x9c] sm:$0xff]
        %v560 = vld [vmem:[#allocation9 + $0xa4] sm:$0xf]
        %v561 = vld [vmem:[#allocation9 + $0xa8] sm:$0xff]
        %v562 = vld [vmem:[#allocation9 + $0xb0] sm:$0xf]
        %v563 = vld [vmem:[#allocation9 + $0xb4] sm:$0xff]
        %v564 = vld [vmem:[#allocation9 + $0xbc] sm:$0xf]
        %v565 = vld [vmem:[#allocation11] sm:$0xff]
        %v566 = vld [vmem:[#allocation11 + $0x8] sm:$0xf]
        %v567 = vld [vmem:[#allocation11 + $0xc] sm:$0xff]
        %v568 = vld [vmem:[#allocation11 + $0x14] sm:$0xf]
        %v569 = vld [vmem:[#allocation11 + $0x18] sm:$0xff]
        %v570 = vld [vmem:[#allocation11 + $0x20] sm:$0xf]
        %v571 = vld [vmem:[#allocation11 + $0x24] sm:$0xff]
        %v572 = vld [vmem:[#allocation11 + $0x2c] sm:$0xf]
        %v573 = vld [vmem:[#allocation11 + $0x30] sm:$0xff]
        %v574 = vld [vmem:[#allocation11 + $0x38] sm:$0xf]
        %v575 = vld [vmem:[#allocation11 + $0x3c] sm:$0xff]
        %v576 = vld [vmem:[#allocation11 + $0x44] sm:$0xf]
        %v577 = vld [vmem:[#allocation11 + $0x48] sm:$0xff]
        %v578 = vld [vmem:[#allocation11 + $0x50] sm:$0xf]
        %v579 = vld [vmem:[#allocation11 + $0x54] sm:$0xff]
        %v580 = vld [vmem:[#allocation11 + $0x5c] sm:$0xf]
        %v581 = vld [vmem:[#allocation11 + $0x60] sm:$0xff]
        %v582 = vld [vmem:[#allocation11 + $0x68] sm:$0xf]
        %v583 = vld [vmem:[#allocation11 + $0x6c] sm:$0xff]
        %v584 = vld [vmem:[#allocation11 + $0x74] sm:$0xf]
        %v585 = vld [vmem:[#allocation11 + $0x78] sm:$0xff]
        %v586 = vld [vmem:[#allocation11 + $0x80] sm:$0xf]
        %v587 = vld [vmem:[#allocation11 + $0x84] sm:$0xff]
        %v588 = vld [vmem:[#allocation11 + $0x8c] sm:$0xf]
        %v589 = vld [vmem:[#allocation11 + $0x90] sm:$0xff]
        %v590 = vld [vmem:[#allocation11 + $0x98] sm:$0xf]
        %v591 = vld [vmem:[#allocation11 + $0x9c] sm:$0xff]
        %v592 = vld [vmem:[#allocation11 + $0xa4] sm:$0xf]
        %v593 = vld [vmem:[#allocation11 + $0xa8] sm:$0xff]
        %v594 = vld [vmem:[#allocation11 + $0xb0] sm:$0xf]
        %v595 = vld [vmem:[#allocation11 + $0xb4] sm:$0xff]
        %v596 = vld [vmem:[#allocation11 + $0xbc] sm:$0xf]
        %v597 = vld [vmem:[%s7] sm:$0x7]
        %v598 = vld [vmem:[%s8] sm:$0x1]
        %v599 = vld [vmem:[#allocation2] sm:$0x1]
        %v600 = vld [vmem:[%s413] sm:$0xf]
        %v601 = vld [vmem:[%s413 + $0x4] sm:$0xf]
        %v603 = vlaneseq
        %v604 = vshrl.u32 %v603, 7
        %v605 = vsub.s32 0, %v604
        %v606 = vrot.slane %v531, %v605
        %v607 = vlaneseq
        %v608 = vshrl.u32 %v607, 7
        %v609 = vsub.s32 1, %v608
        %v610 = vrot.slane %v531, %v609
        %v611 = vlaneseq
        %v612 = vshrl.u32 %v611, 7
        %v613 = vsub.s32 2, %v612
        %v614 = vrot.slane %v531, %v613
        %v615 = vlaneseq
        %v616 = vshrl.u32 %v615, 7
        %v617 = vsub.s32 3, %v616
        %v618 = vrot.slane %v531, %v617
        %v619 = vlaneseq
        %v620 = vshrl.u32 %v619, 7
        %v621 = vsub.s32 4, %v620
        %v622 = vrot.slane %v531, %v621
        %v628 = vmul.f32 %v606, 0.0
        %v629 = vmul.f32 %v610, 0.0
        %v630 = vmul.f32 %v614, 0.0
        %v631 = vmul.f32 %v618, 0.0
        %v632 = vmul.f32 %v622, 0.0
        %v635 = vunpack.c.l.b16 %v600
        %v636 = vunpack.c.l.b16 %v601
        %v637 = vpack.c.b16 %v636, %v635
        %v687 = vunpack.c.l.b16 %v483
        %v688 = vunpack.c.h.b16 %v483
        %v689 = vunpack.c.l.b16 %v484
        %v690 = vunpack.c.h.b16 %v484
        %v691 = vunpack.c.l.b16 %v485
        %v692 = vunpack.c.l.b16 %v486
        %v693 = vunpack.c.h.b16 %v486
        %v694 = vunpack.c.l.b16 %v487
        %v695 = vunpack.c.h.b16 %v487
        %v696 = vunpack.c.l.b16 %v488
        %v697 = vunpack.c.l.b16 %v489
        %v698 = vunpack.c.h.b16 %v489
        %v699 = vunpack.c.l.b16 %v490
        %v700 = vunpack.c.h.b16 %v490
        %v701 = vunpack.c.l.b16 %v491
        %v702 = vunpack.c.l.b16 %v492
        %v703 = vunpack.c.h.b16 %v492
        %v704 = vunpack.c.l.b16 %v493
        %v705 = vunpack.c.h.b16 %v493
        %v706 = vunpack.c.l.b16 %v494
        %v707 = vunpack.c.l.b16 %v495
        %v708 = vunpack.c.h.b16 %v495
        %v709 = vunpack.c.l.b16 %v496
        %v710 = vunpack.c.h.b16 %v496
        %v711 = vunpack.c.l.b16 %v497
        %v712 = vunpack.c.l.b16 %v498
        %v713 = vunpack.c.h.b16 %v498
        %v714 = vunpack.c.l.b16 %v499
        %v715 = vunpack.c.h.b16 %v499
        %v716 = vunpack.c.l.b16 %v500
        %v717 = vunpack.c.l.b16 %v501
        %v718 = vunpack.c.h.b16 %v501
        %v719 = vunpack.c.l.b16 %v502
        %v720 = vunpack.c.h.b16 %v502
        %v721 = vunpack.c.l.b16 %v503
        %v722 = vunpack.c.l.b16 %v504
        %v723 = vunpack.c.h.b16 %v504
        %v724 = vunpack.c.l.b16 %v505
        %v725 = vunpack.c.h.b16 %v505
        %v726 = vunpack.c.l.b16 %v506
        %v727 = vunpack.c.l.b16 %v507
        %v728 = vunpack.c.h.b16 %v507
        %v729 = vunpack.c.l.b16 %v508
        %v730 = vunpack.c.h.b16 %v508
        %v731 = vunpack.c.l.b16 %v509
        %v732 = vunpack.c.l.b16 %v510
        %v733 = vunpack.c.h.b16 %v510
        %v734 = vunpack.c.l.b16 %v511
        %v735 = vunpack.c.h.b16 %v511
        %v736 = vunpack.c.l.b16 %v512
        %v737 = vunpack.c.l.b16 %v513
        %v738 = vunpack.c.h.b16 %v513
        %v739 = vunpack.c.l.b16 %v514
        %v740 = vunpack.c.h.b16 %v514
        %v741 = vunpack.c.l.b16 %v515
        %v742 = vunpack.c.l.b16 %v516
        %v743 = vunpack.c.h.b16 %v516
        %v744 = vunpack.c.l.b16 %v517
        %v745 = vunpack.c.h.b16 %v517
        %v746 = vunpack.c.l.b16 %v518
        %v747 = vunpack.c.l.b16 %v519
        %v748 = vunpack.c.h.b16 %v519
        %v749 = vunpack.c.l.b16 %v520
        %v750 = vunpack.c.h.b16 %v520
        %v751 = vunpack.c.l.b16 %v521
        %v752 = vunpack.c.l.b16 %v522
        %v753 = vunpack.c.h.b16 %v522
        %v754 = vunpack.c.l.b16 %v523
        %v755 = vunpack.c.h.b16 %v523
        %v756 = vunpack.c.l.b16 %v524
        %v757 = vunpack.c.l.b16 %v525
        %v758 = vunpack.c.h.b16 %v525
        %v759 = vunpack.c.l.b16 %v526
        %v760 = vunpack.c.h.b16 %v526
        %v761 = vunpack.c.l.b16 %v527
        %v762 = vunpack.c.l.b16 %v528
        %v763 = vunpack.c.h.b16 %v528
        %v764 = vunpack.c.l.b16 %v529
        %v765 = vunpack.c.h.b16 %v529
        %v766 = vunpack.c.l.b16 %v530
        %v767 = vpack.c.b16 %v692, %v687
        %v768 = vpack.c.b16 %v693, %v688
        %v769 = vpack.c.b16 %v694, %v689
        %v770 = vpack.c.b16 %v695, %v690
        %v771 = vpack.c.b16 %v696, %v691
        %v772 = vpack.c.b16 %v702, %v697
        %v773 = vpack.c.b16 %v703, %v698
        %v774 = vpack.c.b16 %v704, %v699
        %v775 = vpack.c.b16 %v705, %v700
        %v776 = vpack.c.b16 %v706, %v701
        %v777 = vpack.c.b16 %v712, %v707
        %v778 = vpack.c.b16 %v713, %v708
        %v779 = vpack.c.b16 %v714, %v709
        %v780 = vpack.c.b16 %v715, %v710
        %v781 = vpack.c.b16 %v716, %v711
        %v782 = vpack.c.b16 %v722, %v717
        %v783 = vpack.c.b16 %v723, %v718
        %v784 = vpack.c.b16 %v724, %v719
        %v785 = vpack.c.b16 %v725, %v720
        %v786 = vpack.c.b16 %v726, %v721
        %v787 = vpack.c.b16 %v732, %v727
        %v788 = vpack.c.b16 %v733, %v728
        %v789 = vpack.c.b16 %v734, %v729
        %v790 = vpack.c.b16 %v735, %v730
        %v791 = vpack.c.b16 %v736, %v731
        %v792 = vpack.c.b16 %v742, %v737
        %v793 = vpack.c.b16 %v743, %v738
        %v794 = vpack.c.b16 %v744, %v739
        %v795 = vpack.c.b16 %v745, %v740
        %v796 = vpack.c.b16 %v746, %v741
        %v797 = vpack.c.b16 %v752, %v747
        %v798 = vpack.c.b16 %v753, %v748
        %v799 = vpack.c.b16 %v754, %v749
        %v800 = vpack.c.b16 %v755, %v750
        %v801 = vpack.c.b16 %v756, %v751
        %v802 = vpack.c.b16 %v762, %v757
        %v803 = vpack.c.b16 %v763, %v758
        %v804 = vpack.c.b16 %v764, %v759
        %v805 = vpack.c.b16 %v765, %v760
        %v806 = vpack.c.b16 %v766, %v761
        %847 = vmatprep.subr.bf16.mxu0 %v768
        %848 = vmatpush1.bf16.msra.mxu0 %v767
        %849 = vmatprep.subr.bf16.mxu0 %v773
        %850 = vmatpush1.bf16.msra.mxu0 %v772
        %851 = vmatprep.subr.bf16.mxu0 %v778
        %852 = vmatpush1.bf16.msra.mxu0 %v777
        %853 = vmatprep.subr.bf16.mxu0 %v783
        %854 = vmatpush1.bf16.msra.mxu0 %v782
        %855 = vmatprep.subr.bf16.mxu0 %v788
        %856 = vmatpush1.bf16.msra.mxu0 %v787
        %857 = vmatprep.subr.bf16.mxu0 %v793
        %858 = vmatpush1.bf16.msra.mxu0 %v792
        %859 = vmatprep.subr.bf16.mxu0 %v798
        %860 = vmatpush1.bf16.msra.mxu0 %v797
        %861 = vmatprep.subr.bf16.mxu0 %v803
        %862 = vmatpush1.bf16.msra.mxu0 %v802
        %863 = vmatprep.subr.bf16.mxu0 0
        %864 = vmatpush1.bf16.msra.mxu0 0
        %865 = vmatprep.subr.bf16.mxu0 0
        %866 = vmatpush1.bf16.msra.mxu0 0
        %867 = vmatprep.subr.bf16.mxu0 0
        %868 = vmatpush1.bf16.msra.mxu0 0
        %869 = vmatprep.subr.bf16.mxu0 0
        %870 = vmatpush1.bf16.msra.mxu0 0
        %871 = vmatprep.subr.bf16.mxu0 0
        %872 = vmatpush1.bf16.msra.mxu0 0
        %873 = vmatprep.subr.bf16.mxu0 0
        %874 = vmatpush1.bf16.msra.mxu0 0
        %875 = vmatprep.subr.bf16.mxu0 0
        %876 = vmatpush1.bf16.msra.mxu0 0
        %877 = vmatprep.subr.bf16.mxu0 0
        %878 = vmatpush1.bf16.msra.mxu0 0
        %879 = vmatprep.mubr.bf16.mxu0 0
        %880 = vmatmul.mubr.bf16.gmra.mrb[0].mxu0 %v637
        %v881 = vpop.f32.mrb[0].mxu0
        %v882 = vadd.f32 %v628, %v881
        %v883 = vpop.f32.mrb[0].mxu0
        %v884 = vadd.f32 %v629, %v883
        %v885 = vpop.f32.mrb[0].mxu0
        %v886 = vadd.f32 %v628, %v885
        %v887 = vpop.f32.mrb[0].mxu0
        %v888 = vadd.f32 %v629, %v887
        %889 = vdwg.mxu0
        %890 = vmatprep.subr.bf16.mxu0 %v770
        %891 = vmatpush1.bf16.msra.mxu0 %v769
        %892 = vmatprep.subr.bf16.mxu0 %v775
        %893 = vmatpush1.bf16.msra.mxu0 %v774
        %894 = vmatprep.subr.bf16.mxu0 %v780
        %895 = vmatpush1.bf16.msra.mxu0 %v779
        %896 = vmatprep.subr.bf16.mxu0 %v785
        %897 = vmatpush1.bf16.msra.mxu0 %v784
        %898 = vmatprep.subr.bf16.mxu0 %v790
        %899 = vmatpush1.bf16.msra.mxu0 %v789
        %900 = vmatprep.subr.bf16.mxu0 %v795
        %901 = vmatpush1.bf16.msra.mxu0 %v794
        %902 = vmatprep.subr.bf16.mxu0 %v800
        %903 = vmatpush1.bf16.msra.mxu0 %v799
        %904 = vmatprep.subr.bf16.mxu0 %v805
        %905 = vmatpush1.bf16.msra.mxu0 %v804
        %906 = vmatprep.subr.bf16.mxu0 0
        %907 = vmatpush1.bf16.msra.mxu0 0
        %908 = vmatprep.subr.bf16.mxu0 0
        %909 = vmatpush1.bf16.msra.mxu0 0
        %910 = vmatprep.subr.bf16.mxu0 0
        %911 = vmatpush1.bf16.msra.mxu0 0
        %912 = vmatprep.subr.bf16.mxu0 0
        %913 = vmatpush1.bf16.msra.mxu0 0
        %914 = vmatprep.subr.bf16.mxu0 0
        %915 = vmatpush1.bf16.msra.mxu0 0
        %916 = vmatprep.subr.bf16.mxu0 0
        %917 = vmatpush1.bf16.msra.mxu0 0
        %918 = vmatprep.subr.bf16.mxu0 0
        %919 = vmatpush1.bf16.msra.mxu0 0
        %920 = vmatprep.subr.bf16.mxu0 0
        %921 = vmatpush1.bf16.msra.mxu0 0
        %922 = vmatprep.mubr.bf16.mxu0 0
        %923 = vmatmul.mubr.bf16.gmra.mrb[0].mxu0 %v637
        %v924 = vpop.f32.mrb[0].mxu0
        %v925 = vadd.f32 %v630, %v924
        %v926 = vpop.f32.mrb[0].mxu0
        %v927 = vadd.f32 %v631, %v926
        %v928 = vpop.f32.mrb[0].mxu0
        %v929 = vadd.f32 %v630, %v928
        %v930 = vpop.f32.mrb[0].mxu0
        %v931 = vadd.f32 %v631, %v930
        %932 = vdwg.mxu0
        %933 = vmatprep.subr.bf16.mxu0 0
        %934 = vmatpush1.bf16.msra.mxu0 %v771
        %935 = vmatprep.subr.bf16.mxu0 0
        %936 = vmatpush1.bf16.msra.mxu0 %v776
        %937 = vmatprep.subr.bf16.mxu0 0
        %938 = vmatpush1.bf16.msra.mxu0 %v781
        %939 = vmatprep.subr.bf16.mxu0 0
        %940 = vmatpush1.bf16.msra.mxu0 %v786
        %941 = vmatprep.subr.bf16.mxu0 0
        %942 = vmatpush1.bf16.msra.mxu0 %v791
        %943 = vmatprep.subr.bf16.mxu0 0
        %944 = vmatpush1.bf16.msra.mxu0 %v796
        %945 = vmatprep.subr.bf16.mxu0 0
        %946 = vmatpush1.bf16.msra.mxu0 %v801
        %947 = vmatprep.subr.bf16.mxu0 0
        %948 = vmatpush1.bf16.msra.mxu0 %v806
        %949 = vmatprep.subr.bf16.mxu0 0
        %950 = vmatpush1.bf16.msra.mxu0 0
        %951 = vmatprep.subr.bf16.mxu0 0
        %952 = vmatpush1.bf16.msra.mxu0 0
        %953 = vmatprep.subr.bf16.mxu0 0
        %954 = vmatpush1.bf16.msra.mxu0 0
        %955 = vmatprep.subr.bf16.mxu0 0
        %956 = vmatpush1.bf16.msra.mxu0 0
        %957 = vmatprep.subr.bf16.mxu0 0
        %958 = vmatpush1.bf16.msra.mxu0 0
        %959 = vmatprep.subr.bf16.mxu0 0
        %960 = vmatpush1.bf16.msra.mxu0 0
        %961 = vmatprep.subr.bf16.mxu0 0
        %962 = vmatpush1.bf16.msra.mxu0 0
        %963 = vmatprep.subr.bf16.mxu0 0
        %964 = vmatpush1.bf16.msra.mxu0 0
        %965 = vmatprep.mubr.bf16.mxu0 0
        %966 = vmatmul.mubr.bf16.gmra.mrb[0].mxu0 %v637
        %v967 = vpop.f32.mrb[0].mxu0
        %v968 = vadd.f32 %v632, %v967
        %v969 = vpop.f32.mrb[0].mxu0
        %v970 = vpop.f32.mrb[0].mxu0
        %v971 = vadd.f32 %v632, %v970
        %v972 = vpop.f32.mrb[0].mxu0
        %973 = vdwg.mxu0
        %v975 = vlaneseq
        %v976 = vshrl.u32 %v975, 7
        %v977 = vsub.s32 0, %v976
        %v978 = vrot.slane %v532, %v977
        %v979 = vlaneseq
        %v980 = vshrl.u32 %v979, 7
        %v981 = vsub.s32 1, %v980
        %v982 = vrot.slane %v532, %v981
        %v983 = vlaneseq
        %v984 = vshrl.u32 %v983, 7
        %v985 = vsub.s32 2, %v984
        %v986 = vrot.slane %v532, %v985
        %v987 = vlaneseq
        %v988 = vshrl.u32 %v987, 7
        %v989 = vsub.s32 3, %v988
        %v990 = vrot.slane %v532, %v989
        %v991 = vlaneseq
        %v992 = vshrl.u32 %v991, 7
        %v993 = vsub.s32 4, %v992
        %v994 = vrot.slane %v532, %v993
        %v1000 = vadd.f32 %v882, %v978
        %v1001 = vadd.f32 %v884, %v982
        %v1002 = vadd.f32 %v925, %v986
        %v1003 = vadd.f32 %v927, %v990
        %v1004 = vadd.f32 %v968, %v994
        %v1005 = vadd.f32 %v886, %v978
        %v1006 = vadd.f32 %v888, %v982
        %v1007 = vadd.f32 %v929, %v986
        %v1008 = vadd.f32 %v931, %v990
        %v1009 = vadd.f32 %v971, %v994
        %v1010 = vpack.c.bf16 %v1006, %v1001
        %v1013 = vunpack.c.l.b16 %v481
        %v1014 = vunpack.c.l.b16 %v482
        %v1015 = vpack.c.b16 %v1014, %v1013
        %vm1016 = vcmask 130048
        %v1018 = vsel %vm1016, %v1015, 0
        %1020 = vmatprep.subr.bf16.mxu0 0
        %1021 = vmatpush1.bf16.msra.mxu0 %v1010
        %1022 = vmatprep.subr.bf16.mxu0 0
        %1023 = vmatpush1.bf16.msra.mxu0 0
        %1024 = vmatprep.subr.bf16.mxu0 0
        %1025 = vmatpush1.bf16.msra.mxu0 0
        %1026 = vmatprep.subr.bf16.mxu0 0
        %1027 = vmatpush1.bf16.msra.mxu0 0
        %1028 = vmatprep.subr.bf16.mxu0 0
        %1029 = vmatpush1.bf16.msra.mxu0 0
        %1030 = vmatprep.subr.bf16.mxu0 0
        %1031 = vmatpush1.bf16.msra.mxu0 0
        %1032 = vmatprep.subr.bf16.mxu0 0
        %1033 = vmatpush1.bf16.msra.mxu0 0
        %1034 = vmatprep.subr.bf16.mxu0 0
        %1035 = vmatpush1.bf16.msra.mxu0 0
        %1036 = vmatprep.subr.bf16.mxu0 0
        %1037 = vmatpush1.bf16.msra.mxu0 0
        %1038 = vmatprep.subr.bf16.mxu0 0
        %1039 = vmatpush1.bf16.msra.mxu0 0
        %1040 = vmatprep.subr.bf16.mxu0 0
        %1041 = vmatpush1.bf16.msra.mxu0 0
        %1042 = vmatprep.subr.bf16.mxu0 0
        %1043 = vmatpush1.bf16.msra.mxu0 0
        %1044 = vmatprep.subr.bf16.mxu0 0
        %1045 = vmatpush1.bf16.msra.mxu0 0
        %1046 = vmatprep.subr.bf16.mxu0 0
        %1047 = vmatpush1.bf16.msra.mxu0 0
        %1048 = vmatprep.subr.bf16.mxu0 0
        %1049 = vmatpush1.bf16.msra.mxu0 0
        %1050 = vmatprep.subr.bf16.mxu0 0
        %1051 = vmatpush1.bf16.msra.mxu0 0
        %1052 = vmatprep.mubr.bf16.mxu0 0
        %1053 = vmatmul.mubr.bf16.gmra.mrb[0].mxu0 %v1018
        %v1054 = vpop.f32.mrb[0].mxu0
        %v1055 = vadd.f32 0.0, %v1054
        %v1056 = vpop.f32.mrb[0].mxu0
        %v1057 = vpop.f32.mrb[0].mxu0
        %v1058 = vadd.f32 0.0, %v1057
        %v1059 = vpop.f32.mrb[0].mxu0
        %1060 = vdwg.mxu0
        %v1061 = vadd.f32 %v1000, %v1055
        %v1062 = vadd.f32 %v1005, %v1058
        %v1063 = vxor.u32 %v1061, 2147483648
        %v1064 = vxor.u32 %v1062, 2147483648
        %v1065 = vmul.f32 %v1063, 1.442695
        %v1066 = vpow.pop %v1065
        %v1067 = vmul.f32 %v1064, 1.442695
        %v1068 = vpow.pop %v1067
        %v1069 = vadd.f32 %v1066, 1.0
        %v1070 = vadd.f32 %v1068, 1.0
        %v1071 = vrcp.pop %v1069
        %v1072 = vmul.f32 1.0, %v1071
        %v1073 = vrcp.pop %v1070
        %v1074 = vmul.f32 1.0, %v1073
        %v1075 = vpack.c.bf16 %v1074, %v1072
        %v1108 = vunpack.c.l.b16 %v533
        %v1109 = vunpack.c.h.b16 %v533
        %v1110 = vunpack.c.l.b16 %v534
        %v1111 = vunpack.c.l.b16 %v535
        %v1112 = vunpack.c.h.b16 %v535
        %v1113 = vunpack.c.l.b16 %v536
        %v1114 = vunpack.c.l.b16 %v537
        %v1115 = vunpack.c.h.b16 %v537
        %v1116 = vunpack.c.l.b16 %v538
        %v1117 = vunpack.c.l.b16 %v539
        %v1118 = vunpack.c.h.b16 %v539
        %v1119 = vunpack.c.l.b16 %v540
        %v1120 = vunpack.c.l.b16 %v541
        %v1121 = vunpack.c.h.b16 %v541
        %v1122 = vunpack.c.l.b16 %v542
        %v1123 = vunpack.c.l.b16 %v543
        %v1124 = vunpack.c.h.b16 %v543
        %v1125 = vunpack.c.l.b16 %v544
        %v1126 = vunpack.c.l.b16 %v545
        %v1127 = vunpack.c.h.b16 %v545
        %v1128 = vunpack.c.l.b16 %v546
        %v1129 = vunpack.c.l.b16 %v547
        %v1130 = vunpack.c.h.b16 %v547
        %v1131 = vunpack.c.l.b16 %v548
        %v1132 = vunpack.c.l.b16 %v549
        %v1133 = vunpack.c.h.b16 %v549
        %v1134 = vunpack.c.l.b16 %v550
        %v1135 = vunpack.c.l.b16 %v551
        %v1136 = vunpack.c.h.b16 %v551
        %v1137 = vunpack.c.l.b16 %v552
        %v1138 = vunpack.c.l.b16 %v553
        %v1139 = vunpack.c.h.b16 %v553
        %v1140 = vunpack.c.l.b16 %v554
        %v1141 = vunpack.c.l.b16 %v555
        %v1142 = vunpack.c.h.b16 %v555
        %v1143 = vunpack.c.l.b16 %v556
        %v1144 = vunpack.c.l.b16 %v557
        %v1145 = vunpack.c.h.b16 %v557
        %v1146 = vunpack.c.l.b16 %v558
        %v1147 = vunpack.c.l.b16 %v559
        %v1148 = vunpack.c.h.b16 %v559
        %v1149 = vunpack.c.l.b16 %v560
        %v1150 = vunpack.c.l.b16 %v561
        %v1151 = vunpack.c.h.b16 %v561
        %v1152 = vunpack.c.l.b16 %v562
        %v1153 = vunpack.c.l.b16 %v563
        %v1154 = vunpack.c.h.b16 %v563
        %v1155 = vunpack.c.l.b16 %v564
        %v1156 = vpack.c.b16 %v1111, %v1108
        %v1157 = vpack.c.b16 %v1112, %v1109
        %v1158 = vpack.c.b16 %v1113, %v1110
        %v1159 = vpack.c.b16 %v1117, %v1114
        %v1160 = vpack.c.b16 %v1118, %v1115
        %v1161 = vpack.c.b16 %v1119, %v1116
        %v1162 = vpack.c.b16 %v1123, %v1120
        %v1163 = vpack.c.b16 %v1124, %v1121
        %v1164 = vpack.c.b16 %v1125, %v1122
        %v1165 = vpack.c.b16 %v1129, %v1126
        %v1166 = vpack.c.b16 %v1130, %v1127
        %v1167 = vpack.c.b16 %v1131, %v1128
        %v1168 = vpack.c.b16 %v1135, %v1132
        %v1169 = vpack.c.b16 %v1136, %v1133
        %v1170 = vpack.c.b16 %v1137, %v1134
        %v1171 = vpack.c.b16 %v1141, %v1138
        %v1172 = vpack.c.b16 %v1142, %v1139
        %v1173 = vpack.c.b16 %v1143, %v1140
        %v1174 = vpack.c.b16 %v1147, %v1144
        %v1175 = vpack.c.b16 %v1148, %v1145
        %v1176 = vpack.c.b16 %v1149, %v1146
        %v1177 = vpack.c.b16 %v1153, %v1150
        %v1178 = vpack.c.b16 %v1154, %v1151
        %v1179 = vpack.c.b16 %v1155, %v1152
        %1204 = vmatprep.subr.bf16.mxu0 %v1157
        %1205 = vmatpush1.bf16.msra.mxu0 %v1156
        %1206 = vmatprep.subr.bf16.mxu0 %v1160
        %1207 = vmatpush1.bf16.msra.mxu0 %v1159
        %1208 = vmatprep.subr.bf16.mxu0 %v1163
        %1209 = vmatpush1.bf16.msra.mxu0 %v1162
        %1210 = vmatprep.subr.bf16.mxu0 %v1166
        %1211 = vmatpush1.bf16.msra.mxu0 %v1165
        %1212 = vmatprep.subr.bf16.mxu0 %v1169
        %1213 = vmatpush1.bf16.msra.mxu0 %v1168
        %1214 = vmatprep.subr.bf16.mxu0 %v1172
        %1215 = vmatpush1.bf16.msra.mxu0 %v1171
        %1216 = vmatprep.subr.bf16.mxu0 %v1175
        %1217 = vmatpush1.bf16.msra.mxu0 %v1174
        %1218 = vmatprep.subr.bf16.mxu0 %v1178
        %1219 = vmatpush1.bf16.msra.mxu0 %v1177
        %1220 = vmatprep.subr.bf16.mxu0 0
        %1221 = vmatpush1.bf16.msra.mxu0 0
        %1222 = vmatprep.subr.bf16.mxu0 0
        %1223 = vmatpush1.bf16.msra.mxu0 0
        %1224 = vmatprep.subr.bf16.mxu0 0
        %1225 = vmatpush1.bf16.msra.mxu0 0
        %1226 = vmatprep.subr.bf16.mxu0 0
        %1227 = vmatpush1.bf16.msra.mxu0 0
        %1228 = vmatprep.subr.bf16.mxu0 0
        %1229 = vmatpush1.bf16.msra.mxu0 0
        %1230 = vmatprep.subr.bf16.mxu0 0
        %1231 = vmatpush1.bf16.msra.mxu0 0
        %1232 = vmatprep.subr.bf16.mxu0 0
        %1233 = vmatpush1.bf16.msra.mxu0 0
        %1234 = vmatprep.subr.bf16.mxu0 0
        %1235 = vmatpush1.bf16.msra.mxu0 0
        %1236 = vmatprep.mubr.bf16.mxu0 0
        %1237 = vmatmul.mubr.bf16.gmra.mrb[0].mxu0 %v1075
        %v1238 = vpop.f32.mrb[0].mxu0
        %v1239 = vadd.f32 0.0, %v1238
        %v1240 = vpop.f32.mrb[0].mxu0
        %v1241 = vadd.f32 0.0, %v1240
        %v1242 = vpop.f32.mrb[0].mxu0
        %v1243 = vadd.f32 0.0, %v1242
        %v1244 = vpop.f32.mrb[0].mxu0
        %v1245 = vadd.f32 0.0, %v1244
        %1246 = vdwg.mxu0
        %1247 = vmatprep.subr.bf16.mxu0 0
        %1248 = vmatpush1.bf16.msra.mxu0 %v1158
        %1249 = vmatprep.subr.bf16.mxu0 0
        %1250 = vmatpush1.bf16.msra.mxu0 %v1161
        %1251 = vmatprep.subr.bf16.mxu0 0
        %1252 = vmatpush1.bf16.msra.mxu0 %v1164
        %1253 = vmatprep.subr.bf16.mxu0 0
        %1254 = vmatpush1.bf16.msra.mxu0 %v1167
        %1255 = vmatprep.subr.bf16.mxu0 0
        %1256 = vmatpush1.bf16.msra.mxu0 %v1170
        %1257 = vmatprep.subr.bf16.mxu0 0
        %1258 = vmatpush1.bf16.msra.mxu0 %v1173
        %1259 = vmatprep.subr.bf16.mxu0 0
        %1260 = vmatpush1.bf16.msra.mxu0 %v1176
        %1261 = vmatprep.subr.bf16.mxu0 0
        %1262 = vmatpush1.bf16.msra.mxu0 %v1179
        %1263 = vmatprep.subr.bf16.mxu0 0
        %1264 = vmatpush1.bf16.msra.mxu0 0
        %1265 = vmatprep.subr.bf16.mxu0 0
        %1266 = vmatpush1.bf16.msra.mxu0 0
        %1267 = vmatprep.subr.bf16.mxu0 0
        %1268 = vmatpush1.bf16.msra.mxu0 0
        %1269 = vmatprep.subr.bf16.mxu0 0
        %1270 = vmatpush1.bf16.msra.mxu0 0
        %1271 = vmatprep.subr.bf16.mxu0 0
        %1272 = vmatpush1.bf16.msra.mxu0 0
        %1273 = vmatprep.subr.bf16.mxu0 0
        %1274 = vmatpush1.bf16.msra.mxu0 0
        %1275 = vmatprep.subr.bf16.mxu0 0
        %1276 = vmatpush1.bf16.msra.mxu0 0
        %1277 = vmatprep.subr.bf16.mxu0 0
        %1278 = vmatpush1.bf16.msra.mxu0 0
        %1279 = vmatprep.mubr.bf16.mxu0 0
        %1280 = vmatmul.mubr.bf16.gmra.mrb[0].mxu0 %v1075
        %v1281 = vpop.f32.mrb[0].mxu0
        %v1282 = vadd.f32 0.0, %v1281
        %v1283 = vpop.f32.mrb[0].mxu0
        %v1284 = vpop.f32.mrb[0].mxu0
        %v1285 = vadd.f32 0.0, %v1284
        %v1286 = vpop.f32.mrb[0].mxu0
        %1287 = vdwg.mxu0
        %v1288 = vadd.f32 %v1002, %v1239
        %v1289 = vadd.f32 %v1003, %v1241
        %v1290 = vadd.f32 %v1004, %v1282
        %v1291 = vadd.f32 %v1007, %v1243
        %v1292 = vadd.f32 %v1008, %v1245
        %v1293 = vadd.f32 %v1009, %v1285
        %v1295 = vlaneseq
        %v1296 = vshrl.u32 %v1295, 7
        %v1297 = vsub.s32 0, %v1296
        %v1298 = vrot.slane %v597, %v1297
        %v1299 = vlaneseq
        %v1300 = vshrl.u32 %v1299, 7
        %v1301 = vsub.s32 1, %v1300
        %v1302 = vrot.slane %v597, %v1301
        %v1303 = vlaneseq
        %v1304 = vshrl.u32 %v1303, 7
        %v1305 = vsub.s32 2, %v1304
        %v1306 = vrot.slane %v597, %v1305
        %v1342 = vunpack.c.l.b16 %v565
        %v1343 = vunpack.c.h.b16 %v565
        %v1344 = vunpack.c.l.b16 %v566
        %v1345 = vunpack.c.l.b16 %v567
        %v1346 = vunpack.c.h.b16 %v567
        %v1347 = vunpack.c.l.b16 %v568
        %v1348 = vunpack.c.l.b16 %v569
        %v1349 = vunpack.c.h.b16 %v569
        %v1350 = vunpack.c.l.b16 %v570
        %v1351 = vunpack.c.l.b16 %v571
        %v1352 = vunpack.c.h.b16 %v571
        %v1353 = vunpack.c.l.b16 %v572
        %v1354 = vunpack.c.l.b16 %v573
        %v1355 = vunpack.c.h.b16 %v573
        %v1356 = vunpack.c.l.b16 %v574
        %v1357 = vunpack.c.l.b16 %v575
        %v1358 = vunpack.c.h.b16 %v575
        %v1359 = vunpack.c.l.b16 %v576
        %v1360 = vunpack.c.l.b16 %v577
        %v1361 = vunpack.c.h.b16 %v577
        %v1362 = vunpack.c.l.b16 %v578
        %v1363 = vunpack.c.l.b16 %v579
        %v1364 = vunpack.c.h.b16 %v579
        %v1365 = vunpack.c.l.b16 %v580
        %v1366 = vunpack.c.l.b16 %v581
        %v1367 = vunpack.c.h.b16 %v581
        %v1368 = vunpack.c.l.b16 %v582
        %v1369 = vunpack.c.l.b16 %v583
        %v1370 = vunpack.c.h.b16 %v583
        %v1371 = vunpack.c.l.b16 %v584
        %v1372 = vunpack.c.l.b16 %v585
        %v1373 = vunpack.c.h.b16 %v585
        %v1374 = vunpack.c.l.b16 %v586
        %v1375 = vunpack.c.l.b16 %v587
        %v1376 = vunpack.c.h.b16 %v587
        %v1377 = vunpack.c.l.b16 %v588
        %v1378 = vunpack.c.l.b16 %v589
        %v1379 = vunpack.c.h.b16 %v589
        %v1380 = vunpack.c.l.b16 %v590
        %v1381 = vunpack.c.l.b16 %v591
        %v1382 = vunpack.c.h.b16 %v591
        %v1383 = vunpack.c.l.b16 %v592
        %v1384 = vunpack.c.l.b16 %v593
        %v1385 = vunpack.c.h.b16 %v593
        %v1386 = vunpack.c.l.b16 %v594
        %v1387 = vunpack.c.l.b16 %v595
        %v1388 = vunpack.c.h.b16 %v595
        %v1389 = vunpack.c.l.b16 %v596
        %v1390 = vpack.c.b16 %v1345, %v1342
        %v1391 = vpack.c.b16 %v1346, %v1343
        %v1392 = vpack.c.b16 %v1347, %v1344
        %v1393 = vpack.c.b16 %v1351, %v1348
        %v1394 = vpack.c.b16 %v1352, %v1349
        %v1395 = vpack.c.b16 %v1353, %v1350
        %v1396 = vpack.c.b16 %v1357, %v1354
        %v1397 = vpack.c.b16 %v1358, %v1355
        %v1398 = vpack.c.b16 %v1359, %v1356
        %v1399 = vpack.c.b16 %v1363, %v1360
        %v1400 = vpack.c.b16 %v1364, %v1361
        %v1401 = vpack.c.b16 %v1365, %v1362
        %v1402 = vpack.c.b16 %v1369, %v1366
        %v1403 = vpack.c.b16 %v1370, %v1367
        %v1404 = vpack.c.b16 %v1371, %v1368
        %v1405 = vpack.c.b16 %v1375, %v1372
        %v1406 = vpack.c.b16 %v1376, %v1373
        %v1407 = vpack.c.b16 %v1377, %v1374
        %v1408 = vpack.c.b16 %v1381, %v1378
        %v1409 = vpack.c.b16 %v1382, %v1379
        %v1410 = vpack.c.b16 %v1383, %v1380
        %v1411 = vpack.c.b16 %v1387, %v1384
        %v1412 = vpack.c.b16 %v1388, %v1385
        %v1413 = vpack.c.b16 %v1389, %v1386
        %1438 = vmatprep.subr.bf16.mxu0 %v1391
        %1439 = vmatpush1.bf16.msra.mxu0 %v1390
        %1440 = vmatprep.subr.bf16.mxu0 %v1394
        %1441 = vmatpush1.bf16.msra.mxu0 %v1393
        %1442 = vmatprep.subr.bf16.mxu0 %v1397
        %1443 = vmatpush1.bf16.msra.mxu0 %v1396
        %1444 = vmatprep.subr.bf16.mxu0 %v1400
        %1445 = vmatpush1.bf16.msra.mxu0 %v1399
        %1446 = vmatprep.subr.bf16.mxu0 %v1403
        %1447 = vmatpush1.bf16.msra.mxu0 %v1402
        %1448 = vmatprep.subr.bf16.mxu0 %v1406
        %1449 = vmatpush1.bf16.msra.mxu0 %v1405
        %1450 = vmatprep.subr.bf16.mxu0 %v1409
        %1451 = vmatpush1.bf16.msra.mxu0 %v1408
        %1452 = vmatprep.subr.bf16.mxu0 %v1412
        %1453 = vmatpush1.bf16.msra.mxu0 %v1411
        %1454 = vmatprep.subr.bf16.mxu0 0
        %1455 = vmatpush1.bf16.msra.mxu0 0
        %1456 = vmatprep.subr.bf16.mxu0 0
        %1457 = vmatpush1.bf16.msra.mxu0 0
        %1458 = vmatprep.subr.bf16.mxu0 0
        %1459 = vmatpush1.bf16.msra.mxu0 0
        %1460 = vmatprep.subr.bf16.mxu0 0
        %1461 = vmatpush1.bf16.msra.mxu0 0
        %1462 = vmatprep.subr.bf16.mxu0 0
        %1463 = vmatpush1.bf16.msra.mxu0 0
        %1464 = vmatprep.subr.bf16.mxu0 0
        %1465 = vmatpush1.bf16.msra.mxu0 0
        %1466 = vmatprep.subr.bf16.mxu0 0
        %1467 = vmatpush1.bf16.msra.mxu0 0
        %1468 = vmatprep.subr.bf16.mxu0 0
        %1469 = vmatpush1.bf16.msra.mxu0 0
        %1470 = vmatprep.mubr.bf16.mxu0 0
        %1471 = vmatmul.mubr.bf16.gmra.mrb[0].mxu0 0
        %v1472 = vpop.f32.mrb[0].mxu0
        %v1473 = vadd.f32 %v1298, %v1472
        %v1474 = vpop.f32.mrb[0].mxu0
        %v1475 = vadd.f32 %v1302, %v1474
        %v1476 = vpop.f32.mrb[0].mxu0
        %v1477 = vadd.f32 %v1298, %v1476
        %v1478 = vpop.f32.mrb[0].mxu0
        %v1479 = vadd.f32 %v1302, %v1478
        %1480 = vdwg.mxu0
        %1481 = vmatprep.subr.bf16.mxu0 0
        %1482 = vmatpush1.bf16.msra.mxu0 %v1392
        %1483 = vmatprep.subr.bf16.mxu0 0
        %1484 = vmatpush1.bf16.msra.mxu0 %v1395
        %1485 = vmatprep.subr.bf16.mxu0 0
        %1486 = vmatpush1.bf16.msra.mxu0 %v1398
        %1487 = vmatprep.subr.bf16.mxu0 0
        %1488 = vmatpush1.bf16.msra.mxu0 %v1401
        %1489 = vmatprep.subr.bf16.mxu0 0
        %1490 = vmatpush1.bf16.msra.mxu0 %v1404
        %1491 = vmatprep.subr.bf16.mxu0 0
        %1492 = vmatpush1.bf16.msra.mxu0 %v1407
        %1493 = vmatprep.subr.bf16.mxu0 0
        %1494 = vmatpush1.bf16.msra.mxu0 %v1410
        %1495 = vmatprep.subr.bf16.mxu0 0
        %1496 = vmatpush1.bf16.msra.mxu0 %v1413
        %1497 = vmatprep.subr.bf16.mxu0 0
        %1498 = vmatpush1.bf16.msra.mxu0 0
        %1499 = vmatprep.subr.bf16.mxu0 0
        %1500 = vmatpush1.bf16.msra.mxu0 0
        %1501 = vmatprep.subr.bf16.mxu0 0
        %1502 = vmatpush1.bf16.msra.mxu0 0
        %1503 = vmatprep.subr.bf16.mxu0 0
        %1504 = vmatpush1.bf16.msra.mxu0 0
        %1505 = vmatprep.subr.bf16.mxu0 0
        %1506 = vmatpush1.bf16.msra.mxu0 0
        %1507 = vmatprep.subr.bf16.mxu0 0
        %1508 = vmatpush1.bf16.msra.mxu0 0
        %1509 = vmatprep.subr.bf16.mxu0 0
        %1510 = vmatpush1.bf16.msra.mxu0 0
        %1511 = vmatprep.subr.bf16.mxu0 0
        %1512 = vmatpush1.bf16.msra.mxu0 0
        %1513 = vmatprep.mubr.bf16.mxu0 0
        %1514 = vmatmul.mubr.bf16.gmra.mrb[0].mxu0 0
        %v1515 = vpop.f32.mrb[0].mxu0
        %v1516 = vadd.f32 %v1306, %v1515
        %v1517 = vpop.f32.mrb[0].mxu0
        %v1518 = vpop.f32.mrb[0].mxu0
        %v1519 = vadd.f32 %v1306, %v1518
        %v1520 = vpop.f32.mrb[0].mxu0
        %1521 = vdwg.mxu0
        %v1522 = vadd.f32 %v1288, %v1473
        %v1523 = vadd.f32 %v1291, %v1477
        %v1524 = vxor.u32 %v1522, 2147483648
        %v1525 = vxor.u32 %v1523, 2147483648
        %v1526 = vmul.f32 %v1524, 1.442695
        %v1527 = vpow.pop %v1526
        %v1528 = vmul.f32 %v1525, 1.442695
        %v1529 = vpow.pop %v1528
        %v1530 = vadd.f32 %v1527, 1.0
        %v1531 = vadd.f32 %v1529, 1.0
        %v1532 = vrcp.pop %v1530
        %v1533 = vmul.f32 1.0, %v1532
        %v1534 = vrcp.pop %v1531
        %v1535 = vmul.f32 1.0, %v1534
        %v1536 = vadd.f32 %v1289, %v1475
        %v1537 = vadd.f32 %v1292, %v1479
        %v1538 = vxor.u32 %v1536, 2147483648
        %v1539 = vxor.u32 %v1537, 2147483648
        %v1540 = vmul.f32 %v1538, 1.442695
        %v1541 = vpow.pop %v1540
        %v1542 = vmul.f32 %v1539, 1.442695
        %v1543 = vpow.pop %v1542
        %v1544 = vadd.f32 %v1541, 1.0
        %v1545 = vadd.f32 %v1543, 1.0
        %v1546 = vrcp.pop %v1544
        %v1547 = vmul.f32 1.0, %v1546
        %v1548 = vrcp.pop %v1545
        %v1549 = vmul.f32 1.0, %v1548
        %v1550 = vmul.f32 %v1533, %v1516
        %v1551 = vmul.f32 %v1535, %v1519
        %v1552 = vadd.f32 %v1290, %v1550
        %v1553 = vadd.f32 %v1293, %v1551
        %v1554 = vtanh.pop %v1552
        %v1555 = vtanh.pop %v1553
        %v1556 = vsub.f32 1.0, %v1547
        %v1557 = vsub.f32 1.0, %v1549
        %v1558 = vmul.f32 %v1556, %v1554
        %v1559 = vmul.f32 %v1557, %v1555
        %v1560 = vmul.f32 %v1547, 0.0
        %v1561 = vmul.f32 %v1549, 0.0
        %v1562 = vadd.f32 %v1558, %v1560
        %v1563 = vadd.f32 %v1559, %v1561
        %v1565 = vlaneseq
        %v1566 = vshrl.u32 %v1565, 7
        %v1567 = vsub.s32 0, %v1566
        %v1568 = vrot.slane %v598, %v1567
        %v1570 = vmul.f32 %v1562, %v1568
        %v1571 = vmul.f32 %v1563, %v1568
        %1572 = vadd.xlane.f32.xlu0 %v1570
        %v1573 = vpop.xlane.xlu0 %1572
        %1574 = vadd.xlane.f32.xlu0 %v1571
        %v1575 = vpop.xlane.xlu0 %1574
        %v1577 = vlaneseq
        %v1578 = vshrl.u32 %v1577, 7
        %v1579 = vsub.s32 0, %v1578
        %v1580 = vrot.slane %v599, %v1579
        %v1582 = vadd.f32 %v1573, %v1580
        %v1583 = vadd.f32 %v1575, %v1580
        %s1584 = scalar_lea.vmem %s413, 8 [#allocation3]
        %v1585 = vld [vmem:[%s1584] sm:$0xf]
        %v1586 = vld [vmem:[%s1584 + $0x4] sm:$0xf]
        %1588 = vset.pattern.permute.xlu0 0
        %1589 = vperm.xlu0 %1588, %v1582
        %v1590 = vpop.permute.xlu0 %1589
        %1593 = vset.pattern.permute.xlu0 0
        %1594 = vperm.xlu0 %1593, %v1583
        %v1595 = vpop.permute.xlu0 %1594
        %v1597 = vmul.f32 %v1590, %v606
        %v1598 = vmul.f32 %v1590, %v610
        %v1599 = vmul.f32 %v1590, %v614
        %v1600 = vmul.f32 %v1590, %v618
        %v1601 = vmul.f32 %v1590, %v622
        %v1602 = vmul.f32 %v1595, %v606
        %v1603 = vmul.f32 %v1595, %v610
        %v1604 = vmul.f32 %v1595, %v614
        %v1605 = vmul.f32 %v1595, %v618
        %v1606 = vmul.f32 %v1595, %v622
        %v1609 = vunpack.c.l.b16 %v1585
        %v1610 = vunpack.c.l.b16 %v1586
        %v1611 = vpack.c.b16 %v1610, %v1609
        %1613 = vmatprep.subr.bf16.mxu0 %v768
        %1614 = vmatpush1.bf16.msra.mxu0 %v767
        %1615 = vmatprep.subr.bf16.mxu0 %v773
        %1616 = vmatpush1.bf16.msra.mxu0 %v772
        %1617 = vmatprep.subr.bf16.mxu0 %v778
        %1618 = vmatpush1.bf16.msra.mxu0 %v777
        %1619 = vmatprep.subr.bf16.mxu0 %v783
        %1620 = vmatpush1.bf16.msra.mxu0 %v782
        %1621 = vmatprep.subr.bf16.mxu0 %v788
        %1622 = vmatpush1.bf16.msra.mxu0 %v787
        %1623 = vmatprep.subr.bf16.mxu0 %v793
        %1624 = vmatpush1.bf16.msra.mxu0 %v792
        %1625 = vmatprep.subr.bf16.mxu0 %v798
        %1626 = vmatpush1.bf16.msra.mxu0 %v797
        %1627 = vmatprep.subr.bf16.mxu0 %v803
        %1628 = vmatpush1.bf16.msra.mxu0 %v802
        %1629 = vmatprep.subr.bf16.mxu0 0
        %1630 = vmatpush1.bf16.msra.mxu0 0
        %1631 = vmatprep.subr.bf16.mxu0 0
        %1632 = vmatpush1.bf16.msra.mxu0 0
        %1633 = vmatprep.subr.bf16.mxu0 0
        %1634 = vmatpush1.bf16.msra.mxu0 0
        %1635 = vmatprep.subr.bf16.mxu0 0
        %1636 = vmatpush1.bf16.msra.mxu0 0
        %1637 = vmatprep.subr.bf16.mxu0 0
        %1638 = vmatpush1.bf16.msra.mxu0 0
        %1639 = vmatprep.subr.bf16.mxu0 0
        %1640 = vmatpush1.bf16.msra.mxu0 0
        %1641 = vmatprep.subr.bf16.mxu0 0
        %1642 = vmatpush1.bf16.msra.mxu0 0
        %1643 = vmatprep.subr.bf16.mxu0 0
        %1644 = vmatpush1.bf16.msra.mxu0 0
        %1645 = vmatprep.mubr.bf16.mxu0 0
        %1646 = vmatmul.mubr.bf16.gmra.mrb[0].mxu0 %v1611
        %v1647 = vpop.f32.mrb[0].mxu0
        %v1648 = vadd.f32 %v1597, %v1647
        %v1649 = vpop.f32.mrb[0].mxu0
        %v1650 = vadd.f32 %v1598, %v1649
        %v1651 = vpop.f32.mrb[0].mxu0
        %v1652 = vadd.f32 %v1602, %v1651
        %v1653 = vpop.f32.mrb[0].mxu0
        %v1654 = vadd.f32 %v1603, %v1653
        %1655 = vdwg.mxu0
        %1656 = vmatprep.subr.bf16.mxu0 %v770
        %1657 = vmatpush1.bf16.msra.mxu0 %v769
        %1658 = vmatprep.subr.bf16.mxu0 %v775
        %1659 = vmatpush1.bf16.msra.mxu0 %v774
        %1660 = vmatprep.subr.bf16.mxu0 %v780
        %1661 = vmatpush1.bf16.msra.mxu0 %v779
        %1662 = vmatprep.subr.bf16.mxu0 %v785
        %1663 = vmatpush1.bf16.msra.mxu0 %v784
        %1664 = vmatprep.subr.bf16.mxu0 %v790
        %1665 = vmatpush1.bf16.msra.mxu0 %v789
        %1666 = vmatprep.subr.bf16.mxu0 %v795
        %1667 = vmatpush1.bf16.msra.mxu0 %v794
        %1668 = vmatprep.subr.bf16.mxu0 %v800
        %1669 = vmatpush1.bf16.msra.mxu0 %v799
        %1670 = vmatprep.subr.bf16.mxu0 %v805
        %1671 = vmatpush1.bf16.msra.mxu0 %v804
        %1672 = vmatprep.subr.bf16.mxu0 0
        %1673 = vmatpush1.bf16.msra.mxu0 0
        %1674 = vmatprep.subr.bf16.mxu0 0
        %1675 = vmatpush1.bf16.msra.mxu0 0
        %1676 = vmatprep.subr.bf16.mxu0 0
        %1677 = vmatpush1.bf16.msra.mxu0 0
        %1678 = vmatprep.subr.bf16.mxu0 0
        %1679 = vmatpush1.bf16.msra.mxu0 0
        %1680 = vmatprep.subr.bf16.mxu0 0
        %1681 = vmatpush1.bf16.msra.mxu0 0
        %1682 = vmatprep.subr.bf16.mxu0 0
        %1683 = vmatpush1.bf16.msra.mxu0 0
        %1684 = vmatprep.subr.bf16.mxu0 0
        %1685 = vmatpush1.bf16.msra.mxu0 0
        %1686 = vmatprep.subr.bf16.mxu0 0
        %1687 = vmatpush1.bf16.msra.mxu0 0
        %1688 = vmatprep.mubr.bf16.mxu0 0
        %1689 = vmatmul.mubr.bf16.gmra.mrb[0].mxu0 %v1611
        %v1690 = vpop.f32.mrb[0].mxu0
        %v1691 = vadd.f32 %v1599, %v1690
        %v1692 = vpop.f32.mrb[0].mxu0
        %v1693 = vadd.f32 %v1600, %v1692
        %v1694 = vpop.f32.mrb[0].mxu0
        %v1695 = vadd.f32 %v1604, %v1694
        %v1696 = vpop.f32.mrb[0].mxu0
        %v1697 = vadd.f32 %v1605, %v1696
        %1698 = vdwg.mxu0
        %1699 = vmatprep.subr.bf16.mxu0 0
        %1700 = vmatpush1.bf16.msra.mxu0 %v771
        %1701 = vmatprep.subr.bf16.mxu0 0
        %1702 = vmatpush1.bf16.msra.mxu0 %v776
        %1703 = vmatprep.subr.bf16.mxu0 0
        %1704 = vmatpush1.bf16.msra.mxu0 %v781
        %1705 = vmatprep.subr.bf16.mxu0 0
        %1706 = vmatpush1.bf16.msra.mxu0 %v786
        %1707 = vmatprep.subr.bf16.mxu0 0
        %1708 = vmatpush1.bf16.msra.mxu0 %v791
        %1709 = vmatprep.subr.bf16.mxu0 0
        %1710 = vmatpush1.bf16.msra.mxu0 %v796
        %1711 = vmatprep.subr.bf16.mxu0 0
        %1712 = vmatpush1.bf16.msra.mxu0 %v801
        %1713 = vmatprep.subr.bf16.mxu0 0
        %1714 = vmatpush1.bf16.msra.mxu0 %v806
        %1715 = vmatprep.subr.bf16.mxu0 0
        %1716 = vmatpush1.bf16.msra.mxu0 0
        %1717 = vmatprep.subr.bf16.mxu0 0
        %1718 = vmatpush1.bf16.msra.mxu0 0
        %1719 = vmatprep.subr.bf16.mxu0 0
        %1720 = vmatpush1.bf16.msra.mxu0 0
        %1721 = vmatprep.subr.bf16.mxu0 0
        %1722 = vmatpush1.bf16.msra.mxu0 0
        %1723 = vmatprep.subr.bf16.mxu0 0
        %1724 = vmatpush1.bf16.msra.mxu0 0
        %1725 = vmatprep.subr.bf16.mxu0 0
        %1726 = vmatpush1.bf16.msra.mxu0 0
        %1727 = vmatprep.subr.bf16.mxu0 0
        %1728 = vmatpush1.bf16.msra.mxu0 0
        %1729 = vmatprep.subr.bf16.mxu0 0
        %1730 = vmatpush1.bf16.msra.mxu0 0
        %1731 = vmatprep.mubr.bf16.mxu0 0
        %1732 = vmatmul.mubr.bf16.gmra.mrb[0].mxu0 %v1611
        %v1733 = vpop.f32.mrb[0].mxu0
        %v1734 = vadd.f32 %v1601, %v1733
        %v1735 = vpop.f32.mrb[0].mxu0
        %v1736 = vpop.f32.mrb[0].mxu0
        %v1737 = vadd.f32 %v1606, %v1736
        %v1738 = vpop.f32.mrb[0].mxu0
        %1739 = vdwg.mxu0
        %v1740 = vadd.f32 %v1648, %v978
        %v1741 = vadd.f32 %v1650, %v982
        %v1742 = vadd.f32 %v1691, %v986
        %v1743 = vadd.f32 %v1693, %v990
        %v1744 = vadd.f32 %v1734, %v994
        %v1745 = vadd.f32 %v1652, %v978
        %v1746 = vadd.f32 %v1654, %v982
        %v1747 = vadd.f32 %v1695, %v986
        %v1748 = vadd.f32 %v1697, %v990
        %v1749 = vadd.f32 %v1737, %v994
        %v1750 = vpack.c.bf16 %v1746, %v1741
        %1751 = vmatprep.subr.bf16.mxu0 0
        %1752 = vmatpush1.bf16.msra.mxu0 %v1750
        %1753 = vmatprep.subr.bf16.mxu0 0
        %1754 = vmatpush1.bf16.msra.mxu0 0
        %1755 = vmatprep.subr.bf16.mxu0 0
        %1756 = vmatpush1.bf16.msra.mxu0 0
        %1757 = vmatprep.subr.bf16.mxu0 0
        %1758 = vmatpush1.bf16.msra.mxu0 0
        %1759 = vmatprep.subr.bf16.mxu0 0
        %1760 = vmatpush1.bf16.msra.mxu0 0
        %1761 = vmatprep.subr.bf16.mxu0 0
        %1762 = vmatpush1.bf16.msra.mxu0 0
        %1763 = vmatprep.subr.bf16.mxu0 0
        %1764 = vmatpush1.bf16.msra.mxu0 0
        %1765 = vmatprep.subr.bf16.mxu0 0
        %1766 = vmatpush1.bf16.msra.mxu0 0
        %1767 = vmatprep.subr.bf16.mxu0 0
        %1768 = vmatpush1.bf16.msra.mxu0 0
        %1769 = vmatprep.subr.bf16.mxu0 0
        %1770 = vmatpush1.bf16.msra.mxu0 0
        %1771 = vmatprep.subr.bf16.mxu0 0
        %1772 = vmatpush1.bf16.msra.mxu0 0
        %1773 = vmatprep.subr.bf16.mxu0 0
        %1774 = vmatpush1.bf16.msra.mxu0 0
        %1775 = vmatprep.subr.bf16.mxu0 0
        %1776 = vmatpush1.bf16.msra.mxu0 0
        %1777 = vmatprep.subr.bf16.mxu0 0
        %1778 = vmatpush1.bf16.msra.mxu0 0
        %1779 = vmatprep.subr.bf16.mxu0 0
        %1780 = vmatpush1.bf16.msra.mxu0 0
        %1781 = vmatprep.subr.bf16.mxu0 0
        %1782 = vmatpush1.bf16.msra.mxu0 0
        %1783 = vmatprep.mubr.bf16.mxu0 0
        %1784 = vmatmul.mubr.bf16.gmra.mrb[0].mxu0 %v1018
        %v1785 = vpop.f32.mrb[0].mxu0
        %v1786 = vadd.f32 0.0, %v1785
        %v1787 = vpop.f32.mrb[0].mxu0
        %v1788 = vpop.f32.mrb[0].mxu0
        %v1789 = vadd.f32 0.0, %v1788
        %v1790 = vpop.f32.mrb[0].mxu0
        %1791 = vdwg.mxu0
        %v1792 = vadd.f32 %v1740, %v1786
        %v1793 = vadd.f32 %v1745, %v1789
        %v1794 = vxor.u32 %v1792, 2147483648
        %v1795 = vxor.u32 %v1793, 2147483648
        %v1796 = vmul.f32 %v1794, 1.442695
        %v1797 = vpow.pop %v1796
        %v1798 = vmul.f32 %v1795, 1.442695
        %v1799 = vpow.pop %v1798
        %v1800 = vadd.f32 %v1797, 1.0
        %v1801 = vadd.f32 %v1799, 1.0
        %v1802 = vrcp.pop %v1800
        %v1803 = vmul.f32 1.0, %v1802
        %v1804 = vrcp.pop %v1801
        %v1805 = vmul.f32 1.0, %v1804
        %v1806 = vpack.c.bf16 %v1805, %v1803
        %1807 = vmatprep.subr.bf16.mxu0 %v1157
        %1808 = vmatpush1.bf16.msra.mxu0 %v1156
        %1809 = vmatprep.subr.bf16.mxu0 %v1160
        %1810 = vmatpush1.bf16.msra.mxu0 %v1159
        %1811 = vmatprep.subr.bf16.mxu0 %v1163
        %1812 = vmatpush1.bf16.msra.mxu0 %v1162
        %1813 = vmatprep.subr.bf16.mxu0 %v1166
        %1814 = vmatpush1.bf16.msra.mxu0 %v1165
        %1815 = vmatprep.subr.bf16.mxu0 %v1169
        %1816 = vmatpush1.bf16.msra.mxu0 %v1168
        %1817 = vmatprep.subr.bf16.mxu0 %v1172
        %1818 = vmatpush1.bf16.msra.mxu0 %v1171
        %1819 = vmatprep.subr.bf16.mxu0 %v1175
        %1820 = vmatpush1.bf16.msra.mxu0 %v1174
        %1821 = vmatprep.subr.bf16.mxu0 %v1178
        %1822 = vmatpush1.bf16.msra.mxu0 %v1177
        %1823 = vmatprep.subr.bf16.mxu0 0
        %1824 = vmatpush1.bf16.msra.mxu0 0
        %1825 = vmatprep.subr.bf16.mxu0 0
        %1826 = vmatpush1.bf16.msra.mxu0 0
        %1827 = vmatprep.subr.bf16.mxu0 0
        %1828 = vmatpush1.bf16.msra.mxu0 0
        %1829 = vmatprep.subr.bf16.mxu0 0
        %1830 = vmatpush1.bf16.msra.mxu0 0
        %1831 = vmatprep.subr.bf16.mxu0 0
        %1832 = vmatpush1.bf16.msra.mxu0 0
        %1833 = vmatprep.subr.bf16.mxu0 0
        %1834 = vmatpush1.bf16.msra.mxu0 0
        %1835 = vmatprep.subr.bf16.mxu0 0
        %1836 = vmatpush1.bf16.msra.mxu0 0
        %1837 = vmatprep.subr.bf16.mxu0 0
        %1838 = vmatpush1.bf16.msra.mxu0 0
        %1839 = vmatprep.mubr.bf16.mxu0 0
        %1840 = vmatmul.mubr.bf16.gmra.mrb[0].mxu0 %v1806
        %v1841 = vpop.f32.mrb[0].mxu0
        %v1842 = vadd.f32 0.0, %v1841
        %v1843 = vpop.f32.mrb[0].mxu0
        %v1844 = vadd.f32 0.0, %v1843
        %v1845 = vpop.f32.mrb[0].mxu0
        %v1846 = vadd.f32 0.0, %v1845
        %v1847 = vpop.f32.mrb[0].mxu0
        %v1848 = vadd.f32 0.0, %v1847
        %1849 = vdwg.mxu0
        %1850 = vmatprep.subr.bf16.mxu0 0
        %1851 = vmatpush1.bf16.msra.mxu0 %v1158
        %1852 = vmatprep.subr.bf16.mxu0 0
        %1853 = vmatpush1.bf16.msra.mxu0 %v1161
        %1854 = vmatprep.subr.bf16.mxu0 0
        %1855 = vmatpush1.bf16.msra.mxu0 %v1164
        %1856 = vmatprep.subr.bf16.mxu0 0
        %1857 = vmatpush1.bf16.msra.mxu0 %v1167
        %1858 = vmatprep.subr.bf16.mxu0 0
        %1859 = vmatpush1.bf16.msra.mxu0 %v1170
        %1860 = vmatprep.subr.bf16.mxu0 0
        %1861 = vmatpush1.bf16.msra.mxu0 %v1173
        %1862 = vmatprep.subr.bf16.mxu0 0
        %1863 = vmatpush1.bf16.msra.mxu0 %v1176
        %1864 = vmatprep.subr.bf16.mxu0 0
        %1865 = vmatpush1.bf16.msra.mxu0 %v1179
        %1866 = vmatprep.subr.bf16.mxu0 0
        %1867 = vmatpush1.bf16.msra.mxu0 0
        %1868 = vmatprep.subr.bf16.mxu0 0
        %1869 = vmatpush1.bf16.msra.mxu0 0
        %1870 = vmatprep.subr.bf16.mxu0 0
        %1871 = vmatpush1.bf16.msra.mxu0 0
        %1872 = vmatprep.subr.bf16.mxu0 0
        %1873 = vmatpush1.bf16.msra.mxu0 0
        %1874 = vmatprep.subr.bf16.mxu0 0
        %1875 = vmatpush1.bf16.msra.mxu0 0
        %1876 = vmatprep.subr.bf16.mxu0 0
        %1877 = vmatpush1.bf16.msra.mxu0 0
        %1878 = vmatprep.subr.bf16.mxu0 0
        %1879 = vmatpush1.bf16.msra.mxu0 0
        %1880 = vmatprep.subr.bf16.mxu0 0
        %1881 = vmatpush1.bf16.msra.mxu0 0
        %1882 = vmatprep.mubr.bf16.mxu0 0
        %1883 = vmatmul.mubr.bf16.gmra.mrb[0].mxu0 %v1806
        %v1884 = vpop.f32.mrb[0].mxu0
        %v1885 = vadd.f32 0.0, %v1884
        %v1886 = vpop.f32.mrb[0].mxu0
        %v1887 = vpop.f32.mrb[0].mxu0
        %v1888 = vadd.f32 0.0, %v1887
        %v1889 = vpop.f32.mrb[0].mxu0
        %1890 = vdwg.mxu0
        %v1891 = vadd.f32 %v1742, %v1842
        %v1892 = vadd.f32 %v1743, %v1844
        %v1893 = vadd.f32 %v1744, %v1885
        %v1894 = vadd.f32 %v1747, %v1846
        %v1895 = vadd.f32 %v1748, %v1848
        %v1896 = vadd.f32 %v1749, %v1888
        %v1897 = vpack.c.bf16 %v1563, %v1562
        %1898 = vmatprep.subr.bf16.mxu0 %v1391
        %1899 = vmatpush1.bf16.msra.mxu0 %v1390
        %1900 = vmatprep.subr.bf16.mxu0 %v1394
        %1901 = vmatpush1.bf16.msra.mxu0 %v1393
        %1902 = vmatprep.subr.bf16.mxu0 %v1397
        %1903 = vmatpush1.bf16.msra.mxu0 %v1396
        %1904 = vmatprep.subr.bf16.mxu0 %v1400
        %1905 = vmatpush1.bf16.msra.mxu0 %v1399
        %1906 = vmatprep.subr.bf16.mxu0 %v1403
        %1907 = vmatpush1.bf16.msra.mxu0 %v1402
        %1908 = vmatprep.subr.bf16.mxu0 %v1406
        %1909 = vmatpush1.bf16.msra.mxu0 %v1405
        %1910 = vmatprep.subr.bf16.mxu0 %v1409
        %1911 = vmatpush1.bf16.msra.mxu0 %v1408
        %1912 = vmatprep.subr.bf16.mxu0 %v1412
        %1913 = vmatpush1.bf16.msra.mxu0 %v1411
        %1914 = vmatprep.subr.bf16.mxu0 0
        %1915 = vmatpush1.bf16.msra.mxu0 0
        %1916 = vmatprep.subr.bf16.mxu0 0
        %1917 = vmatpush1.bf16.msra.mxu0 0
        %1918 = vmatprep.subr.bf16.mxu0 0
        %1919 = vmatpush1.bf16.msra.mxu0 0
        %1920 = vmatprep.subr.bf16.mxu0 0
        %1921 = vmatpush1.bf16.msra.mxu0 0
        %1922 = vmatprep.subr.bf16.mxu0 0
        %1923 = vmatpush1.bf16.msra.mxu0 0
        %1924 = vmatprep.subr.bf16.mxu0 0
        %1925 = vmatpush1.bf16.msra.mxu0 0
        %1926 = vmatprep.subr.bf16.mxu0 0
        %1927 = vmatpush1.bf16.msra.mxu0 0
        %1928 = vmatprep.subr.bf16.mxu0 0
        %1929 = vmatpush1.bf16.msra.mxu0 0
        %1930 = vmatprep.mubr.bf16.mxu0 0
        %1931 = vmatmul.mubr.bf16.gmra.mrb[0].mxu0 %v1897
        %v1932 = vpop.f32.mrb[0].mxu0
        %v1933 = vadd.f32 %v1298, %v1932
        %v1934 = vpop.f32.mrb[0].mxu0
        %v1935 = vadd.f32 %v1302, %v1934
        %v1936 = vpop.f32.mrb[0].mxu0
        %v1937 = vadd.f32 %v1298, %v1936
        %v1938 = vpop.f32.mrb[0].mxu0
        %v1939 = vadd.f32 %v1302, %v1938
        %1940 = vdwg.mxu0
        %1941 = vmatprep.subr.bf16.mxu0 0
        %1942 = vmatpush1.bf16.msra.mxu0 %v1392
        %1943 = vmatprep.subr.bf16.mxu0 0
        %1944 = vmatpush1.bf16.msra.mxu0 %v1395
        %1945 = vmatprep.subr.bf16.mxu0 0
        %1946 = vmatpush1.bf16.msra.mxu0 %v1398
        %1947 = vmatprep.subr.bf16.mxu0 0
        %1948 = vmatpush1.bf16.msra.mxu0 %v1401
        %1949 = vmatprep.subr.bf16.mxu0 0
        %1950 = vmatpush1.bf16.msra.mxu0 %v1404
        %1951 = vmatprep.subr.bf16.mxu0 0
        %1952 = vmatpush1.bf16.msra.mxu0 %v1407
        %1953 = vmatprep.subr.bf16.mxu0 0
        %1954 = vmatpush1.bf16.msra.mxu0 %v1410
        %1955 = vmatprep.subr.bf16.mxu0 0
        %1956 = vmatpush1.bf16.msra.mxu0 %v1413
        %1957 = vmatprep.subr.bf16.mxu0 0
        %1958 = vmatpush1.bf16.msra.mxu0 0
        %1959 = vmatprep.subr.bf16.mxu0 0
        %1960 = vmatpush1.bf16.msra.mxu0 0
        %1961 = vmatprep.subr.bf16.mxu0 0
        %1962 = vmatpush1.bf16.msra.mxu0 0
        %1963 = vmatprep.subr.bf16.mxu0 0
        %1964 = vmatpush1.bf16.msra.mxu0 0
        %1965 = vmatprep.subr.bf16.mxu0 0
        %1966 = vmatpush1.bf16.msra.mxu0 0
        %1967 = vmatprep.subr.bf16.mxu0 0
        %1968 = vmatpush1.bf16.msra.mxu0 0
        %1969 = vmatprep.subr.bf16.mxu0 0
        %1970 = vmatpush1.bf16.msra.mxu0 0
        %1971 = vmatprep.subr.bf16.mxu0 0
        %1972 = vmatpush1.bf16.msra.mxu0 0
        %1973 = vmatprep.mubr.bf16.mxu0 0
        %1974 = vmatmul.mubr.bf16.gmra.mrb[0].mxu0 %v1897
        %v1975 = vpop.f32.mrb[0].mxu0
        %v1976 = vadd.f32 %v1306, %v1975
        %v1977 = vpop.f32.mrb[0].mxu0
        %v1978 = vpop.f32.mrb[0].mxu0
        %v1979 = vadd.f32 %v1306, %v1978
        %v1980 = vpop.f32.mrb[0].mxu0
        %1981 = vdwg.mxu0
        %v1982 = vadd.f32 %v1891, %v1933
        %v1983 = vadd.f32 %v1894, %v1937
        %v1984 = vxor.u32 %v1982, 2147483648
        %v1985 = vxor.u32 %v1983, 2147483648
        %v1986 = vmul.f32 %v1984, 1.442695
        %v1987 = vpow.pop %v1986
        %v1988 = vmul.f32 %v1985, 1.442695
        %v1989 = vpow.pop %v1988
        %v1990 = vadd.f32 %v1987, 1.0
        %v1991 = vadd.f32 %v1989, 1.0
        %v1992 = vrcp.pop %v1990
        %v1993 = vmul.f32 1.0, %v1992
        %v1994 = vrcp.pop %v1991
        %v1995 = vmul.f32 1.0, %v1994
        %v1996 = vadd.f32 %v1892, %v1935
        %v1997 = vadd.f32 %v1895, %v1939
        %v1998 = vxor.u32 %v1996, 2147483648
        %v1999 = vxor.u32 %v1997, 2147483648
        %v2000 = vmul.f32 %v1998, 1.442695
        %v2001 = vpow.pop %v2000
        %v2002 = vmul.f32 %v1999, 1.442695
        %v2003 = vpow.pop %v2002
        %v2004 = vadd.f32 %v2001, 1.0
        %v2005 = vadd.f32 %v2003, 1.0
        %v2006 = vrcp.pop %v2004
        %v2007 = vmul.f32 1.0, %v2006
        %v2008 = vrcp.pop %v2005
        %v2009 = vmul.f32 1.0, %v2008
        %v2010 = vmul.f32 %v1993, %v1976
        %v2011 = vmul.f32 %v1995, %v1979
        %v2012 = vadd.f32 %v1893, %v2010
        %v2013 = vadd.f32 %v1896, %v2011
        %v2014 = vtanh.pop %v2012
        %v2015 = vtanh.pop %v2013
        %v2016 = vsub.f32 1.0, %v2007
        %v2017 = vsub.f32 1.0, %v2009
        %v2018 = vmul.f32 %v2016, %v2014
        %v2019 = vmul.f32 %v2017, %v2015
        %v2020 = vmul.f32 %v2007, %v1562
        %v2021 = vmul.f32 %v2009, %v1563
        %v2022 = vadd.f32 %v2018, %v2020
        %v2023 = vadd.f32 %v2019, %v2021
        %v2024 = vmul.f32 %v2022, %v1568
        %v2025 = vmul.f32 %v2023, %v1568
        %2026 = vadd.xlane.f32.xlu0 %v2024
        %v2027 = vpop.xlane.xlu0 %2026
        %2028 = vadd.xlane.f32.xlu0 %v2025
        %v2029 = vpop.xlane.xlu0 %2028
        %v2030 = vadd.f32 %v2027, %v1580
        %v2031 = vadd.f32 %v2029, %v1580
        %s2032 = scalar_lea.vmem %s413, 16 [#allocation3]
        %v2033 = vld [vmem:[%s2032] sm:$0xf]
        %v2034 = vld [vmem:[%s2032 + $0x4] sm:$0xf]
        %2036 = vset.pattern.permute.xlu0 0
        %2037 = vperm.xlu0 %2036, %v2030
        %v2038 = vpop.permute.xlu0 %2037
        %2041 = vset.pattern.permute.xlu0 0
        %2042 = vperm.xlu0 %2041, %v2031
        %v2043 = vpop.permute.xlu0 %2042
        %v2045 = vmul.f32 %v2038, %v606
        %v2046 = vmul.f32 %v2038, %v610
        %v2047 = vmul.f32 %v2038, %v614
        %v2048 = vmul.f32 %v2038, %v618
        %v2049 = vmul.f32 %v2038, %v622
        %v2050 = vmul.f32 %v2043, %v606
        %v2051 = vmul.f32 %v2043, %v610
        %v2052 = vmul.f32 %v2043, %v614
        %v2053 = vmul.f32 %v2043, %v618
        %v2054 = vmul.f32 %v2043, %v622
        %v2057 = vunpack.c.l.b16 %v2033
        %v2058 = vunpack.c.l.b16 %v2034
        %v2059 = vpack.c.b16 %v2058, %v2057
        %2061 = vmatprep.subr.bf16.mxu0 %v768
        %2062 = vmatpush1.bf16.msra.mxu0 %v767
        %2063 = vmatprep.subr.bf16.mxu0 %v773
        %2064 = vmatpush1.bf16.msra.mxu0 %v772
        %2065 = vmatprep.subr.bf16.mxu0 %v778
        %2066 = vmatpush1.bf16.msra.mxu0 %v777
        %2067 = vmatprep.subr.bf16.mxu0 %v783
        %2068 = vmatpush1.bf16.msra.mxu0 %v782
        %2069 = vmatprep.subr.bf16.mxu0 %v788
        %2070 = vmatpush1.bf16.msra.mxu0 %v787
        %2071 = vmatprep.subr.bf16.mxu0 %v793
        %2072 = vmatpush1.bf16.msra.mxu0 %v792
        %2073 = vmatprep.subr.bf16.mxu0 %v798
        %2074 = vmatpush1.bf16.msra.mxu0 %v797
        %2075 = vmatprep.subr.bf16.mxu0 %v803
        %2076 = vmatpush1.bf16.msra.mxu0 %v802
        %2077 = vmatprep.subr.bf16.mxu0 0
        %2078 = vmatpush1.bf16.msra.mxu0 0
        %2079 = vmatprep.subr.bf16.mxu0 0
        %2080 = vmatpush1.bf16.msra.mxu0 0
        %2081 = vmatprep.subr.bf16.mxu0 0
        %2082 = vmatpush1.bf16.msra.mxu0 0
        %2083 = vmatprep.subr.bf16.mxu0 0
        %2084 = vmatpush1.bf16.msra.mxu0 0
        %2085 = vmatprep.subr.bf16.mxu0 0
        %2086 = vmatpush1.bf16.msra.mxu0 0
        %2087 = vmatprep.subr.bf16.mxu0 0
        %2088 = vmatpush1.bf16.msra.mxu0 0
        %2089 = vmatprep.subr.bf16.mxu0 0
        %2090 = vmatpush1.bf16.msra.mxu0 0
        %2091 = vmatprep.subr.bf16.mxu0 0
        %2092 = vmatpush1.bf16.msra.mxu0 0
        %2093 = vmatprep.mubr.bf16.mxu0 0
        %2094 = vmatmul.mubr.bf16.gmra.mrb[0].mxu0 %v2059
        %v2095 = vpop.f32.mrb[0].mxu0
        %v2096 = vadd.f32 %v2045, %v2095
        %v2097 = vpop.f32.mrb[0].mxu0
        %v2098 = vadd.f32 %v2046, %v2097
        %v2099 = vpop.f32.mrb[0].mxu0
        %v2100 = vadd.f32 %v2050, %v2099
        %v2101 = vpop.f32.mrb[0].mxu0
        %v2102 = vadd.f32 %v2051, %v2101
        %2103 = vdwg.mxu0
        %2104 = vmatprep.subr.bf16.mxu0 %v770
        %2105 = vmatpush1.bf16.msra.mxu0 %v769
        %2106 = vmatprep.subr.bf16.mxu0 %v775
        %2107 = vmatpush1.bf16.msra.mxu0 %v774
        %2108 = vmatprep.subr.bf16.mxu0 %v780
        %2109 = vmatpush1.bf16.msra.mxu0 %v779
        %2110 = vmatprep.subr.bf16.mxu0 %v785
        %2111 = vmatpush1.bf16.msra.mxu0 %v784
        %2112 = vmatprep.subr.bf16.mxu0 %v790
        %2113 = vmatpush1.bf16.msra.mxu0 %v789
        %2114 = vmatprep.subr.bf16.mxu0 %v795
        %2115 = vmatpush1.bf16.msra.mxu0 %v794
        %2116 = vmatprep.subr.bf16.mxu0 %v800
        %2117 = vmatpush1.bf16.msra.mxu0 %v799
        %2118 = vmatprep.subr.bf16.mxu0 %v805
        %2119 = vmatpush1.bf16.msra.mxu0 %v804
        %2120 = vmatprep.subr.bf16.mxu0 0
        %2121 = vmatpush1.bf16.msra.mxu0 0
        %2122 = vmatprep.subr.bf16.mxu0 0
        %2123 = vmatpush1.bf16.msra.mxu0 0
        %2124 = vmatprep.subr.bf16.mxu0 0
        %2125 = vmatpush1.bf16.msra.mxu0 0
        %2126 = vmatprep.subr.bf16.mxu0 0
        %2127 = vmatpush1.bf16.msra.mxu0 0
        %2128 = vmatprep.subr.bf16.mxu0 0
        %2129 = vmatpush1.bf16.msra.mxu0 0
        %2130 = vmatprep.subr.bf16.mxu0 0
        %2131 = vmatpush1.bf16.msra.mxu0 0
        %2132 = vmatprep.subr.bf16.mxu0 0
        %2133 = vmatpush1.bf16.msra.mxu0 0
        %2134 = vmatprep.subr.bf16.mxu0 0
        %2135 = vmatpush1.bf16.msra.mxu0 0
        %2136 = vmatprep.mubr.bf16.mxu0 0
        %2137 = vmatmul.mubr.bf16.gmra.mrb[0].mxu0 %v2059
        %v2138 = vpop.f32.mrb[0].mxu0
        %v2139 = vadd.f32 %v2047, %v2138
        %v2140 = vpop.f32.mrb[0].mxu0
        %v2141 = vadd.f32 %v2048, %v2140
        %v2142 = vpop.f32.mrb[0].mxu0
        %v2143 = vadd.f32 %v2052, %v2142
        %v2144 = vpop.f32.mrb[0].mxu0
        %v2145 = vadd.f32 %v2053, %v2144
        %2146 = vdwg.mxu0
        %2147 = vmatprep.subr.bf16.mxu0 0
        %2148 = vmatpush1.bf16.msra.mxu0 %v771
        %2149 = vmatprep.subr.bf16.mxu0 0
        %2150 = vmatpush1.bf16.msra.mxu0 %v776
        %2151 = vmatprep.subr.bf16.mxu0 0
        %2152 = vmatpush1.bf16.msra.mxu0 %v781
        %2153 = vmatprep.subr.bf16.mxu0 0
        %2154 = vmatpush1.bf16.msra.mxu0 %v786
        %2155 = vmatprep.subr.bf16.mxu0 0
        %2156 = vmatpush1.bf16.msra.mxu0 %v791
        %2157 = vmatprep.subr.bf16.mxu0 0
        %2158 = vmatpush1.bf16.msra.mxu0 %v796
        %2159 = vmatprep.subr.bf16.mxu0 0
        %2160 = vmatpush1.bf16.msra.mxu0 %v801
        %2161 = vmatprep.subr.bf16.mxu0 0
        %2162 = vmatpush1.bf16.msra.mxu0 %v806
        %2163 = vmatprep.subr.bf16.mxu0 0
        %2164 = vmatpush1.bf16.msra.mxu0 0
        %2165 = vmatprep.subr.bf16.mxu0 0
        %2166 = vmatpush1.bf16.msra.mxu0 0
        %2167 = vmatprep.subr.bf16.mxu0 0
        %2168 = vmatpush1.bf16.msra.mxu0 0
        %2169 = vmatprep.subr.bf16.mxu0 0
        %2170 = vmatpush1.bf16.msra.mxu0 0
        %2171 = vmatprep.subr.bf16.mxu0 0
        %2172 = vmatpush1.bf16.msra.mxu0 0
        %2173 = vmatprep.subr.bf16.mxu0 0
        %2174 = vmatpush1.bf16.msra.mxu0 0
        %2175 = vmatprep.subr.bf16.mxu0 0
        %2176 = vmatpush1.bf16.msra.mxu0 0
        %2177 = vmatprep.subr.bf16.mxu0 0
        %2178 = vmatpush1.bf16.msra.mxu0 0
        %2179 = vmatprep.mubr.bf16.mxu0 0
        %2180 = vmatmul.mubr.bf16.gmra.mrb[0].mxu0 %v2059
        %v2181 = vpop.f32.mrb[0].mxu0
        %v2182 = vadd.f32 %v2049, %v2181
        %v2183 = vpop.f32.mrb[0].mxu0
        %v2184 = vpop.f32.mrb[0].mxu0
        %v2185 = vadd.f32 %v2054, %v2184
        %v2186 = vpop.f32.mrb[0].mxu0
        %2187 = vdwg.mxu0
        %v2188 = vadd.f32 %v2096, %v978
        %v2189 = vadd.f32 %v2098, %v982
        %v2190 = vadd.f32 %v2139, %v986
        %v2191 = vadd.f32 %v2141, %v990
        %v2192 = vadd.f32 %v2182, %v994
        %v2193 = vadd.f32 %v2100, %v978
        %v2194 = vadd.f32 %v2102, %v982
        %v2195 = vadd.f32 %v2143, %v986
        %v2196 = vadd.f32 %v2145, %v990
        %v2197 = vadd.f32 %v2185, %v994
        %v2198 = vpack.c.bf16 %v2194, %v2189
        %2199 = vmatprep.subr.bf16.mxu0 0
        %2200 = vmatpush1.bf16.msra.mxu0 %v2198
        %2201 = vmatprep.subr.bf16.mxu0 0
        %2202 = vmatpush1.bf16.msra.mxu0 0
        %2203 = vmatprep.subr.bf16.mxu0 0
        %2204 = vmatpush1.bf16.msra.mxu0 0
        %2205 = vmatprep.subr.bf16.mxu0 0
        %2206 = vmatpush1.bf16.msra.mxu0 0
        %2207 = vmatprep.subr.bf16.mxu0 0
        %2208 = vmatpush1.bf16.msra.mxu0 0
        %2209 = vmatprep.subr.bf16.mxu0 0
        %2210 = vmatpush1.bf16.msra.mxu0 0
        %2211 = vmatprep.subr.bf16.mxu0 0
        %2212 = vmatpush1.bf16.msra.mxu0 0
        %2213 = vmatprep.subr.bf16.mxu0 0
        %2214 = vmatpush1.bf16.msra.mxu0 0
        %2215 = vmatprep.subr.bf16.mxu0 0
        %2216 = vmatpush1.bf16.msra.mxu0 0
        %2217 = vmatprep.subr.bf16.mxu0 0
        %2218 = vmatpush1.bf16.msra.mxu0 0
        %2219 = vmatprep.subr.bf16.mxu0 0
        %2220 = vmatpush1.bf16.msra.mxu0 0
        %2221 = vmatprep.subr.bf16.mxu0 0
        %2222 = vmatpush1.bf16.msra.mxu0 0
        %2223 = vmatprep.subr.bf16.mxu0 0
        %2224 = vmatpush1.bf16.msra.mxu0 0
        %2225 = vmatprep.subr.bf16.mxu0 0
        %2226 = vmatpush1.bf16.msra.mxu0 0
        %2227 = vmatprep.subr.bf16.mxu0 0
        %2228 = vmatpush1.bf16.msra.mxu0 0
        %2229 = vmatprep.subr.bf16.mxu0 0
        %2230 = vmatpush1.bf16.msra.mxu0 0
        %2231 = vmatprep.mubr.bf16.mxu0 0
        %2232 = vmatmul.mubr.bf16.gmra.mrb[0].mxu0 %v1018
        %v2233 = vpop.f32.mrb[0].mxu0
        %v2234 = vadd.f32 0.0, %v2233
        %v2235 = vpop.f32.mrb[0].mxu0
        %v2236 = vpop.f32.mrb[0].mxu0
        %v2237 = vadd.f32 0.0, %v2236
        %v2238 = vpop.f32.mrb[0].mxu0
        %2239 = vdwg.mxu0
        %v2240 = vadd.f32 %v2188, %v2234
        %v2241 = vadd.f32 %v2193, %v2237
        %v2242 = vxor.u32 %v2240, 2147483648
        %v2243 = vxor.u32 %v2241, 2147483648
        %v2244 = vmul.f32 %v2242, 1.442695
        %v2245 = vpow.pop %v2244
        %v2246 = vmul.f32 %v2243, 1.442695
        %v2247 = vpow.pop %v2246
        %v2248 = vadd.f32 %v2245, 1.0
        %v2249 = vadd.f32 %v2247, 1.0
        %v2250 = vrcp.pop %v2248
        %v2251 = vmul.f32 1.0, %v2250
        %v2252 = vrcp.pop %v2249
        %v2253 = vmul.f32 1.0, %v2252
        %v2254 = vpack.c.bf16 %v2253, %v2251
        %2255 = vmatprep.subr.bf16.mxu0 %v1157
        %2256 = vmatpush1.bf16.msra.mxu0 %v1156
        %2257 = vmatprep.subr.bf16.mxu0 %v1160
        %2258 = vmatpush1.bf16.msra.mxu0 %v1159
        %2259 = vmatprep.subr.bf16.mxu0 %v1163
        %2260 = vmatpush1.bf16.msra.mxu0 %v1162
        %2261 = vmatprep.subr.bf16.mxu0 %v1166
        %2262 = vmatpush1.bf16.msra.mxu0 %v1165
        %2263 = vmatprep.subr.bf16.mxu0 %v1169
        %2264 = vmatpush1.bf16.msra.mxu0 %v1168
        %2265 = vmatprep.subr.bf16.mxu0 %v1172
        %2266 = vmatpush1.bf16.msra.mxu0 %v1171
        %2267 = vmatprep.subr.bf16.mxu0 %v1175
        %2268 = vmatpush1.bf16.msra.mxu0 %v1174
        %2269 = vmatprep.subr.bf16.mxu0 %v1178
        %2270 = vmatpush1.bf16.msra.mxu0 %v1177
        %2271 = vmatprep.subr.bf16.mxu0 0
        %2272 = vmatpush1.bf16.msra.mxu0 0
        %2273 = vmatprep.subr.bf16.mxu0 0
        %2274 = vmatpush1.bf16.msra.mxu0 0
        %2275 = vmatprep.subr.bf16.mxu0 0
        %2276 = vmatpush1.bf16.msra.mxu0 0
        %2277 = vmatprep.subr.bf16.mxu0 0
        %2278 = vmatpush1.bf16.msra.mxu0 0
        %2279 = vmatprep.subr.bf16.mxu0 0
        %2280 = vmatpush1.bf16.msra.mxu0 0
        %2281 = vmatprep.subr.bf16.mxu0 0
        %2282 = vmatpush1.bf16.msra.mxu0 0
        %2283 = vmatprep.subr.bf16.mxu0 0
        %2284 = vmatpush1.bf16.msra.mxu0 0
        %2285 = vmatprep.subr.bf16.mxu0 0
        %2286 = vmatpush1.bf16.msra.mxu0 0
        %2287 = vmatprep.mubr.bf16.mxu0 0
        %2288 = vmatmul.mubr.bf16.gmra.mrb[0].mxu0 %v2254
        %v2289 = vpop.f32.mrb[0].mxu0
        %v2290 = vadd.f32 0.0, %v2289
        %v2291 = vpop.f32.mrb[0].mxu0
        %v2292 = vadd.f32 0.0, %v2291
        %v2293 = vpop.f32.mrb[0].mxu0
        %v2294 = vadd.f32 0.0, %v2293
        %v2295 = vpop.f32.mrb[0].mxu0
        %v2296 = vadd.f32 0.0, %v2295
        %2297 = vdwg.mxu0
        %2298 = vmatprep.subr.bf16.mxu0 0
        %2299 = vmatpush1.bf16.msra.mxu0 %v1158
        %2300 = vmatprep.subr.bf16.mxu0 0
        %2301 = vmatpush1.bf16.msra.mxu0 %v1161
        %2302 = vmatprep.subr.bf16.mxu0 0
        %2303 = vmatpush1.bf16.msra.mxu0 %v1164
        %2304 = vmatprep.subr.bf16.mxu0 0
        %2305 = vmatpush1.bf16.msra.mxu0 %v1167
        %2306 = vmatprep.subr.bf16.mxu0 0
        %2307 = vmatpush1.bf16.msra.mxu0 %v1170
        %2308 = vmatprep.subr.bf16.mxu0 0
        %2309 = vmatpush1.bf16.msra.mxu0 %v1173
        %2310 = vmatprep.subr.bf16.mxu0 0
        %2311 = vmatpush1.bf16.msra.mxu0 %v1176
        %2312 = vmatprep.subr.bf16.mxu0 0
        %2313 = vmatpush1.bf16.msra.mxu0 %v1179
        %2314 = vmatprep.subr.bf16.mxu0 0
        %2315 = vmatpush1.bf16.msra.mxu0 0
        %2316 = vmatprep.subr.bf16.mxu0 0
        %2317 = vmatpush1.bf16.msra.mxu0 0
        %2318 = vmatprep.subr.bf16.mxu0 0
        %2319 = vmatpush1.bf16.msra.mxu0 0
        %2320 = vmatprep.subr.bf16.mxu0 0
        %2321 = vmatpush1.bf16.msra.mxu0 0
        %2322 = vmatprep.subr.bf16.mxu0 0
        %2323 = vmatpush1.bf16.msra.mxu0 0
        %2324 = vmatprep.subr.bf16.mxu0 0
        %2325 = vmatpush1.bf16.msra.mxu0 0
        %2326 = vmatprep.subr.bf16.mxu0 0
        %2327 = vmatpush1.bf16.msra.mxu0 0
        %2328 = vmatprep.subr.bf16.mxu0 0
        %2329 = vmatpush1.bf16.msra.mxu0 0
        %2330 = vmatprep.mubr.bf16.mxu0 0
        %2331 = vmatmul.mubr.bf16.gmra.mrb[0].mxu0 %v2254
        %v2332 = vpop.f32.mrb[0].mxu0
        %v2333 = vadd.f32 0.0, %v2332
        %v2334 = vpop.f32.mrb[0].mxu0
        %v2335 = vpop.f32.mrb[0].mxu0
        %v2336 = vadd.f32 0.0, %v2335
        %v2337 = vpop.f32.mrb[0].mxu0
        %2338 = vdwg.mxu0
        %v2339 = vadd.f32 %v2190, %v2290
        %v2340 = vadd.f32 %v2191, %v2292
        %v2341 = vadd.f32 %v2192, %v2333
        %v2342 = vadd.f32 %v2195, %v2294
        %v2343 = vadd.f32 %v2196, %v2296
        %v2344 = vadd.f32 %v2197, %v2336
        %v2345 = vpack.c.bf16 %v2023, %v2022
        %2346 = vmatprep.subr.bf16.mxu0 %v1391
        %2347 = vmatpush1.bf16.msra.mxu0 %v1390
        %2348 = vmatprep.subr.bf16.mxu0 %v1394
        %2349 = vmatpush1.bf16.msra.mxu0 %v1393
        %2350 = vmatprep.subr.bf16.mxu0 %v1397
        %2351 = vmatpush1.bf16.msra.mxu0 %v1396
        %2352 = vmatprep.subr.bf16.mxu0 %v1400
        %2353 = vmatpush1.bf16.msra.mxu0 %v1399
        %2354 = vmatprep.subr.bf16.mxu0 %v1403
        %2355 = vmatpush1.bf16.msra.mxu0 %v1402
        %2356 = vmatprep.subr.bf16.mxu0 %v1406
        %2357 = vmatpush1.bf16.msra.mxu0 %v1405
        %2358 = vmatprep.subr.bf16.mxu0 %v1409
        %2359 = vmatpush1.bf16.msra.mxu0 %v1408
        %2360 = vmatprep.subr.bf16.mxu0 %v1412
        %2361 = vmatpush1.bf16.msra.mxu0 %v1411
        %2362 = vmatprep.subr.bf16.mxu0 0
        %2363 = vmatpush1.bf16.msra.mxu0 0
        %2364 = vmatprep.subr.bf16.mxu0 0
        %2365 = vmatpush1.bf16.msra.mxu0 0
        %2366 = vmatprep.subr.bf16.mxu0 0
        %2367 = vmatpush1.bf16.msra.mxu0 0
        %2368 = vmatprep.subr.bf16.mxu0 0
        %2369 = vmatpush1.bf16.msra.mxu0 0
        %2370 = vmatprep.subr.bf16.mxu0 0
        %2371 = vmatpush1.bf16.msra.mxu0 0
        %2372 = vmatprep.subr.bf16.mxu0 0
        %2373 = vmatpush1.bf16.msra.mxu0 0
        %2374 = vmatprep.subr.bf16.mxu0 0
        %2375 = vmatpush1.bf16.msra.mxu0 0
        %2376 = vmatprep.subr.bf16.mxu0 0
        %2377 = vmatpush1.bf16.msra.mxu0 0
        %2378 = vmatprep.mubr.bf16.mxu0 0
        %2379 = vmatmul.mubr.bf16.gmra.mrb[0].mxu0 %v2345
        %v2380 = vpop.f32.mrb[0].mxu0
        %v2381 = vadd.f32 %v1298, %v2380
        %v2382 = vpop.f32.mrb[0].mxu0
        %v2383 = vadd.f32 %v1302, %v2382
        %v2384 = vpop.f32.mrb[0].mxu0
        %v2385 = vadd.f32 %v1298, %v2384
        %v2386 = vpop.f32.mrb[0].mxu0
        %v2387 = vadd.f32 %v1302, %v2386
        %2388 = vdwg.mxu0
        %2389 = vmatprep.subr.bf16.mxu0 0
        %2390 = vmatpush1.bf16.msra.mxu0 %v1392
        %2391 = vmatprep.subr.bf16.mxu0 0
        %2392 = vmatpush1.bf16.msra.mxu0 %v1395
        %2393 = vmatprep.subr.bf16.mxu0 0
        %2394 = vmatpush1.bf16.msra.mxu0 %v1398
        %2395 = vmatprep.subr.bf16.mxu0 0
        %2396 = vmatpush1.bf16.msra.mxu0 %v1401
        %2397 = vmatprep.subr.bf16.mxu0 0
        %2398 = vmatpush1.bf16.msra.mxu0 %v1404
        %2399 = vmatprep.subr.bf16.mxu0 0
        %2400 = vmatpush1.bf16.msra.mxu0 %v1407
        %2401 = vmatprep.subr.bf16.mxu0 0
        %2402 = vmatpush1.bf16.msra.mxu0 %v1410
        %2403 = vmatprep.subr.bf16.mxu0 0
        %2404 = vmatpush1.bf16.msra.mxu0 %v1413
        %2405 = vmatprep.subr.bf16.mxu0 0
        %2406 = vmatpush1.bf16.msra.mxu0 0
        %2407 = vmatprep.subr.bf16.mxu0 0
        %2408 = vmatpush1.bf16.msra.mxu0 0
        %2409 = vmatprep.subr.bf16.mxu0 0
        %2410 = vmatpush1.bf16.msra.mxu0 0
        %2411 = vmatprep.subr.bf16.mxu0 0
        %2412 = vmatpush1.bf16.msra.mxu0 0
        %2413 = vmatprep.subr.bf16.mxu0 0
        %2414 = vmatpush1.bf16.msra.mxu0 0
        %2415 = vmatprep.subr.bf16.mxu0 0
        %2416 = vmatpush1.bf16.msra.mxu0 0
        %2417 = vmatprep.subr.bf16.mxu0 0
        %2418 = vmatpush1.bf16.msra.mxu0 0
        %2419 = vmatprep.subr.bf16.mxu0 0
        %2420 = vmatpush1.bf16.msra.mxu0 0
        %2421 = vmatprep.mubr.bf16.mxu0 0
        %2422 = vmatmul.mubr.bf16.gmra.mrb[0].mxu0 %v2345
        %v2423 = vpop.f32.mrb[0].mxu0
        %v2424 = vadd.f32 %v1306, %v2423
        %v2425 = vpop.f32.mrb[0].mxu0
        %v2426 = vpop.f32.mrb[0].mxu0
        %v2427 = vadd.f32 %v1306, %v2426
        %v2428 = vpop.f32.mrb[0].mxu0
        %2429 = vdwg.mxu0
        %v2430 = vadd.f32 %v2339, %v2381
        %v2431 = vadd.f32 %v2342, %v2385
        %v2432 = vxor.u32 %v2430, 2147483648
        %v2433 = vxor.u32 %v2431, 2147483648
        %v2434 = vmul.f32 %v2432, 1.442695
        %v2435 = vpow.pop %v2434
        %v2436 = vmul.f32 %v2433, 1.442695
        %v2437 = vpow.pop %v2436
        %v2438 = vadd.f32 %v2435, 1.0
        %v2439 = vadd.f32 %v2437, 1.0
        %v2440 = vrcp.pop %v2438
        %v2441 = vmul.f32 1.0, %v2440
        %v2442 = vrcp.pop %v2439
        %v2443 = vmul.f32 1.0, %v2442
        %v2444 = vadd.f32 %v2340, %v2383
        %v2445 = vadd.f32 %v2343, %v2387
        %v2446 = vxor.u32 %v2444, 2147483648
        %v2447 = vxor.u32 %v2445, 2147483648
        %v2448 = vmul.f32 %v2446, 1.442695
        %v2449 = vpow.pop %v2448
        %v2450 = vmul.f32 %v2447, 1.442695
        %v2451 = vpow.pop %v2450
        %v2452 = vadd.f32 %v2449, 1.0
        %v2453 = vadd.f32 %v2451, 1.0
        %v2454 = vrcp.pop %v2452
        %v2455 = vmul.f32 1.0, %v2454
        %v2456 = vrcp.pop %v2453
        %v2457 = vmul.f32 1.0, %v2456
        %v2458 = vmul.f32 %v2441, %v2424
        %v2459 = vmul.f32 %v2443, %v2427
        %v2460 = vadd.f32 %v2341, %v2458
        %v2461 = vadd.f32 %v2344, %v2459
        %v2462 = vtanh.pop %v2460
        %v2463 = vtanh.pop %v2461
        %v2464 = vsub.f32 1.0, %v2455
        %v2465 = vsub.f32 1.0, %v2457
        %v2466 = vmul.f32 %v2464, %v2462
        %v2467 = vmul.f32 %v2465, %v2463
        %v2468 = vmul.f32 %v2455, %v2022
        %v2469 = vmul.f32 %v2457, %v2023
        %v2470 = vadd.f32 %v2466, %v2468
        %v2471 = vadd.f32 %v2467, %v2469
        %v2472 = vmul.f32 %v2470, %v1568
        %v2473 = vmul.f32 %v2471, %v1568
        %2474 = vadd.xlane.f32.xlu0 %v2472
        %v2475 = vpop.xlane.xlu0 %2474
        %2476 = vadd.xlane.f32.xlu0 %v2473
        %v2477 = vpop.xlane.xlu0 %2476
        %v2478 = vadd.f32 %v2475, %v1580
        %v2479 = vadd.f32 %v2477, %v1580
        %s2480 = scalar_lea.vmem %s413, 24 [#allocation3]
        %v2481 = vld [vmem:[%s2480] sm:$0xf]
        %v2482 = vld [vmem:[%s2480 + $0x4] sm:$0xf]
        %2484 = vset.pattern.permute.xlu0 0
        %2485 = vperm.xlu0 %2484, %v2478
        %v2486 = vpop.permute.xlu0 %2485
        %2489 = vset.pattern.permute.xlu0 0
        %2490 = vperm.xlu0 %2489, %v2479
        %v2491 = vpop.permute.xlu0 %2490
        %v2493 = vmul.f32 %v2486, %v606
        %v2494 = vmul.f32 %v2486, %v610
        %v2495 = vmul.f32 %v2486, %v614
        %v2496 = vmul.f32 %v2486, %v618
        %v2497 = vmul.f32 %v2486, %v622
        %v2498 = vmul.f32 %v2491, %v606
        %v2499 = vmul.f32 %v2491, %v610
        %v2500 = vmul.f32 %v2491, %v614
        %v2501 = vmul.f32 %v2491, %v618
        %v2502 = vmul.f32 %v2491, %v622
        %v2505 = vunpack.c.l.b16 %v2481
        %v2506 = vunpack.c.l.b16 %v2482
        %v2507 = vpack.c.b16 %v2506, %v2505
        %2509 = vmatprep.subr.bf16.mxu0 %v768
        %2510 = vmatpush1.bf16.msra.mxu0 %v767
        %2511 = vmatprep.subr.bf16.mxu0 %v773
        %2512 = vmatpush1.bf16.msra.mxu0 %v772
        %2513 = vmatprep.subr.bf16.mxu0 %v778
        %2514 = vmatpush1.bf16.msra.mxu0 %v777
        %2515 = vmatprep.subr.bf16.mxu0 %v783
        %2516 = vmatpush1.bf16.msra.mxu0 %v782
        %2517 = vmatprep.subr.bf16.mxu0 %v788
        %2518 = vmatpush1.bf16.msra.mxu0 %v787
        %2519 = vmatprep.subr.bf16.mxu0 %v793
        %2520 = vmatpush1.bf16.msra.mxu0 %v792
        %2521 = vmatprep.subr.bf16.mxu0 %v798
        %2522 = vmatpush1.bf16.msra.mxu0 %v797
        %2523 = vmatprep.subr.bf16.mxu0 %v803
        %2524 = vmatpush1.bf16.msra.mxu0 %v802
        %2525 = vmatprep.subr.bf16.mxu0 0
        %2526 = vmatpush1.bf16.msra.mxu0 0
        %2527 = vmatprep.subr.bf16.mxu0 0
        %2528 = vmatpush1.bf16.msra.mxu0 0
        %2529 = vmatprep.subr.bf16.mxu0 0
        %2530 = vmatpush1.bf16.msra.mxu0 0
        %2531 = vmatprep.subr.bf16.mxu0 0
        %2532 = vmatpush1.bf16.msra.mxu0 0
        %2533 = vmatprep.subr.bf16.mxu0 0
        %2534 = vmatpush1.bf16.msra.mxu0 0
        %2535 = vmatprep.subr.bf16.mxu0 0
        %2536 = vmatpush1.bf16.msra.mxu0 0
        %2537 = vmatprep.subr.bf16.mxu0 0
        %2538 = vmatpush1.bf16.msra.mxu0 0
        %2539 = vmatprep.subr.bf16.mxu0 0
        %2540 = vmatpush1.bf16.msra.mxu0 0
        %2541 = vmatprep.mubr.bf16.mxu0 0
        %2542 = vmatmul.mubr.bf16.gmra.mrb[0].mxu0 %v2507
        %v2543 = vpop.f32.mrb[0].mxu0
        %v2544 = vadd.f32 %v2493, %v2543
        %v2545 = vpop.f32.mrb[0].mxu0
        %v2546 = vadd.f32 %v2494, %v2545
        %v2547 = vpop.f32.mrb[0].mxu0
        %v2548 = vadd.f32 %v2498, %v2547
        %v2549 = vpop.f32.mrb[0].mxu0
        %v2550 = vadd.f32 %v2499, %v2549
        %2551 = vdwg.mxu0
        %2552 = vmatprep.subr.bf16.mxu0 %v770
        %2553 = vmatpush1.bf16.msra.mxu0 %v769
        %2554 = vmatprep.subr.bf16.mxu0 %v775
        %2555 = vmatpush1.bf16.msra.mxu0 %v774
        %2556 = vmatprep.subr.bf16.mxu0 %v780
        %2557 = vmatpush1.bf16.msra.mxu0 %v779
        %2558 = vmatprep.subr.bf16.mxu0 %v785
        %2559 = vmatpush1.bf16.msra.mxu0 %v784
        %2560 = vmatprep.subr.bf16.mxu0 %v790
        %2561 = vmatpush1.bf16.msra.mxu0 %v789
        %2562 = vmatprep.subr.bf16.mxu0 %v795
        %2563 = vmatpush1.bf16.msra.mxu0 %v794
        %2564 = vmatprep.subr.bf16.mxu0 %v800
        %2565 = vmatpush1.bf16.msra.mxu0 %v799
        %2566 = vmatprep.subr.bf16.mxu0 %v805
        %2567 = vmatpush1.bf16.msra.mxu0 %v804
        %2568 = vmatprep.subr.bf16.mxu0 0
        %2569 = vmatpush1.bf16.msra.mxu0 0
        %2570 = vmatprep.subr.bf16.mxu0 0
        %2571 = vmatpush1.bf16.msra.mxu0 0
        %2572 = vmatprep.subr.bf16.mxu0 0
        %2573 = vmatpush1.bf16.msra.mxu0 0
        %2574 = vmatprep.subr.bf16.mxu0 0
        %2575 = vmatpush1.bf16.msra.mxu0 0
        %2576 = vmatprep.subr.bf16.mxu0 0
        %2577 = vmatpush1.bf16.msra.mxu0 0
        %2578 = vmatprep.subr.bf16.mxu0 0
        %2579 = vmatpush1.bf16.msra.mxu0 0
        %2580 = vmatprep.subr.bf16.mxu0 0
        %2581 = vmatpush1.bf16.msra.mxu0 0
        %2582 = vmatprep.subr.bf16.mxu0 0
        %2583 = vmatpush1.bf16.msra.mxu0 0
        %2584 = vmatprep.mubr.bf16.mxu0 0
        %2585 = vmatmul.mubr.bf16.gmra.mrb[0].mxu0 %v2507
        %v2586 = vpop.f32.mrb[0].mxu0
        %v2587 = vadd.f32 %v2495, %v2586
        %v2588 = vpop.f32.mrb[0].mxu0
        %v2589 = vadd.f32 %v2496, %v2588
        %v2590 = vpop.f32.mrb[0].mxu0
        %v2591 = vadd.f32 %v2500, %v2590
        %v2592 = vpop.f32.mrb[0].mxu0
        %v2593 = vadd.f32 %v2501, %v2592
        %2594 = vdwg.mxu0
        %2595 = vmatprep.subr.bf16.mxu0 0
        %2596 = vmatpush1.bf16.msra.mxu0 %v771
        %2597 = vmatprep.subr.bf16.mxu0 0
        %2598 = vmatpush1.bf16.msra.mxu0 %v776
        %2599 = vmatprep.subr.bf16.mxu0 0
        %2600 = vmatpush1.bf16.msra.mxu0 %v781
        %2601 = vmatprep.subr.bf16.mxu0 0
        %2602 = vmatpush1.bf16.msra.mxu0 %v786
        %2603 = vmatprep.subr.bf16.mxu0 0
        %2604 = vmatpush1.bf16.msra.mxu0 %v791
        %2605 = vmatprep.subr.bf16.mxu0 0
        %2606 = vmatpush1.bf16.msra.mxu0 %v796
        %2607 = vmatprep.subr.bf16.mxu0 0
        %2608 = vmatpush1.bf16.msra.mxu0 %v801
        %2609 = vmatprep.subr.bf16.mxu0 0
        %2610 = vmatpush1.bf16.msra.mxu0 %v806
        %2611 = vmatprep.subr.bf16.mxu0 0
        %2612 = vmatpush1.bf16.msra.mxu0 0
        %2613 = vmatprep.subr.bf16.mxu0 0
        %2614 = vmatpush1.bf16.msra.mxu0 0
        %2615 = vmatprep.subr.bf16.mxu0 0
        %2616 = vmatpush1.bf16.msra.mxu0 0
        %2617 = vmatprep.subr.bf16.mxu0 0
        %2618 = vmatpush1.bf16.msra.mxu0 0
        %2619 = vmatprep.subr.bf16.mxu0 0
        %2620 = vmatpush1.bf16.msra.mxu0 0
        %2621 = vmatprep.subr.bf16.mxu0 0
        %2622 = vmatpush1.bf16.msra.mxu0 0
        %2623 = vmatprep.subr.bf16.mxu0 0
        %2624 = vmatpush1.bf16.msra.mxu0 0
        %2625 = vmatprep.subr.bf16.mxu0 0
        %2626 = vmatpush1.bf16.msra.mxu0 0
        %2627 = vmatprep.mubr.bf16.mxu0 0
        %2628 = vmatmul.mubr.bf16.gmra.mrb[0].mxu0 %v2507
        %v2629 = vpop.f32.mrb[0].mxu0
        %v2630 = vadd.f32 %v2497, %v2629
        %v2631 = vpop.f32.mrb[0].mxu0
        %v2632 = vpop.f32.mrb[0].mxu0
        %v2633 = vadd.f32 %v2502, %v2632
        %v2634 = vpop.f32.mrb[0].mxu0
        %2635 = vdwg.mxu0
        %v2636 = vadd.f32 %v2544, %v978
        %v2637 = vadd.f32 %v2546, %v982
        %v2638 = vadd.f32 %v2587, %v986
        %v2639 = vadd.f32 %v2589, %v990
        %v2640 = vadd.f32 %v2630, %v994
        %v2641 = vadd.f32 %v2548, %v978
        %v2642 = vadd.f32 %v2550, %v982
        %v2643 = vadd.f32 %v2591, %v986
        %v2644 = vadd.f32 %v2593, %v990
        %v2645 = vadd.f32 %v2633, %v994
        %v2646 = vpack.c.bf16 %v2642, %v2637
        %2647 = vmatprep.subr.bf16.mxu0 0
        %2648 = vmatpush1.bf16.msra.mxu0 %v2646
        %2649 = vmatprep.subr.bf16.mxu0 0
        %2650 = vmatpush1.bf16.msra.mxu0 0
        %2651 = vmatprep.subr.bf16.mxu0 0
        %2652 = vmatpush1.bf16.msra.mxu0 0
        %2653 = vmatprep.subr.bf16.mxu0 0
        %2654 = vmatpush1.bf16.msra.mxu0 0
        %2655 = vmatprep.subr.bf16.mxu0 0
        %2656 = vmatpush1.bf16.msra.mxu0 0
        %2657 = vmatprep.subr.bf16.mxu0 0
        %2658 = vmatpush1.bf16.msra.mxu0 0
        %2659 = vmatprep.subr.bf16.mxu0 0
        %2660 = vmatpush1.bf16.msra.mxu0 0
        %2661 = vmatprep.subr.bf16.mxu0 0
        %2662 = vmatpush1.bf16.msra.mxu0 0
        %2663 = vmatprep.subr.bf16.mxu0 0
        %2664 = vmatpush1.bf16.msra.mxu0 0
        %2665 = vmatprep.subr.bf16.mxu0 0
        %2666 = vmatpush1.bf16.msra.mxu0 0
        %2667 = vmatprep.subr.bf16.mxu0 0
        %2668 = vmatpush1.bf16.msra.mxu0 0
        %2669 = vmatprep.subr.bf16.mxu0 0
        %2670 = vmatpush1.bf16.msra.mxu0 0
        %2671 = vmatprep.subr.bf16.mxu0 0
        %2672 = vmatpush1.bf16.msra.mxu0 0
        %2673 = vmatprep.subr.bf16.mxu0 0
        %2674 = vmatpush1.bf16.msra.mxu0 0
        %2675 = vmatprep.subr.bf16.mxu0 0
        %2676 = vmatpush1.bf16.msra.mxu0 0
        %2677 = vmatprep.subr.bf16.mxu0 0
        %2678 = vmatpush1.bf16.msra.mxu0 0
        %2679 = vmatprep.mubr.bf16.mxu0 0
        %2680 = vmatmul.mubr.bf16.gmra.mrb[0].mxu0 %v1018
        %v2681 = vpop.f32.mrb[0].mxu0
        %v2682 = vadd.f32 0.0, %v2681
        %v2683 = vpop.f32.mrb[0].mxu0
        %v2684 = vpop.f32.mrb[0].mxu0
        %v2685 = vadd.f32 0.0, %v2684
        %v2686 = vpop.f32.mrb[0].mxu0
        %2687 = vdwg.mxu0
        %v2688 = vadd.f32 %v2636, %v2682
        %v2689 = vadd.f32 %v2641, %v2685
        %v2690 = vxor.u32 %v2688, 2147483648
        %v2691 = vxor.u32 %v2689, 2147483648
        %v2692 = vmul.f32 %v2690, 1.442695
        %v2693 = vpow.pop %v2692
        %v2694 = vmul.f32 %v2691, 1.442695
        %v2695 = vpow.pop %v2694
        %v2696 = vadd.f32 %v2693, 1.0
        %v2697 = vadd.f32 %v2695, 1.0
        %v2698 = vrcp.pop %v2696
        %v2699 = vmul.f32 1.0, %v2698
        %v2700 = vrcp.pop %v2697
        %v2701 = vmul.f32 1.0, %v2700
        %v2702 = vpack.c.bf16 %v2701, %v2699
        %2703 = vmatprep.subr.bf16.mxu0 %v1157
        %2704 = vmatpush1.bf16.msra.mxu0 %v1156
        %2705 = vmatprep.subr.bf16.mxu0 %v1160
        %2706 = vmatpush1.bf16.msra.mxu0 %v1159
        %2707 = vmatprep.subr.bf16.mxu0 %v1163
        %2708 = vmatpush1.bf16.msra.mxu0 %v1162
        %2709 = vmatprep.subr.bf16.mxu0 %v1166
        %2710 = vmatpush1.bf16.msra.mxu0 %v1165
        %2711 = vmatprep.subr.bf16.mxu0 %v1169
        %2712 = vmatpush1.bf16.msra.mxu0 %v1168
        %2713 = vmatprep.subr.bf16.mxu0 %v1172
        %2714 = vmatpush1.bf16.msra.mxu0 %v1171
        %2715 = vmatprep.subr.bf16.mxu0 %v1175
        %2716 = vmatpush1.bf16.msra.mxu0 %v1174
        %2717 = vmatprep.subr.bf16.mxu0 %v1178
        %2718 = vmatpush1.bf16.msra.mxu0 %v1177
        %2719 = vmatprep.subr.bf16.mxu0 0
        %2720 = vmatpush1.bf16.msra.mxu0 0
        %2721 = vmatprep.subr.bf16.mxu0 0
        %2722 = vmatpush1.bf16.msra.mxu0 0
        %2723 = vmatprep.subr.bf16.mxu0 0
        %2724 = vmatpush1.bf16.msra.mxu0 0
        %2725 = vmatprep.subr.bf16.mxu0 0
        %2726 = vmatpush1.bf16.msra.mxu0 0
        %2727 = vmatprep.subr.bf16.mxu0 0
        %2728 = vmatpush1.bf16.msra.mxu0 0
        %2729 = vmatprep.subr.bf16.mxu0 0
        %2730 = vmatpush1.bf16.msra.mxu0 0
        %2731 = vmatprep.subr.bf16.mxu0 0
        %2732 = vmatpush1.bf16.msra.mxu0 0
        %2733 = vmatprep.subr.bf16.mxu0 0
        %2734 = vmatpush1.bf16.msra.mxu0 0
        %2735 = vmatprep.mubr.bf16.mxu0 0
        %2736 = vmatmul.mubr.bf16.gmra.mrb[0].mxu0 %v2702
        %v2737 = vpop.f32.mrb[0].mxu0
        %v2738 = vadd.f32 0.0, %v2737
        %v2739 = vpop.f32.mrb[0].mxu0
        %v2740 = vadd.f32 0.0, %v2739
        %v2741 = vpop.f32.mrb[0].mxu0
        %v2742 = vadd.f32 0.0, %v2741
        %v2743 = vpop.f32.mrb[0].mxu0
        %v2744 = vadd.f32 0.0, %v2743
        %2745 = vdwg.mxu0
        %2746 = vmatprep.subr.bf16.mxu0 0
        %2747 = vmatpush1.bf16.msra.mxu0 %v1158
        %2748 = vmatprep.subr.bf16.mxu0 0
        %2749 = vmatpush1.bf16.msra.mxu0 %v1161
        %2750 = vmatprep.subr.bf16.mxu0 0
        %2751 = vmatpush1.bf16.msra.mxu0 %v1164
        %2752 = vmatprep.subr.bf16.mxu0 0
        %2753 = vmatpush1.bf16.msra.mxu0 %v1167
        %2754 = vmatprep.subr.bf16.mxu0 0
        %2755 = vmatpush1.bf16.msra.mxu0 %v1170
        %2756 = vmatprep.subr.bf16.mxu0 0
        %2757 = vmatpush1.bf16.msra.mxu0 %v1173
        %2758 = vmatprep.subr.bf16.mxu0 0
        %2759 = vmatpush1.bf16.msra.mxu0 %v1176
        %2760 = vmatprep.subr.bf16.mxu0 0
        %2761 = vmatpush1.bf16.msra.mxu0 %v1179
        %2762 = vmatprep.subr.bf16.mxu0 0
        %2763 = vmatpush1.bf16.msra.mxu0 0
        %2764 = vmatprep.subr.bf16.mxu0 0
        %2765 = vmatpush1.bf16.msra.mxu0 0
        %2766 = vmatprep.subr.bf16.mxu0 0
        %2767 = vmatpush1.bf16.msra.mxu0 0
        %2768 = vmatprep.subr.bf16.mxu0 0
        %2769 = vmatpush1.bf16.msra.mxu0 0
        %2770 = vmatprep.subr.bf16.mxu0 0
        %2771 = vmatpush1.bf16.msra.mxu0 0
        %2772 = vmatprep.subr.bf16.mxu0 0
        %2773 = vmatpush1.bf16.msra.mxu0 0
        %2774 = vmatprep.subr.bf16.mxu0 0
        %2775 = vmatpush1.bf16.msra.mxu0 0
        %2776 = vmatprep.subr.bf16.mxu0 0
        %2777 = vmatpush1.bf16.msra.mxu0 0
        %2778 = vmatprep.mubr.bf16.mxu0 0
        %2779 = vmatmul.mubr.bf16.gmra.mrb[0].mxu0 %v2702
        %v2780 = vpop.f32.mrb[0].mxu0
        %v2781 = vadd.f32 0.0, %v2780
        %v2782 = vpop.f32.mrb[0].mxu0
        %v2783 = vpop.f32.mrb[0].mxu0
        %v2784 = vadd.f32 0.0, %v2783
        %v2785 = vpop.f32.mrb[0].mxu0
        %2786 = vdwg.mxu0
        %v2787 = vadd.f32 %v2638, %v2738
        %v2788 = vadd.f32 %v2639, %v2740
        %v2789 = vadd.f32 %v2640, %v2781
        %v2790 = vadd.f32 %v2643, %v2742
        %v2791 = vadd.f32 %v2644, %v2744
        %v2792 = vadd.f32 %v2645, %v2784
        %v2793 = vpack.c.bf16 %v2471, %v2470
        %2794 = vmatprep.subr.bf16.mxu0 %v1391
        %2795 = vmatpush1.bf16.msra.mxu0 %v1390
        %2796 = vmatprep.subr.bf16.mxu0 %v1394
        %2797 = vmatpush1.bf16.msra.mxu0 %v1393
        %2798 = vmatprep.subr.bf16.mxu0 %v1397
        %2799 = vmatpush1.bf16.msra.mxu0 %v1396
        %2800 = vmatprep.subr.bf16.mxu0 %v1400
        %2801 = vmatpush1.bf16.msra.mxu0 %v1399
        %2802 = vmatprep.subr.bf16.mxu0 %v1403
        %2803 = vmatpush1.bf16.msra.mxu0 %v1402
        %2804 = vmatprep.subr.bf16.mxu0 %v1406
        %2805 = vmatpush1.bf16.msra.mxu0 %v1405
        %2806 = vmatprep.subr.bf16.mxu0 %v1409
        %2807 = vmatpush1.bf16.msra.mxu0 %v1408
        %2808 = vmatprep.subr.bf16.mxu0 %v1412
        %2809 = vmatpush1.bf16.msra.mxu0 %v1411
        %2810 = vmatprep.subr.bf16.mxu0 0
        %2811 = vmatpush1.bf16.msra.mxu0 0
        %2812 = vmatprep.subr.bf16.mxu0 0
        %2813 = vmatpush1.bf16.msra.mxu0 0
        %2814 = vmatprep.subr.bf16.mxu0 0
        %2815 = vmatpush1.bf16.msra.mxu0 0
        %2816 = vmatprep.subr.bf16.mxu0 0
        %2817 = vmatpush1.bf16.msra.mxu0 0
        %2818 = vmatprep.subr.bf16.mxu0 0
        %2819 = vmatpush1.bf16.msra.mxu0 0
        %2820 = vmatprep.subr.bf16.mxu0 0
        %2821 = vmatpush1.bf16.msra.mxu0 0
        %2822 = vmatprep.subr.bf16.mxu0 0
        %2823 = vmatpush1.bf16.msra.mxu0 0
        %2824 = vmatprep.subr.bf16.mxu0 0
        %2825 = vmatpush1.bf16.msra.mxu0 0
        %2826 = vmatprep.mubr.bf16.mxu0 0
        %2827 = vmatmul.mubr.bf16.gmra.mrb[0].mxu0 %v2793
        %v2828 = vpop.f32.mrb[0].mxu0
        %v2829 = vadd.f32 %v1298, %v2828
        %v2830 = vpop.f32.mrb[0].mxu0
        %v2831 = vadd.f32 %v1302, %v2830
        %v2832 = vpop.f32.mrb[0].mxu0
        %v2833 = vadd.f32 %v1298, %v2832
        %v2834 = vpop.f32.mrb[0].mxu0
        %v2835 = vadd.f32 %v1302, %v2834
        %2836 = vdwg.mxu0
        %2837 = vmatprep.subr.bf16.mxu0 0
        %2838 = vmatpush1.bf16.msra.mxu0 %v1392
        %2839 = vmatprep.subr.bf16.mxu0 0
        %2840 = vmatpush1.bf16.msra.mxu0 %v1395
        %2841 = vmatprep.subr.bf16.mxu0 0
        %2842 = vmatpush1.bf16.msra.mxu0 %v1398
        %2843 = vmatprep.subr.bf16.mxu0 0
        %2844 = vmatpush1.bf16.msra.mxu0 %v1401
        %2845 = vmatprep.subr.bf16.mxu0 0
        %2846 = vmatpush1.bf16.msra.mxu0 %v1404
        %2847 = vmatprep.subr.bf16.mxu0 0
        %2848 = vmatpush1.bf16.msra.mxu0 %v1407
        %2849 = vmatprep.subr.bf16.mxu0 0
        %2850 = vmatpush1.bf16.msra.mxu0 %v1410
        %2851 = vmatprep.subr.bf16.mxu0 0
        %2852 = vmatpush1.bf16.msra.mxu0 %v1413
        %2853 = vmatprep.subr.bf16.mxu0 0
        %2854 = vmatpush1.bf16.msra.mxu0 0
        %2855 = vmatprep.subr.bf16.mxu0 0
        %2856 = vmatpush1.bf16.msra.mxu0 0
        %2857 = vmatprep.subr.bf16.mxu0 0
        %2858 = vmatpush1.bf16.msra.mxu0 0
        %2859 = vmatprep.subr.bf16.mxu0 0
        %2860 = vmatpush1.bf16.msra.mxu0 0
        %2861 = vmatprep.subr.bf16.mxu0 0
        %2862 = vmatpush1.bf16.msra.mxu0 0
        %2863 = vmatprep.subr.bf16.mxu0 0
        %2864 = vmatpush1.bf16.msra.mxu0 0
        %2865 = vmatprep.subr.bf16.mxu0 0
        %2866 = vmatpush1.bf16.msra.mxu0 0
        %2867 = vmatprep.subr.bf16.mxu0 0
        %2868 = vmatpush1.bf16.msra.mxu0 0
        %2869 = vmatprep.mubr.bf16.mxu0 0
        %2870 = vmatmul.mubr.bf16.gmra.mrb[0].mxu0 %v2793
        %v2871 = vpop.f32.mrb[0].mxu0
        %v2872 = vadd.f32 %v1306, %v2871
        %v2873 = vpop.f32.mrb[0].mxu0
        %v2874 = vpop.f32.mrb[0].mxu0
        %v2875 = vadd.f32 %v1306, %v2874
        %v2876 = vpop.f32.mrb[0].mxu0
        %2877 = vdwg.mxu0
        %v2878 = vadd.f32 %v2787, %v2829
        %v2879 = vadd.f32 %v2790, %v2833
        %v2880 = vxor.u32 %v2878, 2147483648
        %v2881 = vxor.u32 %v2879, 2147483648
        %v2882 = vmul.f32 %v2880, 1.442695
        %v2883 = vpow.pop %v2882
        %v2884 = vmul.f32 %v2881, 1.442695
        %v2885 = vpow.pop %v2884
        %v2886 = vadd.f32 %v2883, 1.0
        %v2887 = vadd.f32 %v2885, 1.0
        %v2888 = vrcp.pop %v2886
        %v2889 = vmul.f32 1.0, %v2888
        %v2890 = vrcp.pop %v2887
        %v2891 = vmul.f32 1.0, %v2890
        %v2892 = vadd.f32 %v2788, %v2831
        %v2893 = vadd.f32 %v2791, %v2835
        %v2894 = vxor.u32 %v2892, 2147483648
        %v2895 = vxor.u32 %v2893, 2147483648
        %v2896 = vmul.f32 %v2894, 1.442695
        %v2897 = vpow.pop %v2896
        %v2898 = vmul.f32 %v2895, 1.442695
        %v2899 = vpow.pop %v2898
        %v2900 = vadd.f32 %v2897, 1.0
        %v2901 = vadd.f32 %v2899, 1.0
        %v2902 = vrcp.pop %v2900
        %v2903 = vmul.f32 1.0, %v2902
        %v2904 = vrcp.pop %v2901
        %v2905 = vmul.f32 1.0, %v2904
        %v2906 = vmul.f32 %v2889, %v2872
        %v2907 = vmul.f32 %v2891, %v2875
        %v2908 = vadd.f32 %v2789, %v2906
        %v2909 = vadd.f32 %v2792, %v2907
        %v2910 = vtanh.pop %v2908
        %v2911 = vtanh.pop %v2909
        %v2912 = vsub.f32 1.0, %v2903
        %v2913 = vsub.f32 1.0, %v2905
        %v2914 = vmul.f32 %v2912, %v2910
        %v2915 = vmul.f32 %v2913, %v2911
        %v2916 = vmul.f32 %v2903, %v2470
        %v2917 = vmul.f32 %v2905, %v2471
        %v2918 = vadd.f32 %v2914, %v2916
        %v2919 = vadd.f32 %v2915, %v2917
        %v2920 = vmul.f32 %v2918, %v1568
        %v2921 = vmul.f32 %v2919, %v1568
        %2922 = vadd.xlane.f32.xlu0 %v2920
        %v2923 = vpop.xlane.xlu0 %2922
        %2924 = vadd.xlane.f32.xlu0 %v2921
        %v2925 = vpop.xlane.xlu0 %2924
        %v2926 = vadd.f32 %v2923, %v1580
        %v2927 = vadd.f32 %v2925, %v1580
        %s2928 = scalar_lea.vmem %s413, 32 [#allocation3]
        %v2929 = vld [vmem:[%s2928] sm:$0xf]
        %v2930 = vld [vmem:[%s2928 + $0x4] sm:$0xf]
        %2932 = vset.pattern.permute.xlu0 0
        %2933 = vperm.xlu0 %2932, %v2926
        %v2934 = vpop.permute.xlu0 %2933
        %2937 = vset.pattern.permute.xlu0 0
        %2938 = vperm.xlu0 %2937, %v2927
        %v2939 = vpop.permute.xlu0 %2938
        %v2941 = vmul.f32 %v2934, %v606
        %v2942 = vmul.f32 %v2934, %v610
        %v2943 = vmul.f32 %v2934, %v614
        %v2944 = vmul.f32 %v2934, %v618
        %v2945 = vmul.f32 %v2934, %v622
        %v2946 = vmul.f32 %v2939, %v606
        %v2947 = vmul.f32 %v2939, %v610
        %v2948 = vmul.f32 %v2939, %v614
        %v2949 = vmul.f32 %v2939, %v618
        %v2950 = vmul.f32 %v2939, %v622
        %v2953 = vunpack.c.l.b16 %v2929
        %v2954 = vunpack.c.l.b16 %v2930
        %v2955 = vpack.c.b16 %v2954, %v2953
        %2957 = vmatprep.subr.bf16.mxu0 %v768
        %2958 = vmatpush1.bf16.msra.mxu0 %v767
        %2959 = vmatprep.subr.bf16.mxu0 %v773
        %2960 = vmatpush1.bf16.msra.mxu0 %v772
        %2961 = vmatprep.subr.bf16.mxu0 %v778
        %2962 = vmatpush1.bf16.msra.mxu0 %v777
        %2963 = vmatprep.subr.bf16.mxu0 %v783
        %2964 = vmatpush1.bf16.msra.mxu0 %v782
        %2965 = vmatprep.subr.bf16.mxu0 %v788
        %2966 = vmatpush1.bf16.msra.mxu0 %v787
        %2967 = vmatprep.subr.bf16.mxu0 %v793
        %2968 = vmatpush1.bf16.msra.mxu0 %v792
        %2969 = vmatprep.subr.bf16.mxu0 %v798
        %2970 = vmatpush1.bf16.msra.mxu0 %v797
        %2971 = vmatprep.subr.bf16.mxu0 %v803
        %2972 = vmatpush1.bf16.msra.mxu0 %v802
        %2973 = vmatprep.subr.bf16.mxu0 0
        %2974 = vmatpush1.bf16.msra.mxu0 0
        %2975 = vmatprep.subr.bf16.mxu0 0
        %2976 = vmatpush1.bf16.msra.mxu0 0
        %2977 = vmatprep.subr.bf16.mxu0 0
        %2978 = vmatpush1.bf16.msra.mxu0 0
        %2979 = vmatprep.subr.bf16.mxu0 0
        %2980 = vmatpush1.bf16.msra.mxu0 0
        %2981 = vmatprep.subr.bf16.mxu0 0
        %2982 = vmatpush1.bf16.msra.mxu0 0
        %2983 = vmatprep.subr.bf16.mxu0 0
        %2984 = vmatpush1.bf16.msra.mxu0 0
        %2985 = vmatprep.subr.bf16.mxu0 0
        %2986 = vmatpush1.bf16.msra.mxu0 0
        %2987 = vmatprep.subr.bf16.mxu0 0
        %2988 = vmatpush1.bf16.msra.mxu0 0
        %2989 = vmatprep.mubr.bf16.mxu0 0
        %2990 = vmatmul.mubr.bf16.gmra.mrb[0].mxu0 %v2955
        %v2991 = vpop.f32.mrb[0].mxu0
        %v2992 = vadd.f32 %v2941, %v2991
        %v2993 = vpop.f32.mrb[0].mxu0
        %v2994 = vadd.f32 %v2942, %v2993
        %v2995 = vpop.f32.mrb[0].mxu0
        %v2996 = vadd.f32 %v2946, %v2995
        %v2997 = vpop.f32.mrb[0].mxu0
        %v2998 = vadd.f32 %v2947, %v2997
        %2999 = vdwg.mxu0
        %3000 = vmatprep.subr.bf16.mxu0 %v770
        %3001 = vmatpush1.bf16.msra.mxu0 %v769
        %3002 = vmatprep.subr.bf16.mxu0 %v775
        %3003 = vmatpush1.bf16.msra.mxu0 %v774
        %3004 = vmatprep.subr.bf16.mxu0 %v780
        %3005 = vmatpush1.bf16.msra.mxu0 %v779
        %3006 = vmatprep.subr.bf16.mxu0 %v785
        %3007 = vmatpush1.bf16.msra.mxu0 %v784
        %3008 = vmatprep.subr.bf16.mxu0 %v790
        %3009 = vmatpush1.bf16.msra.mxu0 %v789
        %3010 = vmatprep.subr.bf16.mxu0 %v795
        %3011 = vmatpush1.bf16.msra.mxu0 %v794
        %3012 = vmatprep.subr.bf16.mxu0 %v800
        %3013 = vmatpush1.bf16.msra.mxu0 %v799
        %3014 = vmatprep.subr.bf16.mxu0 %v805
        %3015 = vmatpush1.bf16.msra.mxu0 %v804
        %3016 = vmatprep.subr.bf16.mxu0 0
        %3017 = vmatpush1.bf16.msra.mxu0 0
        %3018 = vmatprep.subr.bf16.mxu0 0
        %3019 = vmatpush1.bf16.msra.mxu0 0
        %3020 = vmatprep.subr.bf16.mxu0 0
        %3021 = vmatpush1.bf16.msra.mxu0 0
        %3022 = vmatprep.subr.bf16.mxu0 0
        %3023 = vmatpush1.bf16.msra.mxu0 0
        %3024 = vmatprep.subr.bf16.mxu0 0
        %3025 = vmatpush1.bf16.msra.mxu0 0
        %3026 = vmatprep.subr.bf16.mxu0 0
        %3027 = vmatpush1.bf16.msra.mxu0 0
        %3028 = vmatprep.subr.bf16.mxu0 0
        %3029 = vmatpush1.bf16.msra.mxu0 0
        %3030 = vmatprep.subr.bf16.mxu0 0
        %3031 = vmatpush1.bf16.msra.mxu0 0
        %3032 = vmatprep.mubr.bf16.mxu0 0
        %3033 = vmatmul.mubr.bf16.gmra.mrb[0].mxu0 %v2955
        %v3034 = vpop.f32.mrb[0].mxu0
        %v3035 = vadd.f32 %v2943, %v3034
        %v3036 = vpop.f32.mrb[0].mxu0
        %v3037 = vadd.f32 %v2944, %v3036
        %v3038 = vpop.f32.mrb[0].mxu0
        %v3039 = vadd.f32 %v2948, %v3038
        %v3040 = vpop.f32.mrb[0].mxu0
        %v3041 = vadd.f32 %v2949, %v3040
        %3042 = vdwg.mxu0
        %3043 = vmatprep.subr.bf16.mxu0 0
        %3044 = vmatpush1.bf16.msra.mxu0 %v771
        %3045 = vmatprep.subr.bf16.mxu0 0
        %3046 = vmatpush1.bf16.msra.mxu0 %v776
        %3047 = vmatprep.subr.bf16.mxu0 0
        %3048 = vmatpush1.bf16.msra.mxu0 %v781
        %3049 = vmatprep.subr.bf16.mxu0 0
        %3050 = vmatpush1.bf16.msra.mxu0 %v786
        %3051 = vmatprep.subr.bf16.mxu0 0
        %3052 = vmatpush1.bf16.msra.mxu0 %v791
        %3053 = vmatprep.subr.bf16.mxu0 0
        %3054 = vmatpush1.bf16.msra.mxu0 %v796
        %3055 = vmatprep.subr.bf16.mxu0 0
        %3056 = vmatpush1.bf16.msra.mxu0 %v801
        %3057 = vmatprep.subr.bf16.mxu0 0
        %3058 = vmatpush1.bf16.msra.mxu0 %v806
        %3059 = vmatprep.subr.bf16.mxu0 0
        %3060 = vmatpush1.bf16.msra.mxu0 0
        %3061 = vmatprep.subr.bf16.mxu0 0
        %3062 = vmatpush1.bf16.msra.mxu0 0
        %3063 = vmatprep.subr.bf16.mxu0 0
        %3064 = vmatpush1.bf16.msra.mxu0 0
        %3065 = vmatprep.subr.bf16.mxu0 0
        %3066 = vmatpush1.bf16.msra.mxu0 0
        %3067 = vmatprep.subr.bf16.mxu0 0
        %3068 = vmatpush1.bf16.msra.mxu0 0
        %3069 = vmatprep.subr.bf16.mxu0 0
        %3070 = vmatpush1.bf16.msra.mxu0 0
        %3071 = vmatprep.subr.bf16.mxu0 0
        %3072 = vmatpush1.bf16.msra.mxu0 0
        %3073 = vmatprep.subr.bf16.mxu0 0
        %3074 = vmatpush1.bf16.msra.mxu0 0
        %3075 = vmatprep.mubr.bf16.mxu0 0
        %3076 = vmatmul.mubr.bf16.gmra.mrb[0].mxu0 %v2955
        %v3077 = vpop.f32.mrb[0].mxu0
        %v3078 = vadd.f32 %v2945, %v3077
        %v3079 = vpop.f32.mrb[0].mxu0
        %v3080 = vpop.f32.mrb[0].mxu0
        %v3081 = vadd.f32 %v2950, %v3080
        %v3082 = vpop.f32.mrb[0].mxu0
        %3083 = vdwg.mxu0
        %v3084 = vadd.f32 %v2992, %v978
        %v3085 = vadd.f32 %v2994, %v982
        %v3086 = vadd.f32 %v3035, %v986
        %v3087 = vadd.f32 %v3037, %v990
        %v3088 = vadd.f32 %v3078, %v994
        %v3089 = vadd.f32 %v2996, %v978
        %v3090 = vadd.f32 %v2998, %v982
        %v3091 = vadd.f32 %v3039, %v986
        %v3092 = vadd.f32 %v3041, %v990
        %v3093 = vadd.f32 %v3081, %v994
        %v3094 = vpack.c.bf16 %v3090, %v3085
        %3095 = vmatprep.subr.bf16.mxu0 0
        %3096 = vmatpush1.bf16.msra.mxu0 %v3094
        %3097 = vmatprep.subr.bf16.mxu0 0
        %3098 = vmatpush1.bf16.msra.mxu0 0
        %3099 = vmatprep.subr.bf16.mxu0 0
        %3100 = vmatpush1.bf16.msra.mxu0 0
        %3101 = vmatprep.subr.bf16.mxu0 0
        %3102 = vmatpush1.bf16.msra.mxu0 0
        %3103 = vmatprep.subr.bf16.mxu0 0
        %3104 = vmatpush1.bf16.msra.mxu0 0
        %3105 = vmatprep.subr.bf16.mxu0 0
        %3106 = vmatpush1.bf16.msra.mxu0 0
        %3107 = vmatprep.subr.bf16.mxu0 0
        %3108 = vmatpush1.bf16.msra.mxu0 0
        %3109 = vmatprep.subr.bf16.mxu0 0
        %3110 = vmatpush1.bf16.msra.mxu0 0
        %3111 = vmatprep.subr.bf16.mxu0 0
        %3112 = vmatpush1.bf16.msra.mxu0 0
        %3113 = vmatprep.subr.bf16.mxu0 0
        %3114 = vmatpush1.bf16.msra.mxu0 0
        %3115 = vmatprep.subr.bf16.mxu0 0
        %3116 = vmatpush1.bf16.msra.mxu0 0
        %3117 = vmatprep.subr.bf16.mxu0 0
        %3118 = vmatpush1.bf16.msra.mxu0 0
        %3119 = vmatprep.subr.bf16.mxu0 0
        %3120 = vmatpush1.bf16.msra.mxu0 0
        %3121 = vmatprep.subr.bf16.mxu0 0
        %3122 = vmatpush1.bf16.msra.mxu0 0
        %3123 = vmatprep.subr.bf16.mxu0 0
        %3124 = vmatpush1.bf16.msra.mxu0 0
        %3125 = vmatprep.subr.bf16.mxu0 0
        %3126 = vmatpush1.bf16.msra.mxu0 0
        %3127 = vmatprep.mubr.bf16.mxu0 0
        %3128 = vmatmul.mubr.bf16.gmra.mrb[0].mxu0 %v1018
        %v3129 = vpop.f32.mrb[0].mxu0
        %v3130 = vadd.f32 0.0, %v3129
        %v3131 = vpop.f32.mrb[0].mxu0
        %v3132 = vpop.f32.mrb[0].mxu0
        %v3133 = vadd.f32 0.0, %v3132
        %v3134 = vpop.f32.mrb[0].mxu0
        %3135 = vdwg.mxu0
        %v3136 = vadd.f32 %v3084, %v3130
        %v3137 = vadd.f32 %v3089, %v3133
        %v3138 = vxor.u32 %v3136, 2147483648
        %v3139 = vxor.u32 %v3137, 2147483648
        %v3140 = vmul.f32 %v3138, 1.442695
        %v3141 = vpow.pop %v3140
        %v3142 = vmul.f32 %v3139, 1.442695
        %v3143 = vpow.pop %v3142
        %v3144 = vadd.f32 %v3141, 1.0
        %v3145 = vadd.f32 %v3143, 1.0
        %v3146 = vrcp.pop %v3144
        %v3147 = vmul.f32 1.0, %v3146
        %v3148 = vrcp.pop %v3145
        %v3149 = vmul.f32 1.0, %v3148
        %v3150 = vpack.c.bf16 %v3149, %v3147
        %3151 = vmatprep.subr.bf16.mxu0 %v1157
        %3152 = vmatpush1.bf16.msra.mxu0 %v1156
        %3153 = vmatprep.subr.bf16.mxu0 %v1160
        %3154 = vmatpush1.bf16.msra.mxu0 %v1159
        %3155 = vmatprep.subr.bf16.mxu0 %v1163
        %3156 = vmatpush1.bf16.msra.mxu0 %v1162
        %3157 = vmatprep.subr.bf16.mxu0 %v1166
        %3158 = vmatpush1.bf16.msra.mxu0 %v1165
        %3159 = vmatprep.subr.bf16.mxu0 %v1169
        %3160 = vmatpush1.bf16.msra.mxu0 %v1168
        %3161 = vmatprep.subr.bf16.mxu0 %v1172
        %3162 = vmatpush1.bf16.msra.mxu0 %v1171
        %3163 = vmatprep.subr.bf16.mxu0 %v1175
        %3164 = vmatpush1.bf16.msra.mxu0 %v1174
        %3165 = vmatprep.subr.bf16.mxu0 %v1178
        %3166 = vmatpush1.bf16.msra.mxu0 %v1177
        %3167 = vmatprep.subr.bf16.mxu0 0
        %3168 = vmatpush1.bf16.msra.mxu0 0
        %3169 = vmatprep.subr.bf16.mxu0 0
        %3170 = vmatpush1.bf16.msra.mxu0 0
        %3171 = vmatprep.subr.bf16.mxu0 0
        %3172 = vmatpush1.bf16.msra.mxu0 0
        %3173 = vmatprep.subr.bf16.mxu0 0
        %3174 = vmatpush1.bf16.msra.mxu0 0
        %3175 = vmatprep.subr.bf16.mxu0 0
        %3176 = vmatpush1.bf16.msra.mxu0 0
        %3177 = vmatprep.subr.bf16.mxu0 0
        %3178 = vmatpush1.bf16.msra.mxu0 0
        %3179 = vmatprep.subr.bf16.mxu0 0
        %3180 = vmatpush1.bf16.msra.mxu0 0
        %3181 = vmatprep.subr.bf16.mxu0 0
        %3182 = vmatpush1.bf16.msra.mxu0 0
        %3183 = vmatprep.mubr.bf16.mxu0 0
        %3184 = vmatmul.mubr.bf16.gmra.mrb[0].mxu0 %v3150
        %v3185 = vpop.f32.mrb[0].mxu0
        %v3186 = vadd.f32 0.0, %v3185
        %v3187 = vpop.f32.mrb[0].mxu0
        %v3188 = vadd.f32 0.0, %v3187
        %v3189 = vpop.f32.mrb[0].mxu0
        %v3190 = vadd.f32 0.0, %v3189
        %v3191 = vpop.f32.mrb[0].mxu0
        %v3192 = vadd.f32 0.0, %v3191
        %3193 = vdwg.mxu0
        %3194 = vmatprep.subr.bf16.mxu0 0
        %3195 = vmatpush1.bf16.msra.mxu0 %v1158
        %3196 = vmatprep.subr.bf16.mxu0 0
        %3197 = vmatpush1.bf16.msra.mxu0 %v1161
        %3198 = vmatprep.subr.bf16.mxu0 0
        %3199 = vmatpush1.bf16.msra.mxu0 %v1164
        %3200 = vmatprep.subr.bf16.mxu0 0
        %3201 = vmatpush1.bf16.msra.mxu0 %v1167
        %3202 = vmatprep.subr.bf16.mxu0 0
        %3203 = vmatpush1.bf16.msra.mxu0 %v1170
        %3204 = vmatprep.subr.bf16.mxu0 0
        %3205 = vmatpush1.bf16.msra.mxu0 %v1173
        %3206 = vmatprep.subr.bf16.mxu0 0
        %3207 = vmatpush1.bf16.msra.mxu0 %v1176
        %3208 = vmatprep.subr.bf16.mxu0 0
        %3209 = vmatpush1.bf16.msra.mxu0 %v1179
        %3210 = vmatprep.subr.bf16.mxu0 0
        %3211 = vmatpush1.bf16.msra.mxu0 0
        %3212 = vmatprep.subr.bf16.mxu0 0
        %3213 = vmatpush1.bf16.msra.mxu0 0
        %3214 = vmatprep.subr.bf16.mxu0 0
        %3215 = vmatpush1.bf16.msra.mxu0 0
        %3216 = vmatprep.subr.bf16.mxu0 0
        %3217 = vmatpush1.bf16.msra.mxu0 0
        %3218 = vmatprep.subr.bf16.mxu0 0
        %3219 = vmatpush1.bf16.msra.mxu0 0
        %3220 = vmatprep.subr.bf16.mxu0 0
        %3221 = vmatpush1.bf16.msra.mxu0 0
        %3222 = vmatprep.subr.bf16.mxu0 0
        %3223 = vmatpush1.bf16.msra.mxu0 0
        %3224 = vmatprep.subr.bf16.mxu0 0
        %3225 = vmatpush1.bf16.msra.mxu0 0
        %3226 = vmatprep.mubr.bf16.mxu0 0
        %3227 = vmatmul.mubr.bf16.gmra.mrb[0].mxu0 %v3150
        %v3228 = vpop.f32.mrb[0].mxu0
        %v3229 = vadd.f32 0.0, %v3228
        %v3230 = vpop.f32.mrb[0].mxu0
        %v3231 = vpop.f32.mrb[0].mxu0
        %v3232 = vadd.f32 0.0, %v3231
        %v3233 = vpop.f32.mrb[0].mxu0
        %3234 = vdwg.mxu0
        %v3235 = vadd.f32 %v3086, %v3186
        %v3236 = vadd.f32 %v3087, %v3188
        %v3237 = vadd.f32 %v3088, %v3229
        %v3238 = vadd.f32 %v3091, %v3190
        %v3239 = vadd.f32 %v3092, %v3192
        %v3240 = vadd.f32 %v3093, %v3232
        %v3241 = vpack.c.bf16 %v2919, %v2918
        %3242 = vmatprep.subr.bf16.mxu0 %v1391
        %3243 = vmatpush1.bf16.msra.mxu0 %v1390
        %3244 = vmatprep.subr.bf16.mxu0 %v1394
        %3245 = vmatpush1.bf16.msra.mxu0 %v1393
        %3246 = vmatprep.subr.bf16.mxu0 %v1397
        %3247 = vmatpush1.bf16.msra.mxu0 %v1396
        %3248 = vmatprep.subr.bf16.mxu0 %v1400
        %3249 = vmatpush1.bf16.msra.mxu0 %v1399
        %3250 = vmatprep.subr.bf16.mxu0 %v1403
        %3251 = vmatpush1.bf16.msra.mxu0 %v1402
        %3252 = vmatprep.subr.bf16.mxu0 %v1406
        %3253 = vmatpush1.bf16.msra.mxu0 %v1405
        %3254 = vmatprep.subr.bf16.mxu0 %v1409
        %3255 = vmatpush1.bf16.msra.mxu0 %v1408
        %3256 = vmatprep.subr.bf16.mxu0 %v1412
        %3257 = vmatpush1.bf16.msra.mxu0 %v1411
        %3258 = vmatprep.subr.bf16.mxu0 0
        %3259 = vmatpush1.bf16.msra.mxu0 0
        %3260 = vmatprep.subr.bf16.mxu0 0
        %3261 = vmatpush1.bf16.msra.mxu0 0
        %3262 = vmatprep.subr.bf16.mxu0 0
        %3263 = vmatpush1.bf16.msra.mxu0 0
        %3264 = vmatprep.subr.bf16.mxu0 0
        %3265 = vmatpush1.bf16.msra.mxu0 0
        %3266 = vmatprep.subr.bf16.mxu0 0
        %3267 = vmatpush1.bf16.msra.mxu0 0
        %3268 = vmatprep.subr.bf16.mxu0 0
        %3269 = vmatpush1.bf16.msra.mxu0 0
        %3270 = vmatprep.subr.bf16.mxu0 0
        %3271 = vmatpush1.bf16.msra.mxu0 0
        %3272 = vmatprep.subr.bf16.mxu0 0
        %3273 = vmatpush1.bf16.msra.mxu0 0
        %3274 = vmatprep.mubr.bf16.mxu0 0
        %3275 = vmatmul.mubr.bf16.gmra.mrb[0].mxu0 %v3241
        %v3276 = vpop.f32.mrb[0].mxu0
        %v3277 = vadd.f32 %v1298, %v3276
        %v3278 = vpop.f32.mrb[0].mxu0
        %v3279 = vadd.f32 %v1302, %v3278
        %v3280 = vpop.f32.mrb[0].mxu0
        %v3281 = vadd.f32 %v1298, %v3280
        %v3282 = vpop.f32.mrb[0].mxu0
        %v3283 = vadd.f32 %v1302, %v3282
        %3284 = vdwg.mxu0
        %3285 = vmatprep.subr.bf16.mxu0 0
        %3286 = vmatpush1.bf16.msra.mxu0 %v1392
        %3287 = vmatprep.subr.bf16.mxu0 0
        %3288 = vmatpush1.bf16.msra.mxu0 %v1395
        %3289 = vmatprep.subr.bf16.mxu0 0
        %3290 = vmatpush1.bf16.msra.mxu0 %v1398
        %3291 = vmatprep.subr.bf16.mxu0 0
        %3292 = vmatpush1.bf16.msra.mxu0 %v1401
        %3293 = vmatprep.subr.bf16.mxu0 0
        %3294 = vmatpush1.bf16.msra.mxu0 %v1404
        %3295 = vmatprep.subr.bf16.mxu0 0
        %3296 = vmatpush1.bf16.msra.mxu0 %v1407
        %3297 = vmatprep.subr.bf16.mxu0 0
        %3298 = vmatpush1.bf16.msra.mxu0 %v1410
        %3299 = vmatprep.subr.bf16.mxu0 0
        %3300 = vmatpush1.bf16.msra.mxu0 %v1413
        %3301 = vmatprep.subr.bf16.mxu0 0
        %3302 = vmatpush1.bf16.msra.mxu0 0
        %3303 = vmatprep.subr.bf16.mxu0 0
        %3304 = vmatpush1.bf16.msra.mxu0 0
        %3305 = vmatprep.subr.bf16.mxu0 0
        %3306 = vmatpush1.bf16.msra.mxu0 0
        %3307 = vmatprep.subr.bf16.mxu0 0
        %3308 = vmatpush1.bf16.msra.mxu0 0
        %3309 = vmatprep.subr.bf16.mxu0 0
        %3310 = vmatpush1.bf16.msra.mxu0 0
        %3311 = vmatprep.subr.bf16.mxu0 0
        %3312 = vmatpush1.bf16.msra.mxu0 0
        %3313 = vmatprep.subr.bf16.mxu0 0
        %3314 = vmatpush1.bf16.msra.mxu0 0
        %3315 = vmatprep.subr.bf16.mxu0 0
        %3316 = vmatpush1.bf16.msra.mxu0 0
        %3317 = vmatprep.mubr.bf16.mxu0 0
        %3318 = vmatmul.mubr.bf16.gmra.mrb[0].mxu0 %v3241
        %v3319 = vpop.f32.mrb[0].mxu0
        %v3320 = vadd.f32 %v1306, %v3319
        %v3321 = vpop.f32.mrb[0].mxu0
        %v3322 = vpop.f32.mrb[0].mxu0
        %v3323 = vadd.f32 %v1306, %v3322
        %v3324 = vpop.f32.mrb[0].mxu0
        %3325 = vdwg.mxu0
        %v3326 = vadd.f32 %v3235, %v3277
        %v3327 = vadd.f32 %v3238, %v3281
        %v3328 = vxor.u32 %v3326, 2147483648
        %v3329 = vxor.u32 %v3327, 2147483648
        %v3330 = vmul.f32 %v3328, 1.442695
        %v3331 = vpow.pop %v3330
        %v3332 = vmul.f32 %v3329, 1.442695
        %v3333 = vpow.pop %v3332
        %v3334 = vadd.f32 %v3331, 1.0
        %v3335 = vadd.f32 %v3333, 1.0
        %v3336 = vrcp.pop %v3334
        %v3337 = vmul.f32 1.0, %v3336
        %v3338 = vrcp.pop %v3335
        %v3339 = vmul.f32 1.0, %v3338
        %v3340 = vadd.f32 %v3236, %v3279
        %v3341 = vadd.f32 %v3239, %v3283
        %v3342 = vxor.u32 %v3340, 2147483648
        %v3343 = vxor.u32 %v3341, 2147483648
        %v3344 = vmul.f32 %v3342, 1.442695
        %v3345 = vpow.pop %v3344
        %v3346 = vmul.f32 %v3343, 1.442695
        %v3347 = vpow.pop %v3346
        %v3348 = vadd.f32 %v3345, 1.0
        %v3349 = vadd.f32 %v3347, 1.0
        %v3350 = vrcp.pop %v3348
        %v3351 = vmul.f32 1.0, %v3350
        %v3352 = vrcp.pop %v3349
        %v3353 = vmul.f32 1.0, %v3352
        %v3354 = vmul.f32 %v3337, %v3320
        %v3355 = vmul.f32 %v3339, %v3323
        %v3356 = vadd.f32 %v3237, %v3354
        %v3357 = vadd.f32 %v3240, %v3355
        %v3358 = vtanh.pop %v3356
        %v3359 = vtanh.pop %v3357
        %v3360 = vsub.f32 1.0, %v3351
        %v3361 = vsub.f32 1.0, %v3353
        %v3362 = vmul.f32 %v3360, %v3358
        %v3363 = vmul.f32 %v3361, %v3359
        %v3364 = vmul.f32 %v3351, %v2918
        %v3365 = vmul.f32 %v3353, %v2919
        %v3366 = vadd.f32 %v3362, %v3364
        %v3367 = vadd.f32 %v3363, %v3365
        %v3368 = vmul.f32 %v3366, %v1568
        %v3369 = vmul.f32 %v3367, %v1568
        %3370 = vadd.xlane.f32.xlu0 %v3368
        %v3371 = vpop.xlane.xlu0 %3370
        %3372 = vadd.xlane.f32.xlu0 %v3369
        %v3373 = vpop.xlane.xlu0 %3372
        %v3374 = vadd.f32 %v3371, %v1580
        %v3375 = vadd.f32 %v3373, %v1580
        %s3376 = scalar_lea.vmem %s413, 40 [#allocation3]
        %v3377 = vld [vmem:[%s3376] sm:$0xf]
        %v3378 = vld [vmem:[%s3376 + $0x4] sm:$0xf]
        %3380 = vset.pattern.permute.xlu0 0
        %3381 = vperm.xlu0 %3380, %v3374
        %v3382 = vpop.permute.xlu0 %3381
        %3385 = vset.pattern.permute.xlu0 0
        %3386 = vperm.xlu0 %3385, %v3375
        %v3387 = vpop.permute.xlu0 %3386
        %v3389 = vmul.f32 %v3382, %v606
        %v3390 = vmul.f32 %v3382, %v610
        %v3391 = vmul.f32 %v3382, %v614
        %v3392 = vmul.f32 %v3382, %v618
        %v3393 = vmul.f32 %v3382, %v622
        %v3394 = vmul.f32 %v3387, %v606
        %v3395 = vmul.f32 %v3387, %v610
        %v3396 = vmul.f32 %v3387, %v614
        %v3397 = vmul.f32 %v3387, %v618
        %v3398 = vmul.f32 %v3387, %v622
        %v3401 = vunpack.c.l.b16 %v3377
        %v3402 = vunpack.c.l.b16 %v3378
        %v3403 = vpack.c.b16 %v3402, %v3401
        %3405 = vmatprep.subr.bf16.mxu0 %v768
        %3406 = vmatpush1.bf16.msra.mxu0 %v767
        %3407 = vmatprep.subr.bf16.mxu0 %v773
        %3408 = vmatpush1.bf16.msra.mxu0 %v772
        %3409 = vmatprep.subr.bf16.mxu0 %v778
        %3410 = vmatpush1.bf16.msra.mxu0 %v777
        %3411 = vmatprep.subr.bf16.mxu0 %v783
        %3412 = vmatpush1.bf16.msra.mxu0 %v782
        %3413 = vmatprep.subr.bf16.mxu0 %v788
        %3414 = vmatpush1.bf16.msra.mxu0 %v787
        %3415 = vmatprep.subr.bf16.mxu0 %v793
        %3416 = vmatpush1.bf16.msra.mxu0 %v792
        %3417 = vmatprep.subr.bf16.mxu0 %v798
        %3418 = vmatpush1.bf16.msra.mxu0 %v797
        %3419 = vmatprep.subr.bf16.mxu0 %v803
        %3420 = vmatpush1.bf16.msra.mxu0 %v802
        %3421 = vmatprep.subr.bf16.mxu0 0
        %3422 = vmatpush1.bf16.msra.mxu0 0
        %3423 = vmatprep.subr.bf16.mxu0 0
        %3424 = vmatpush1.bf16.msra.mxu0 0
        %3425 = vmatprep.subr.bf16.mxu0 0
        %3426 = vmatpush1.bf16.msra.mxu0 0
        %3427 = vmatprep.subr.bf16.mxu0 0
        %3428 = vmatpush1.bf16.msra.mxu0 0
        %3429 = vmatprep.subr.bf16.mxu0 0
        %3430 = vmatpush1.bf16.msra.mxu0 0
        %3431 = vmatprep.subr.bf16.mxu0 0
        %3432 = vmatpush1.bf16.msra.mxu0 0
        %3433 = vmatprep.subr.bf16.mxu0 0
        %3434 = vmatpush1.bf16.msra.mxu0 0
        %3435 = vmatprep.subr.bf16.mxu0 0
        %3436 = vmatpush1.bf16.msra.mxu0 0
        %3437 = vmatprep.mubr.bf16.mxu0 0
        %3438 = vmatmul.mubr.bf16.gmra.mrb[0].mxu0 %v3403
        %v3439 = vpop.f32.mrb[0].mxu0
        %v3440 = vadd.f32 %v3389, %v3439
        %v3441 = vpop.f32.mrb[0].mxu0
        %v3442 = vadd.f32 %v3390, %v3441
        %v3443 = vpop.f32.mrb[0].mxu0
        %v3444 = vadd.f32 %v3394, %v3443
        %v3445 = vpop.f32.mrb[0].mxu0
        %v3446 = vadd.f32 %v3395, %v3445
        %3447 = vdwg.mxu0
        %3448 = vmatprep.subr.bf16.mxu0 %v770
        %3449 = vmatpush1.bf16.msra.mxu0 %v769
        %3450 = vmatprep.subr.bf16.mxu0 %v775
        %3451 = vmatpush1.bf16.msra.mxu0 %v774
        %3452 = vmatprep.subr.bf16.mxu0 %v780
        %3453 = vmatpush1.bf16.msra.mxu0 %v779
        %3454 = vmatprep.subr.bf16.mxu0 %v785
        %3455 = vmatpush1.bf16.msra.mxu0 %v784
        %3456 = vmatprep.subr.bf16.mxu0 %v790
        %3457 = vmatpush1.bf16.msra.mxu0 %v789
        %3458 = vmatprep.subr.bf16.mxu0 %v795
        %3459 = vmatpush1.bf16.msra.mxu0 %v794
        %3460 = vmatprep.subr.bf16.mxu0 %v800
        %3461 = vmatpush1.bf16.msra.mxu0 %v799
        %3462 = vmatprep.subr.bf16.mxu0 %v805
        %3463 = vmatpush1.bf16.msra.mxu0 %v804
        %3464 = vmatprep.subr.bf16.mxu0 0
        %3465 = vmatpush1.bf16.msra.mxu0 0
        %3466 = vmatprep.subr.bf16.mxu0 0
        %3467 = vmatpush1.bf16.msra.mxu0 0
        %3468 = vmatprep.subr.bf16.mxu0 0
        %3469 = vmatpush1.bf16.msra.mxu0 0
        %3470 = vmatprep.subr.bf16.mxu0 0
        %3471 = vmatpush1.bf16.msra.mxu0 0
        %3472 = vmatprep.subr.bf16.mxu0 0
        %3473 = vmatpush1.bf16.msra.mxu0 0
        %3474 = vmatprep.subr.bf16.mxu0 0
        %3475 = vmatpush1.bf16.msra.mxu0 0
        %3476 = vmatprep.subr.bf16.mxu0 0
        %3477 = vmatpush1.bf16.msra.mxu0 0
        %3478 = vmatprep.subr.bf16.mxu0 0
        %3479 = vmatpush1.bf16.msra.mxu0 0
        %3480 = vmatprep.mubr.bf16.mxu0 0
        %3481 = vmatmul.mubr.bf16.gmra.mrb[0].mxu0 %v3403
        %v3482 = vpop.f32.mrb[0].mxu0
        %v3483 = vadd.f32 %v3391, %v3482
        %v3484 = vpop.f32.mrb[0].mxu0
        %v3485 = vadd.f32 %v3392, %v3484
        %v3486 = vpop.f32.mrb[0].mxu0
        %v3487 = vadd.f32 %v3396, %v3486
        %v3488 = vpop.f32.mrb[0].mxu0
        %v3489 = vadd.f32 %v3397, %v3488
        %3490 = vdwg.mxu0
        %3491 = vmatprep.subr.bf16.mxu0 0
        %3492 = vmatpush1.bf16.msra.mxu0 %v771
        %3493 = vmatprep.subr.bf16.mxu0 0
        %3494 = vmatpush1.bf16.msra.mxu0 %v776
        %3495 = vmatprep.subr.bf16.mxu0 0
        %3496 = vmatpush1.bf16.msra.mxu0 %v781
        %3497 = vmatprep.subr.bf16.mxu0 0
        %3498 = vmatpush1.bf16.msra.mxu0 %v786
        %3499 = vmatprep.subr.bf16.mxu0 0
        %3500 = vmatpush1.bf16.msra.mxu0 %v791
        %3501 = vmatprep.subr.bf16.mxu0 0
        %3502 = vmatpush1.bf16.msra.mxu0 %v796
        %3503 = vmatprep.subr.bf16.mxu0 0
        %3504 = vmatpush1.bf16.msra.mxu0 %v801
        %3505 = vmatprep.subr.bf16.mxu0 0
        %3506 = vmatpush1.bf16.msra.mxu0 %v806
        %3507 = vmatprep.subr.bf16.mxu0 0
        %3508 = vmatpush1.bf16.msra.mxu0 0
        %3509 = vmatprep.subr.bf16.mxu0 0
        %3510 = vmatpush1.bf16.msra.mxu0 0
        %3511 = vmatprep.subr.bf16.mxu0 0
        %3512 = vmatpush1.bf16.msra.mxu0 0
        %3513 = vmatprep.subr.bf16.mxu0 0
        %3514 = vmatpush1.bf16.msra.mxu0 0
        %3515 = vmatprep.subr.bf16.mxu0 0
        %3516 = vmatpush1.bf16.msra.mxu0 0
        %3517 = vmatprep.subr.bf16.mxu0 0
        %3518 = vmatpush1.bf16.msra.mxu0 0
        %3519 = vmatprep.subr.bf16.mxu0 0
        %3520 = vmatpush1.bf16.msra.mxu0 0
        %3521 = vmatprep.subr.bf16.mxu0 0
        %3522 = vmatpush1.bf16.msra.mxu0 0
        %3523 = vmatprep.mubr.bf16.mxu0 0
        %3524 = vmatmul.mubr.bf16.gmra.mrb[0].mxu0 %v3403
        %v3525 = vpop.f32.mrb[0].mxu0
        %v3526 = vadd.f32 %v3393, %v3525
        %v3527 = vpop.f32.mrb[0].mxu0
        %v3528 = vpop.f32.mrb[0].mxu0
        %v3529 = vadd.f32 %v3398, %v3528
        %v3530 = vpop.f32.mrb[0].mxu0
        %3531 = vdwg.mxu0
        %v3532 = vadd.f32 %v3440, %v978
        %v3533 = vadd.f32 %v3442, %v982
        %v3534 = vadd.f32 %v3483, %v986
        %v3535 = vadd.f32 %v3485, %v990
        %v3536 = vadd.f32 %v3526, %v994
        %v3537 = vadd.f32 %v3444, %v978
        %v3538 = vadd.f32 %v3446, %v982
        %v3539 = vadd.f32 %v3487, %v986
        %v3540 = vadd.f32 %v3489, %v990
        %v3541 = vadd.f32 %v3529, %v994
        %v3542 = vpack.c.bf16 %v3538, %v3533
        %3543 = vmatprep.subr.bf16.mxu0 0
        %3544 = vmatpush1.bf16.msra.mxu0 %v3542
        %3545 = vmatprep.subr.bf16.mxu0 0
        %3546 = vmatpush1.bf16.msra.mxu0 0
        %3547 = vmatprep.subr.bf16.mxu0 0
        %3548 = vmatpush1.bf16.msra.mxu0 0
        %3549 = vmatprep.subr.bf16.mxu0 0
        %3550 = vmatpush1.bf16.msra.mxu0 0
        %3551 = vmatprep.subr.bf16.mxu0 0
        %3552 = vmatpush1.bf16.msra.mxu0 0
        %3553 = vmatprep.subr.bf16.mxu0 0
        %3554 = vmatpush1.bf16.msra.mxu0 0
        %3555 = vmatprep.subr.bf16.mxu0 0
        %3556 = vmatpush1.bf16.msra.mxu0 0
        %3557 = vmatprep.subr.bf16.mxu0 0
        %3558 = vmatpush1.bf16.msra.mxu0 0
        %3559 = vmatprep.subr.bf16.mxu0 0
        %3560 = vmatpush1.bf16.msra.mxu0 0
        %3561 = vmatprep.subr.bf16.mxu0 0
        %3562 = vmatpush1.bf16.msra.mxu0 0
        %3563 = vmatprep.subr.bf16.mxu0 0
        %3564 = vmatpush1.bf16.msra.mxu0 0
        %3565 = vmatprep.subr.bf16.mxu0 0
        %3566 = vmatpush1.bf16.msra.mxu0 0
        %3567 = vmatprep.subr.bf16.mxu0 0
        %3568 = vmatpush1.bf16.msra.mxu0 0
        %3569 = vmatprep.subr.bf16.mxu0 0
        %3570 = vmatpush1.bf16.msra.mxu0 0
        %3571 = vmatprep.subr.bf16.mxu0 0
        %3572 = vmatpush1.bf16.msra.mxu0 0
        %3573 = vmatprep.subr.bf16.mxu0 0
        %3574 = vmatpush1.bf16.msra.mxu0 0
        %3575 = vmatprep.mubr.bf16.mxu0 0
        %3576 = vmatmul.mubr.bf16.gmra.mrb[0].mxu0 %v1018
        %v3577 = vpop.f32.mrb[0].mxu0
        %v3578 = vadd.f32 0.0, %v3577
        %v3579 = vpop.f32.mrb[0].mxu0
        %v3580 = vpop.f32.mrb[0].mxu0
        %v3581 = vadd.f32 0.0, %v3580
        %v3582 = vpop.f32.mrb[0].mxu0
        %3583 = vdwg.mxu0
        %v3584 = vadd.f32 %v3532, %v3578
        %v3585 = vadd.f32 %v3537, %v3581
        %v3586 = vxor.u32 %v3584, 2147483648
        %v3587 = vxor.u32 %v3585, 2147483648
        %v3588 = vmul.f32 %v3586, 1.442695
        %v3589 = vpow.pop %v3588
        %v3590 = vmul.f32 %v3587, 1.442695
        %v3591 = vpow.pop %v3590
        %v3592 = vadd.f32 %v3589, 1.0
        %v3593 = vadd.f32 %v3591, 1.0
        %v3594 = vrcp.pop %v3592
        %v3595 = vmul.f32 1.0, %v3594
        %v3596 = vrcp.pop %v3593
        %v3597 = vmul.f32 1.0, %v3596
        %v3598 = vpack.c.bf16 %v3597, %v3595
        %3599 = vmatprep.subr.bf16.mxu0 %v1157
        %3600 = vmatpush1.bf16.msra.mxu0 %v1156
        %3601 = vmatprep.subr.bf16.mxu0 %v1160
        %3602 = vmatpush1.bf16.msra.mxu0 %v1159
        %3603 = vmatprep.subr.bf16.mxu0 %v1163
        %3604 = vmatpush1.bf16.msra.mxu0 %v1162
        %3605 = vmatprep.subr.bf16.mxu0 %v1166
        %3606 = vmatpush1.bf16.msra.mxu0 %v1165
        %3607 = vmatprep.subr.bf16.mxu0 %v1169
        %3608 = vmatpush1.bf16.msra.mxu0 %v1168
        %3609 = vmatprep.subr.bf16.mxu0 %v1172
        %3610 = vmatpush1.bf16.msra.mxu0 %v1171
        %3611 = vmatprep.subr.bf16.mxu0 %v1175
        %3612 = vmatpush1.bf16.msra.mxu0 %v1174
        %3613 = vmatprep.subr.bf16.mxu0 %v1178
        %3614 = vmatpush1.bf16.msra.mxu0 %v1177
        %3615 = vmatprep.subr.bf16.mxu0 0
        %3616 = vmatpush1.bf16.msra.mxu0 0
        %3617 = vmatprep.subr.bf16.mxu0 0
        %3618 = vmatpush1.bf16.msra.mxu0 0
        %3619 = vmatprep.subr.bf16.mxu0 0
        %3620 = vmatpush1.bf16.msra.mxu0 0
        %3621 = vmatprep.subr.bf16.mxu0 0
        %3622 = vmatpush1.bf16.msra.mxu0 0
        %3623 = vmatprep.subr.bf16.mxu0 0
        %3624 = vmatpush1.bf16.msra.mxu0 0
        %3625 = vmatprep.subr.bf16.mxu0 0
        %3626 = vmatpush1.bf16.msra.mxu0 0
        %3627 = vmatprep.subr.bf16.mxu0 0
        %3628 = vmatpush1.bf16.msra.mxu0 0
        %3629 = vmatprep.subr.bf16.mxu0 0
        %3630 = vmatpush1.bf16.msra.mxu0 0
        %3631 = vmatprep.mubr.bf16.mxu0 0
        %3632 = vmatmul.mubr.bf16.gmra.mrb[0].mxu0 %v3598
        %v3633 = vpop.f32.mrb[0].mxu0
        %v3634 = vadd.f32 0.0, %v3633
        %v3635 = vpop.f32.mrb[0].mxu0
        %v3636 = vadd.f32 0.0, %v3635
        %v3637 = vpop.f32.mrb[0].mxu0
        %v3638 = vadd.f32 0.0, %v3637
        %v3639 = vpop.f32.mrb[0].mxu0
        %v3640 = vadd.f32 0.0, %v3639
        %3641 = vdwg.mxu0
        %3642 = vmatprep.subr.bf16.mxu0 0
        %3643 = vmatpush1.bf16.msra.mxu0 %v1158
        %3644 = vmatprep.subr.bf16.mxu0 0
        %3645 = vmatpush1.bf16.msra.mxu0 %v1161
        %3646 = vmatprep.subr.bf16.mxu0 0
        %3647 = vmatpush1.bf16.msra.mxu0 %v1164
        %3648 = vmatprep.subr.bf16.mxu0 0
        %3649 = vmatpush1.bf16.msra.mxu0 %v1167
        %3650 = vmatprep.subr.bf16.mxu0 0
        %3651 = vmatpush1.bf16.msra.mxu0 %v1170
        %3652 = vmatprep.subr.bf16.mxu0 0
        %3653 = vmatpush1.bf16.msra.mxu0 %v1173
        %3654 = vmatprep.subr.bf16.mxu0 0
        %3655 = vmatpush1.bf16.msra.mxu0 %v1176
        %3656 = vmatprep.subr.bf16.mxu0 0
        %3657 = vmatpush1.bf16.msra.mxu0 %v1179
        %3658 = vmatprep.subr.bf16.mxu0 0
        %3659 = vmatpush1.bf16.msra.mxu0 0
        %3660 = vmatprep.subr.bf16.mxu0 0
        %3661 = vmatpush1.bf16.msra.mxu0 0
        %3662 = vmatprep.subr.bf16.mxu0 0
        %3663 = vmatpush1.bf16.msra.mxu0 0
        %3664 = vmatprep.subr.bf16.mxu0 0
        %3665 = vmatpush1.bf16.msra.mxu0 0
        %3666 = vmatprep.subr.bf16.mxu0 0
        %3667 = vmatpush1.bf16.msra.mxu0 0
        %3668 = vmatprep.subr.bf16.mxu0 0
        %3669 = vmatpush1.bf16.msra.mxu0 0
        %3670 = vmatprep.subr.bf16.mxu0 0
        %3671 = vmatpush1.bf16.msra.mxu0 0
        %3672 = vmatprep.subr.bf16.mxu0 0
        %3673 = vmatpush1.bf16.msra.mxu0 0
        %3674 = vmatprep.mubr.bf16.mxu0 0
        %3675 = vmatmul.mubr.bf16.gmra.mrb[0].mxu0 %v3598
        %v3676 = vpop.f32.mrb[0].mxu0
        %v3677 = vadd.f32 0.0, %v3676
        %v3678 = vpop.f32.mrb[0].mxu0
        %v3679 = vpop.f32.mrb[0].mxu0
        %v3680 = vadd.f32 0.0, %v3679
        %v3681 = vpop.f32.mrb[0].mxu0
        %3682 = vdwg.mxu0
        %v3683 = vadd.f32 %v3534, %v3634
        %v3684 = vadd.f32 %v3535, %v3636
        %v3685 = vadd.f32 %v3536, %v3677
        %v3686 = vadd.f32 %v3539, %v3638
        %v3687 = vadd.f32 %v3540, %v3640
        %v3688 = vadd.f32 %v3541, %v3680
        %v3689 = vpack.c.bf16 %v3367, %v3366
        %3690 = vmatprep.subr.bf16.mxu0 %v1391
        %3691 = vmatpush1.bf16.msra.mxu0 %v1390
        %3692 = vmatprep.subr.bf16.mxu0 %v1394
        %3693 = vmatpush1.bf16.msra.mxu0 %v1393
        %3694 = vmatprep.subr.bf16.mxu0 %v1397
        %3695 = vmatpush1.bf16.msra.mxu0 %v1396
        %3696 = vmatprep.subr.bf16.mxu0 %v1400
        %3697 = vmatpush1.bf16.msra.mxu0 %v1399
        %3698 = vmatprep.subr.bf16.mxu0 %v1403
        %3699 = vmatpush1.bf16.msra.mxu0 %v1402
        %3700 = vmatprep.subr.bf16.mxu0 %v1406
        %3701 = vmatpush1.bf16.msra.mxu0 %v1405
        %3702 = vmatprep.subr.bf16.mxu0 %v1409
        %3703 = vmatpush1.bf16.msra.mxu0 %v1408
        %3704 = vmatprep.subr.bf16.mxu0 %v1412
        %3705 = vmatpush1.bf16.msra.mxu0 %v1411
        %3706 = vmatprep.subr.bf16.mxu0 0
        %3707 = vmatpush1.bf16.msra.mxu0 0
        %3708 = vmatprep.subr.bf16.mxu0 0
        %3709 = vmatpush1.bf16.msra.mxu0 0
        %3710 = vmatprep.subr.bf16.mxu0 0
        %3711 = vmatpush1.bf16.msra.mxu0 0
        %3712 = vmatprep.subr.bf16.mxu0 0
        %3713 = vmatpush1.bf16.msra.mxu0 0
        %3714 = vmatprep.subr.bf16.mxu0 0
        %3715 = vmatpush1.bf16.msra.mxu0 0
        %3716 = vmatprep.subr.bf16.mxu0 0
        %3717 = vmatpush1.bf16.msra.mxu0 0
        %3718 = vmatprep.subr.bf16.mxu0 0
        %3719 = vmatpush1.bf16.msra.mxu0 0
        %3720 = vmatprep.subr.bf16.mxu0 0
        %3721 = vmatpush1.bf16.msra.mxu0 0
        %3722 = vmatprep.mubr.bf16.mxu0 0
        %3723 = vmatmul.mubr.bf16.gmra.mrb[0].mxu0 %v3689
        %v3724 = vpop.f32.mrb[0].mxu0
        %v3725 = vadd.f32 %v1298, %v3724
        %v3726 = vpop.f32.mrb[0].mxu0
        %v3727 = vadd.f32 %v1302, %v3726
        %v3728 = vpop.f32.mrb[0].mxu0
        %v3729 = vadd.f32 %v1298, %v3728
        %v3730 = vpop.f32.mrb[0].mxu0
        %v3731 = vadd.f32 %v1302, %v3730
        %3732 = vdwg.mxu0
        %3733 = vmatprep.subr.bf16.mxu0 0
        %3734 = vmatpush1.bf16.msra.mxu0 %v1392
        %3735 = vmatprep.subr.bf16.mxu0 0
        %3736 = vmatpush1.bf16.msra.mxu0 %v1395
        %3737 = vmatprep.subr.bf16.mxu0 0
        %3738 = vmatpush1.bf16.msra.mxu0 %v1398
        %3739 = vmatprep.subr.bf16.mxu0 0
        %3740 = vmatpush1.bf16.msra.mxu0 %v1401
        %3741 = vmatprep.subr.bf16.mxu0 0
        %3742 = vmatpush1.bf16.msra.mxu0 %v1404
        %3743 = vmatprep.subr.bf16.mxu0 0
        %3744 = vmatpush1.bf16.msra.mxu0 %v1407
        %3745 = vmatprep.subr.bf16.mxu0 0
        %3746 = vmatpush1.bf16.msra.mxu0 %v1410
        %3747 = vmatprep.subr.bf16.mxu0 0
        %3748 = vmatpush1.bf16.msra.mxu0 %v1413
        %3749 = vmatprep.subr.bf16.mxu0 0
        %3750 = vmatpush1.bf16.msra.mxu0 0
        %3751 = vmatprep.subr.bf16.mxu0 0
        %3752 = vmatpush1.bf16.msra.mxu0 0
        %3753 = vmatprep.subr.bf16.mxu0 0
        %3754 = vmatpush1.bf16.msra.mxu0 0
        %3755 = vmatprep.subr.bf16.mxu0 0
        %3756 = vmatpush1.bf16.msra.mxu0 0
        %3757 = vmatprep.subr.bf16.mxu0 0
        %3758 = vmatpush1.bf16.msra.mxu0 0
        %3759 = vmatprep.subr.bf16.mxu0 0
        %3760 = vmatpush1.bf16.msra.mxu0 0
        %3761 = vmatprep.subr.bf16.mxu0 0
        %3762 = vmatpush1.bf16.msra.mxu0 0
        %3763 = vmatprep.subr.bf16.mxu0 0
        %3764 = vmatpush1.bf16.msra.mxu0 0
        %3765 = vmatprep.mubr.bf16.mxu0 0
        %3766 = vmatmul.mubr.bf16.gmra.mrb[0].mxu0 %v3689
        %v3767 = vpop.f32.mrb[0].mxu0
        %v3768 = vadd.f32 %v1306, %v3767
        %v3769 = vpop.f32.mrb[0].mxu0
        %v3770 = vpop.f32.mrb[0].mxu0
        %v3771 = vadd.f32 %v1306, %v3770
        %v3772 = vpop.f32.mrb[0].mxu0
        %3773 = vdwg.mxu0
        %v3774 = vadd.f32 %v3683, %v3725
        %v3775 = vadd.f32 %v3686, %v3729
        %v3776 = vxor.u32 %v3774, 2147483648
        %v3777 = vxor.u32 %v3775, 2147483648
        %v3778 = vmul.f32 %v3776, 1.442695
        %v3779 = vpow.pop %v3778
        %v3780 = vmul.f32 %v3777, 1.442695
        %v3781 = vpow.pop %v3780
        %v3782 = vadd.f32 %v3779, 1.0
        %v3783 = vadd.f32 %v3781, 1.0
        %v3784 = vrcp.pop %v3782
        %v3785 = vmul.f32 1.0, %v3784
        %v3786 = vrcp.pop %v3783
        %v3787 = vmul.f32 1.0, %v3786
        %v3788 = vadd.f32 %v3684, %v3727
        %v3789 = vadd.f32 %v3687, %v3731
        %v3790 = vxor.u32 %v3788, 2147483648
        %v3791 = vxor.u32 %v3789, 2147483648
        %v3792 = vmul.f32 %v3790, 1.442695
        %v3793 = vpow.pop %v3792
        %v3794 = vmul.f32 %v3791, 1.442695
        %v3795 = vpow.pop %v3794
        %v3796 = vadd.f32 %v3793, 1.0
        %v3797 = vadd.f32 %v3795, 1.0
        %v3798 = vrcp.pop %v3796
        %v3799 = vmul.f32 1.0, %v3798
        %v3800 = vrcp.pop %v3797
        %v3801 = vmul.f32 1.0, %v3800
        %v3802 = vmul.f32 %v3785, %v3768
        %v3803 = vmul.f32 %v3787, %v3771
        %v3804 = vadd.f32 %v3685, %v3802
        %v3805 = vadd.f32 %v3688, %v3803
        %v3806 = vtanh.pop %v3804
        %v3807 = vtanh.pop %v3805
        %v3808 = vsub.f32 1.0, %v3799
        %v3809 = vsub.f32 1.0, %v3801
        %v3810 = vmul.f32 %v3808, %v3806
        %v3811 = vmul.f32 %v3809, %v3807
        %v3812 = vmul.f32 %v3799, %v3366
        %v3813 = vmul.f32 %v3801, %v3367
        %v3814 = vadd.f32 %v3810, %v3812
        %v3815 = vadd.f32 %v3811, %v3813
        %v3816 = vmul.f32 %v3814, %v1568
        %v3817 = vmul.f32 %v3815, %v1568
        %3818 = vadd.xlane.f32.xlu0 %v3816
        %v3819 = vpop.xlane.xlu0 %3818
        %3820 = vadd.xlane.f32.xlu0 %v3817
        %v3821 = vpop.xlane.xlu0 %3820
        %v3822 = vadd.f32 %v3819, %v1580
        %v3823 = vadd.f32 %v3821, %v1580
        %3824 = vst [vmem:[%s465] sm:$0xff] %v3814
        %3825 = vst [vmem:[%s465 + $0x8] sm:$0xff] %v3815
        %vm3826 = vcmask 7168
        %3827 = vst.msk [vmem:[%s478] sm:$0xff] %vm3826, %v3822
        %3828 = vst.msk [vmem:[%s478 + $0x8] sm:$0xff] %vm3826, %v3823
        %s3829 = sand.u32 %s256, 1
        %s3830 = scalar_lea.sflag [#allocation5], %s3829
        %s3831 = sand.u32 %s256, 1
        %s3832 = smul.addr %s3831, 16
        %s3833 = scalar_lea.vmem [#allocation12], %s3832
        %s3834 = smul.u32 2, %s33
        %p3835 = scmp.lt.s32.totalorder %s3834, 3
        %s3836 = scalar_select %p3835, %s3834, 3
        %s3837 = smul.addr %s3836, 8
        %s3838 = scalar_lea.vmem %s11, %s3837
        // Predicated region
        $region81: #{tpu_custom_call.1} parent=59 // pred_check
          %p3839 = pneg %p266
        $region82: #{tpu_custom_call.1} parent=59 // pred_check_branch
          %3841 = sbr.rel (%p3839) target = $region84
        $region83: #{tpu_custom_call.1} parent=59 // pred_region
          %s3842 = smul.u32 2, %s33
          %s3844 = ssub.s32 256, 256
          %3845 = vsyncadd %s3830, %s3844
          %s3846 = smul.addr %s3842, 128
          %s3847 = scalar_lea.hbm %s10, %s3846
          %s3848 = sshll.u32 %s3833, 4
          %s3849 = int_to_ptr.vmem [resolvable:$true] %s3848
          %3854 = dma.vmem_to_hbm [thread:$0]  %s3849, 256, %s3847, %s3830, 128, 128, 8
        $region84: #{tpu_custom_call.1} parent=59 // pred_fallthru
          _
        // Predicated region
        $region85: #{tpu_custom_call.1} parent=59 // pred_check
          %p3855 = pneg %p292
        $region86: #{tpu_custom_call.1} parent=59 // pred_check_branch
          %3857 = sbr.rel (%p3855) target = $region88
        $region87: #{tpu_custom_call.1} parent=59 // pred_region
          %s3858 = smul.u32 2, %s33
        $region88: #{tpu_custom_call.1} parent=59 // pred_fallthru
          _
      $region60: #{tpu_custom_call.1} parent=5 // pred_fallthru
        _
      %p3859 = scmp.le.s32.totalorder 2, %s28
      // Predicated region
      $region89: #{tpu_custom_call.1} parent=5 // pred_check
        %p3860 = pneg %p3859
      $region90: #{tpu_custom_call.1} parent=5 // pred_check_branch
        %3862 = sbr.rel (%p3860) target = $region92
      $region91: #{tpu_custom_call.1} parent=5 // pred_region
        %s3863 = ssub.s32 %s28, 2
        // Predicated region
        $region93: #{tpu_custom_call.1} parent=91 // pred_check
          %p3864 = pneg %p272
        $region94: #{tpu_custom_call.1} parent=91 // pred_check_branch
          %3866 = sbr.rel (%p3864) target = $region96
        $region95: #{tpu_custom_call.1} parent=91 // pred_region
          %s3867 = sand.u32 %s257, 1
          %s3868 = scalar_lea.sflag [#allocation5], %s3867
          %s3869 = sand.u32 %s257, 1
          %s3870 = smul.addr %s3869, 16
          %s3871 = scalar_lea.vmem [#allocation12], %s3870
          %3872 = dma.done %s3868, 256
        $region96: #{tpu_custom_call.1} parent=91 // pred_fallthru
          _
        // Predicated region
        $region97: #{tpu_custom_call.1} parent=91 // pred_check
          %p3873 = pneg %p298
        $region98: #{tpu_custom_call.1} parent=91 // pred_check_branch
          %3875 = sbr.rel (%p3873) target = $region100
        $region99: #{tpu_custom_call.1} parent=91 // pred_region
          %s3876 = smul.u32 2, %s34
          %p3877 = scmp.lt.s32.totalorder %s3876, 3
          %s3878 = scalar_select %p3877, %s3876, 3
          %s3879 = smul.addr %s3878, 8
          %s3880 = scalar_lea.vmem %s11, %s3879
        $region100: #{tpu_custom_call.1} parent=91 // pred_fallthru
          _
      $region92: #{tpu_custom_call.1} parent=5 // pred_fallthru
        _
    $region6: #{tpu_custom_call.1} parent=1 // loop_footer
      %s32 = sadd.s32 1, %s28
    $region7: #{tpu_custom_call.1} parent=1 // loop_footer_branch
      %27 = sbr.rel target = $region3
    $region8: #{tpu_custom_call.1} parent=1 // loop_exit
      _
    %3881 = vsyncpa [#allocation4], 1
    %s3882 = scalar_lea.sflag [#allocation4], 1
    %3883 = vsyncpa %s3882, 1
    %3884 = vsyncpa [#allocation7], 1
    %3885 = vsyncpa [#allocation10], 1
    %3886 = vsyncpa [#allocation5], 1
    %s3887 = scalar_lea.sflag [#allocation5], 1
    %3888 = vsyncpa %s3887, 1

</llo_original>
